<compile_context>
chip_gen: v7x
topology: tpu7x:2x2x1
jax: 0.10.0
libtpu: 0.0.40
codegen_flags: <defaults>
</compile_context>

<pallas_src>
import functools

import jax
import jax.numpy as jnp
from jax.experimental import pallas as pl
from jax.experimental.pallas import tpu as pltpu

# Explicit VMEM budget: comfortably above what the largest tiles below need
# (~8 MiB with double buffering) and below v7x's 64 MiB physical VMEM.
_VMEM_LIMIT_BYTES = 48 * 1024 * 1024


def _round_up(x, m):
    return (x + m - 1) // m * m


def _pad2d(a, rows, cols):
    r, c = a.shape
    if r == rows and c == cols:
        return a
    return jnp.pad(a, ((0, rows - r), (0, cols - c)))


def _choose_tile(dim_padded, t_default, align):
    """Largest tile <= t_default (multiple of `align`) dividing dim_padded.

    dim_padded is already a multiple of `align`, so this never pads beyond
    the (8,128) alignment (e.g. K=288 stays 384, never 512)."""
    t = min(t_default, dim_padded)
    t = max(align, (t // align) * align)
    while dim_padded % t:
        t -= align
    return t


# ---------------------------------------------------------------------------
# Tiled matmul with fused epilogue (bias, exact erf-GELU, residual add)
# ---------------------------------------------------------------------------
def _mm_kernel(*refs, n_in, has_bias, has_res, act):
    x_ref, w_ref = refs[0], refs[1]
    b_ref = refs[2] if has_bias else None
    r_ref = refs[2 + int(has_bias)] if has_res else None
    o_ref = refs[n_in]
    acc_ref = refs[n_in + 1]

    k = pl.program_id(2)

    @pl.when(k == 0)
    def _():
        acc_ref[...] = jnp.zeros_like(acc_ref)

    acc_ref[...] += jnp.dot(x_ref[...], w_ref[...],
                            preferred_element_type=jnp.float32)

    @pl.when(k == pl.num_programs(2) - 1)
    def _():
        y = acc_ref[...]
        if has_bias:
            y = y + b_ref[...]
        if act == "gelu":
            # exact erf-GELU (PyTorch nn.GELU default), computed in f32
            y = 0.5 * y * (1.0 + jax.lax.erf(y * 0.7071067811865476))
        if has_res:
            y = y + r_ref[...].astype(jnp.float32)
        o_ref[...] = y.astype(o_ref.dtype)


def pallas_matmul(x, w, b=None, *, act=None, residual=None,
                  out_dtype=jnp.bfloat16, tm=512, tn=512, tk=1024):
    """epilogue(x @ w).  bf16 MXU operands, f32 accumulation, divisor tiles."""
    M, K = x.shape
    Kw, N = w.shape
    assert K == Kw
    Mp, Kp, Np = _round_up(M, 8), _round_up(K, 128), _round_up(N, 128)
    tm = _choose_tile(Mp, tm, 8)
    tn = _choose_tile(Np, tn, 128)
    tk = _choose_tile(Kp, tk, 128)
    # v7x megacore: keep >=2 blocks across the parallel (M, N) axes so both
    # TensorCores get work even when M is small.
    if (Mp // tm) * (Np // tn) < 2 and Mp >= 16:
        tm = _choose_tile(Mp, max(8, Mp // 2), 8)

    xp = _pad2d(x.astype(jnp.bfloat16), Mp, Kp)
    wp = _pad2d(w.astype(jnp.bfloat16), Kp, Np)
    inputs = [xp, wp]
    in_specs = [pl.BlockSpec((tm, tk), lambda i, j, k: (i, k)),
                pl.BlockSpec((tk, tn), lambda i, j, k: (k, j))]
    has_bias = b is not None
    if has_bias:
        inputs.append(_pad2d(b.reshape(1, N).astype(jnp.float32), 1, Np))
        in_specs.append(pl.BlockSpec((1, tn), lambda i, j, k: (0, j)))
    has_res = residual is not None
    if has_res:
        # residual stays bf16: halves HBM traffic on the skip-connection read
        inputs.append(_pad2d(residual.astype(jnp.bfloat16), Mp, Np))
        in_specs.append(pl.BlockSpec((tm, tn), lambda i, j, k: (i, j)))

    n_in = 2 + int(has_bias) + int(has_res)
    kern = functools.partial(_mm_kernel, n_in=n_in, has_bias=has_bias,
                             has_res=has_res, act=act)
    out = pl.pallas_call(
        kern,
        out_shape=jax.ShapeDtypeStruct((Mp, Np), out_dtype),
        grid_spec=pltpu.PrefetchScalarGridSpec(
            num_scalar_prefetch=0,
            grid=(Mp // tm, Np // tn, Kp // tk),
            in_specs=in_specs,
            out_specs=pl.BlockSpec((tm, tn), lambda i, j, k: (i, j)),
            scratch_shapes=[pltpu.VMEM((tm, tn), jnp.float32)]),
        compiler_params=pltpu.CompilerParams(
            dimension_semantics=("parallel", "parallel", "arbitrary"),
            vmem_limit_bytes=_VMEM_LIMIT_BYTES),
    )(*inputs)
    return out[:M, :N]


# ---------------------------------------------------------------------------
# Row-tiled LayerNorm (PyTorch semantics: biased variance, eps=1e-5)
# ---------------------------------------------------------------------------
def _ln_kernel(x_ref, g_ref, b_ref, o_ref):
    x = x_ref[...].astype(jnp.float32)
    mean = jnp.mean(x, axis=-1, keepdims=True)
    xc = x - mean
    var = jnp.mean(xc * xc, axis=-1, keepdims=True)
    y = xc * jax.lax.rsqrt(var + 1e-5) * g_ref[...] + b_ref[...]
    o_ref[...] = y.astype(o_ref.dtype)


def pallas_layernorm(x2d, gamma, beta, *, out_dtype=jnp.bfloat16, tm=1024):
    M, C = x2d.shape
    Mp = _round_up(M, 8)
    tm = _choose_tile(Mp, tm, 8)
    if Mp // tm < 2 and Mp >= 16:      # keep both v7x TensorCores busy
        tm = _choose_tile(Mp, max(8, Mp // 2), 8)
    xp = _pad2d(x2d, Mp, C)
    out = pl.pallas_call(
        _ln_kernel,
        out_shape=jax.ShapeDtypeStruct((Mp, C), out_dtype),
        grid_spec=pltpu.PrefetchScalarGridSpec(
            num_scalar_prefetch=0,
            grid=(Mp // tm,),
            in_specs=[pl.BlockSpec((tm, C), lambda i: (i, 0)),
                      pl.BlockSpec((1, C), lambda i: (0, 0)),
                      pl.BlockSpec((1, C), lambda i: (0, 0))],
            out_specs=pl.BlockSpec((tm, C), lambda i: (i, 0))),
        compiler_params=pltpu.CompilerParams(
            dimension_semantics=("parallel",),
            vmem_limit_bytes=_VMEM_LIMIT_BYTES),
    )(xp, gamma.reshape(1, C).astype(jnp.float32),
      beta.reshape(1, C).astype(jnp.float32))
    return out[:M]


# ---------------------------------------------------------------------------
# Multi-head attention: one fat grid step per (batch, q-block).
# The full (N, 3C) qkv slab of one batch element stays resident in VMEM
# across q-blocks; all heads are processed per step; output is one
# lane-dense (tq, C) block (no head split/merge transposes anywhere).
# ---------------------------------------------------------------------------
def _attn_kernel(q_ref, kv_ref, o_ref, *, nh, dh, scale, n_real):
    C = nh * dh
    q_all = q_ref[0]          # (tq, 3C) bf16 — only the first C lanes used
    kv = kv_ref[0]            # (Np, 3C) bf16 — resident across q-blocks
    n_keys = kv.shape[0]
    outs = []
    for h in range(nh):
        qh = q_all[:, h * dh:(h + 1) * dh]
        kh = kv[:, C + h * dh:C + (h + 1) * dh]
        vh = kv[:, 2 * C + h * dh:2 * C + (h + 1) * dh]
        s = jax.lax.dot_general(qh, kh, (((1,), (1,)), ((), ())),
                                preferred_element_type=jnp.float32) * scale
        if n_keys > n_real:   # mask padded keys (static check)
            col = jax.lax.broadcasted_iota(jnp.int32, s.shape, 1)
            s = jnp.where(col < n_real, s, -1e30)
        m = jnp.max(s, axis=-1, keepdims=True)
        p = jnp.exp(s - m)
        l = jnp.sum(p, axis=-1, keepdims=True)
        oh = jnp.dot(p.astype(vh.dtype), vh,
                     preferred_element_type=jnp.float32)
        outs.append(oh / l)   # exact divide, once per q-block
    o = jnp.concatenate(outs, axis=-1)          # lane-dense (tq, C)
    o_ref[...] = o.astype(o_ref.dtype)[None]


def pallas_attention(qkv, *, nh, dh, scale, tq=512):
    """qkv: (B, N, 3C) bf16 -> (B, N, C) bf16."""
    B, N, C3 = qkv.shape
    C = nh * dh
    assert C3 == 3 * C
    Np = _round_up(N, 8)
    tq = _choose_tile(Np, tq, 8)
    qkv_p = qkv if Np == N else jnp.pad(qkv, ((0, 0), (0, Np - N), (0, 0)))
    kern = functools.partial(_attn_kernel, nh=nh, dh=dh, scale=scale, n_real=N)
    out = pl.pallas_call(
        kern,
        out_shape=jax.ShapeDtypeStruct((B, Np, C), jnp.bfloat16),
        grid_spec=pltpu.PrefetchScalarGridSpec(
            num_scalar_prefetch=0,
            grid=(B, Np // tq),
            in_specs=[
                # current q rows (all 3C lanes; the extra lanes are tiny)
                pl.BlockSpec((1, tq, C3), lambda b, qi: (b, qi, 0)),
                # whole-sequence qkv slab: block index constant across qi,
                # so it is DMA'd once per batch element and stays in VMEM.
                pl.BlockSpec((1, Np, C3), lambda b, qi: (b, 0, 0)),
            ],
            out_specs=pl.BlockSpec((1, tq, C), lambda b, qi: (b, qi, 0))),
        compiler_params=pltpu.CompilerParams(
            dimension_semantics=("parallel", "parallel"),
            vmem_limit_bytes=_VMEM_LIMIT_BYTES),
    )(qkv_p, qkv_p)
    return out[:, :N, :]


# ---------------------------------------------------------------------------
# Conv as im2col (NHWC, XLA glue) + Pallas matmul
# ---------------------------------------------------------------------------
def im2col_nhwc(x, ksize, stride, padding):
    """x: (B, H, W, C) -> ((B*Ho*Wo, k*k*C), Ho, Wo); K order (ki, kj, c).
    TODO(synk): lower as implicit GEMM inside the matmul kernel to avoid
    materializing the k*k-expanded patch tensor in HBM."""
    B, H, W, C = x.shape
    Ho = (H + 2 * padding - ksize) // stride + 1
    Wo = (W + 2 * padding - ksize) // stride + 1
    xp = jnp.pad(x, ((0, 0), (padding, padding), (padding, padding), (0, 0)))
    cols = [xp[:, i:i + stride * Ho:stride, j:j + stride * Wo:stride, :]
            for i in range(ksize) for j in range(ksize)]
    cols = jnp.concatenate(cols, axis=-1)
    return cols.reshape(B * Ho * Wo, ksize * ksize * C), Ho, Wo


def conv_weight_matrix(w):
    # PyTorch conv weight (Cout, Cin, kh, kw) -> (kh*kw*Cin, Cout)
    Cout, Cin, kh, kw = w.shape
    return w.transpose(2, 3, 1, 0).reshape(kh * kw * Cin, Cout)


# ---------------------------------------------------------------------------
# One-time parameter preprocessing (hoisted out of the forward pass):
# fold (3x3 conv proj) @ (Linear proj) into a single (9C, 3C) weight
# (exact: qkv_bias=False => both stages are bias-free linear maps) and
# pre-cast all MXU weights to bf16.
# ---------------------------------------------------------------------------
def preprocess_params(params):
    pe = params["patch_embed"]
    prep = {
        "patch_embed": {
            "w": conv_weight_matrix(pe["w"]).astype(jnp.bfloat16),
            "b": pe["b"], "ln_g": pe["ln_g"], "ln_b": pe["ln_b"],
        },
        "blocks": [],
    }
    for blk in params["blocks"]:
        wq = conv_weight_matrix(blk["cq_w"]) @ blk["wq"]
        wk = conv_weight_matrix(blk["ck_w"]) @ blk["wk"]
        wv = conv_weight_matrix(blk["cv_w"]) @ blk["wv"]
        prep["blocks"].append({
            "w_qkv": jnp.concatenate([wq, wk, wv], axis=1).astype(jnp.bfloat16),
            "wo": blk["wo"].astype(jnp.bfloat16), "bo": blk["bo"],
            "w1": blk["w1"].astype(jnp.bfloat16), "b1": blk["b1"],
            "w2": blk["w2"].astype(jnp.bfloat16), "b2": blk["b2"],
            "ln1_g": blk["ln1_g"], "ln1_b": blk["ln1_b"],
            "ln2_g": blk["ln2_g"], "ln2_b": blk["ln2_b"],
        })
    return prep


# ---------------------------------------------------------------------------
# CvTStage forward (inference: dropout / drop_path are identities).
# Token activations are bf16 end-to-end; accumulation/LN/softmax are f32.
# ---------------------------------------------------------------------------
def cvt_stage_forward(x, prep, cfg):
    B = x.shape[0]
    C = cfg["embed_dim"]
    nh = cfg["num_heads"]
    dh = C // nh
    scale = dh ** (-0.5)

    # ---- ConvEmbed: NHWC im2col (bf16) + one tiled matmul (bias fused) ----
    pe = prep["patch_embed"]
    x_nhwc = x.astype(jnp.bfloat16).transpose(0, 2, 3, 1)
    cols, H, W = im2col_nhwc(x_nhwc, cfg["patch_size"],
                             cfg["patch_stride"], cfg["patch_padding"])
    N = H * W
    M = B * N
    emb = pallas_matmul(cols, pe["w"], pe["b"])
    tok = pallas_layernorm(emb, pe["ln_g"], pe["ln_b"])          # (M, C) bf16

    for blk in prep["blocks"]:
        # ---- ConvAttention branch ----
        yn = pallas_layernorm(tok, blk["ln1_g"], blk["ln1_b"])   # (M, C) bf16
        qkv_cols, _, _ = im2col_nhwc(yn.reshape(B, H, W, C), 3, 1, 1)
        qkv = pallas_matmul(qkv_cols, blk["w_qkv"])              # (M, 3C) bf16
        ao = pallas_attention(qkv.reshape(B, N, 3 * C),
                              nh=nh, dh=dh, scale=scale)         # (B, N, C)
        # output projection with residual add fused into the matmul epilogue
        tok = pallas_matmul(ao.reshape(M, C), blk["wo"], blk["bo"],
                            residual=tok)

        # ---- ConvMLP branch (bias+GELU fused into fc1, residual into fc2) --
        yn = pallas_layernorm(tok, blk["ln2_g"], blk["ln2_b"])
        h = pallas_matmul(yn, blk["w1"], blk["b1"], act="gelu")
        tok = pallas_matmul(h, blk["w2"], blk["b2"], residual=tok)

    return tok.reshape(B, N, C), H, W


# ---------------------------------------------------------------------------
# Deterministic parameter init (Linear weights stored as (in, out))
# ---------------------------------------------------------------------------
def init_params(key, cfg):
    C = cfg["embed_dim"]
    Cin = cfg["in_chans"]
    ps = cfg["patch_size"]
    hid = int(C * cfg["mlp_ratio"])
    keys = iter(jax.random.split(key, 64))

    def w(shape, scale=0.02):
        return (scale * jax.random.normal(next(keys), shape)).astype(jnp.float32)

    params = {
        "patch_embed": {
            "w": w((C, Cin, ps, ps)),
            "b": jnp.zeros((C,), jnp.float32),
            "ln_g": jnp.ones((C,), jnp.float32),
            "ln_b": jnp.zeros((C,), jnp.float32),
        },
        "blocks": [],
    }
    for _ in range(cfg["depth"]):
        params["blocks"].append({
            "ln1_g": jnp.ones((C,), jnp.float32),
            "ln1_b": jnp.zeros((C,), jnp.float32),
            "cq_w": w((C, C, 3, 3)),
            "ck_w": w((C, C, 3, 3)),
            "cv_w": w((C, C, 3, 3)),
            "wq": w((C, C)), "wk": w((C, C)), "wv": w((C, C)),
            "wo": w((C, C)), "bo": jnp.zeros((C,), jnp.float32),
            "ln2_g": jnp.ones((C,), jnp.float32),
            "ln2_b": jnp.zeros((C,), jnp.float32),
            "w1": w((C, hid)), "b1": jnp.zeros((hid,), jnp.float32),
            "w2": w((hid, C)), "b2": jnp.zeros((C,), jnp.float32),
        })
    return params


if __name__ == "__main__":
    cfg = dict(
        patch_size=7, patch_stride=4, patch_padding=2,
        embed_dim=32, depth=2, num_heads=4, mlp_ratio=4.0,
        in_chans=3, qkv_bias=False,
    )
    root = jax.random.PRNGKey(0)
    k_param, k_x = jax.random.split(root)
    params = init_params(k_param, cfg)
    prep = preprocess_params(params)   # one-time weight folding / bf16 cast

    # NCHW input, small shapes: (B=2, C=3, H=16, W=16)
    x = jax.random.normal(k_x, (2, 3, 16, 16), dtype=jnp.float32)

    @jax.jit
    def run(xx, pp):
        toks, _, _ = cvt_stage_forward(xx, pp, cfg)
        return toks

    out = jax.block_until_ready(run(x, prep))

    H = (16 + 2 * cfg["patch_padding"] - cfg["patch_size"]) // cfg["patch_stride"] + 1
    assert H == 4
    assert out.shape == (2, H * H, cfg["embed_dim"])
    print("KERNEL_OK")
</pallas_src>

<mosaic_0001>
module attributes {stable_mosaic.version = 11 : i64} {
  func.func @_mm_kernel(%arg0: i32, %arg1: i32, %arg2: i32, %arg3: memref<16x256xbf16, #tpu.memory_space<vmem>>, %arg4: memref<256x128xbf16, #tpu.memory_space<vmem>>, %arg5: memref<1x128xf32, #tpu.memory_space<vmem>>, %arg6: memref<16x128xbf16, #tpu.memory_space<vmem>>, %arg7: memref<16x128xf32, #tpu.memory_space<vmem>>) attributes {dimension_semantics = [#tpu.dimension_semantics<parallel>, #tpu.dimension_semantics<parallel>, #tpu.dimension_semantics<arbitrary>], iteration_bounds = array<i64: 2, 1, 1>, scalar_prefetch = 0 : i64, scratch_operands = 1 : i64, tpu.core_type = #tpu.core_type<tc>, window_params = [{transform_indices = @transform_0, window_bounds = array<i64: 16, 256>}, {transform_indices = @transform_1, window_bounds = array<i64: 256, 128>}, {transform_indices = @transform_2, window_bounds = array<i64: 1, 128>}, {transform_indices = @transform_3, window_bounds = array<i64: 16, 128>}]} {
    %c0_i32 = arith.constant 0 : i32
    %0 = arith.cmpi eq, %arg2, %c0_i32 : i32
    %1 = arith.extui %0 : i1 to i32
    %c0_i32_0 = arith.constant 0 : i32
    %2 = arith.cmpi ne, %1, %c0_i32_0 : i32
    scf.if %2 {
      %cst_10 = arith.constant 0.000000e+00 : f32
      %12 = vector.broadcast %cst_10 : f32 to vector<16x128xf32>
      %c0_11 = arith.constant 0 : index
      %c0_12 = arith.constant 0 : index
      %13 = vector.load %arg7[%c0_11, %c0_12] : memref<16x128xf32, #tpu.memory_space<vmem>>, vector<16x128xf32>
      tpu.vector_store %arg7[%c0_11, %c0_12], %12 {strides = array<i32>} : memref<16x128xf32, #tpu.memory_space<vmem>>, vector<16x128xf32>,
    } else {
    }
    %c0 = arith.constant 0 : index
    %c0_1 = arith.constant 0 : index
    %3 = vector.load %arg7[%c0, %c0_1] : memref<16x128xf32, #tpu.memory_space<vmem>>, vector<16x128xf32>
    %c0_2 = arith.constant 0 : index
    %c0_3 = arith.constant 0 : index
    %4 = vector.load %arg3[%c0_2, %c0_3] : memref<16x256xbf16, #tpu.memory_space<vmem>>, vector<16x256xbf16>
    %c0_4 = arith.constant 0 : index
    %c0_5 = arith.constant 0 : index
    %5 = vector.load %arg4[%c0_4, %c0_5] : memref<256x128xbf16, #tpu.memory_space<vmem>>, vector<256x128xbf16>
    %cst = arith.constant dense<0.000000e+00> : vector<16x128xf32>
    %6 = tpu.matmul %4, %5, %cst {dimension_numbers = #tpu.dot_dimension_numbers<[1], [0], [0], [1], [0, 0, 1, 1], [], []>} : vector<16x256xbf16>, vector<256x128xbf16>, vector<16x128xf32> -> vector<16x128xf32>
    %7 = arith.addf %3, %6 : vector<16x128xf32>
    %c0_6 = arith.constant 0 : index
    %c0_7 = arith.constant 0 : index
    %8 = vector.load %arg7[%c0_6, %c0_7] : memref<16x128xf32, #tpu.memory_space<vmem>>, vector<16x128xf32>
    tpu.vector_store %arg7[%c0_6, %c0_7], %7 {strides = array<i32>} : memref<16x128xf32, #tpu.memory_space<vmem>>, vector<16x128xf32>,
    %c0_i32_8 = arith.constant 0 : i32
    %9 = arith.cmpi eq, %arg2, %c0_i32_8 : i32
    %10 = arith.extui %9 : i1 to i32
    %c0_i32_9 = arith.constant 0 : i32
    %11 = arith.cmpi ne, %10, %c0_i32_9 : i32
    scf.if %11 {
      %c0_10 = arith.constant 0 : index
      %c0_11 = arith.constant 0 : index
      %12 = vector.load %arg7[%c0_10, %c0_11] : memref<16x128xf32, #tpu.memory_space<vmem>>, vector<16x128xf32>
      %c0_12 = arith.constant 0 : index
      %c0_13 = arith.constant 0 : index
      %13 = vector.load %arg5[%c0_12, %c0_13] : memref<1x128xf32, #tpu.memory_space<vmem>>, vector<1x128xf32>
      %14 = vector.broadcast %13 : vector<1x128xf32> to vector<16x128xf32>
      %15 = arith.addf %12, %14 : vector<16x128xf32>
      %16 = arith.truncf %15 : vector<16x128xf32> to vector<16x128xbf16>
      %c0_14 = arith.constant 0 : index
      %c0_15 = arith.constant 0 : index
      %17 = vector.load %arg6[%c0_14, %c0_15] : memref<16x128xbf16, #tpu.memory_space<vmem>>, vector<16x128xbf16>
      tpu.vector_store %arg6[%c0_14, %c0_15], %16 {strides = array<i32>} : memref<16x128xbf16, #tpu.memory_space<vmem>>, vector<16x128xbf16>,
    } else {
    }
    return
  }
  func.func @transform_0(%arg0: i32, %arg1: i32, %arg2: i32) -> (i32, i32) {
    %c0_i32 = arith.constant 0 : i32
    return %arg0, %arg2 : i32, i32
  }
  func.func @transform_1(%arg0: i32, %arg1: i32, %arg2: i32) -> (i32, i32) {
    %c0_i32 = arith.constant 0 : i32
    return %arg2, %arg1 : i32, i32
  }
  func.func @transform_2(%arg0: i32, %arg1: i32, %arg2: i32) -> (i32, i32) {
    %c0_i32 = arith.constant 0 : i32
    %c0_i32_0 = arith.constant 0 : i32
    return %c0_i32, %arg1 : i32, i32
  }
  func.func @transform_3(%arg0: i32, %arg1: i32, %arg2: i32) -> (i32, i32) {
    %c0_i32 = arith.constant 0 : i32
    return %arg0, %arg1 : i32, i32
  }
}

module attributes {stable_mosaic.version = 11 : i64} {
  func.func @_ln_kernel(%arg0: i32, %arg1: memref<16x32xbf16, #tpu.memory_space<vmem>>, %arg2: memref<1x32xf32, #tpu.memory_space<vmem>>, %arg3: memref<1x32xf32, #tpu.memory_space<vmem>>, %arg4: memref<16x32xbf16, #tpu.memory_space<vmem>>) attributes {dimension_semantics = [#tpu.dimension_semantics<parallel>], iteration_bounds = array<i64: 2>, scalar_prefetch = 0 : i64, scratch_operands = 0 : i64, tpu.core_type = #tpu.core_type<tc>, window_params = [{transform_indices = @transform_0, window_bounds = array<i64: 16, 32>}, {pipeline_mode = #tpu.pipeline_mode<synchronous>, transform_indices = @transform_1, window_bounds = array<i64: 1, 32>}, {pipeline_mode = #tpu.pipeline_mode<synchronous>, transform_indices = @transform_2, window_bounds = array<i64: 1, 32>}, {transform_indices = @transform_3, window_bounds = array<i64: 16, 32>}]} {
    %c0 = arith.constant 0 : index
    %c0_0 = arith.constant 0 : index
    %0 = vector.load %arg1[%c0, %c0_0] : memref<16x32xbf16, #tpu.memory_space<vmem>>, vector<16x32xbf16>
    %1 = arith.extf %0 : vector<16x32xbf16> to vector<16x32xf32>
    %cst = arith.constant dense<0.000000e+00> : vector<16xf32>
    %2 = vector.multi_reduction <add>, %1, %cst [1] : vector<16x32xf32> to vector<16xf32>
    %3 = vector.shape_cast %2 : vector<16xf32> to vector<16x1xf32>
    %cst_1 = arith.constant 3.200000e+01 : f32
    %4 = vector.broadcast %cst_1 : f32 to vector<16x1xf32>
    %5 = arith.divf %3, %4 : vector<16x1xf32>
    %6 = vector.broadcast %5 : vector<16x1xf32> to vector<16x32xf32>
    %7 = arith.subf %1, %6 : vector<16x32xf32>
    %8 = arith.mulf %7, %7 : vector<16x32xf32>
    %cst_2 = arith.constant dense<0.000000e+00> : vector<16xf32>
    %9 = vector.multi_reduction <add>, %8, %cst_2 [1] : vector<16x32xf32> to vector<16xf32>
    %10 = vector.shape_cast %9 : vector<16xf32> to vector<16x1xf32>
    %cst_3 = arith.constant 3.200000e+01 : f32
    %11 = vector.broadcast %cst_3 : f32 to vector<16x1xf32>
    %12 = arith.divf %10, %11 : vector<16x1xf32>
    %cst_4 = arith.constant 9.99999974E-6 : f32
    %13 = vector.broadcast %cst_4 : f32 to vector<16x1xf32>
    %14 = arith.addf %12, %13 : vector<16x1xf32>
    %15 = math.rsqrt %14 : vector<16x1xf32>
    %16 = vector.broadcast %15 : vector<16x1xf32> to vector<16x32xf32>
    %17 = arith.mulf %7, %16 : vector<16x32xf32>
    %c0_5 = arith.constant 0 : index
    %c0_6 = arith.constant 0 : index
    %18 = vector.load %arg2[%c0_5, %c0_6] : memref<1x32xf32, #tpu.memory_space<vmem>>, vector<1x32xf32>
    %19 = vector.broadcast %18 : vector<1x32xf32> to vector<16x32xf32>
    %20 = arith.mulf %17, %19 : vector<16x32xf32>
    %c0_7 = arith.constant 0 : index
    %c0_8 = arith.constant 0 : index
    %21 = vector.load %arg3[%c0_7, %c0_8] : memref<1x32xf32, #tpu.memory_space<vmem>>, vector<1x32xf32>
    %22 = vector.broadcast %21 : vector<1x32xf32> to vector<16x32xf32>
    %23 = arith.addf %20, %22 : vector<16x32xf32>
    %24 = arith.truncf %23 : vector<16x32xf32> to vector<16x32xbf16>
    %c0_9 = arith.constant 0 : index
    %c0_10 = arith.constant 0 : index
    %25 = vector.load %arg4[%c0_9, %c0_10] : memref<16x32xbf16, #tpu.memory_space<vmem>>, vector<16x32xbf16>
    tpu.vector_store %arg4[%c0_9, %c0_10], %24 {strides = array<i32>} : memref<16x32xbf16, #tpu.memory_space<vmem>>, vector<16x32xbf16>,
    return
  }
  func.func @transform_0(%arg0: i32) -> (i32, i32) {
    %c0_i32 = arith.constant 0 : i32
    %c0_i32_0 = arith.constant 0 : i32
    return %arg0, %c0_i32 : i32, i32
  }
  func.func @transform_1(%arg0: i32) -> (i32, i32) {
    %c0_i32 = arith.constant 0 : i32
    %c0_i32_0 = arith.constant 0 : i32
    %c0_i32_1 = arith.constant 0 : i32
    return %c0_i32, %c0_i32_0 : i32, i32
  }
  func.func @transform_2(%arg0: i32) -> (i32, i32) {
    %c0_i32 = arith.constant 0 : i32
    %c0_i32_0 = arith.constant 0 : i32
    %c0_i32_1 = arith.constant 0 : i32
    return %c0_i32, %c0_i32_0 : i32, i32
  }
  func.func @transform_3(%arg0: i32) -> (i32, i32) {
    %c0_i32 = arith.constant 0 : i32
    %c0_i32_0 = arith.constant 0 : i32
    return %arg0, %c0_i32 : i32, i32
  }
}

module attributes {stable_mosaic.version = 11 : i64} {
  func.func @_mm_kernel(%arg0: i32, %arg1: i32, %arg2: i32, %arg3: memref<16x384xbf16, #tpu.memory_space<vmem>>, %arg4: memref<384x128xbf16, #tpu.memory_space<vmem>>, %arg5: memref<16x128xbf16, #tpu.memory_space<vmem>>, %arg6: memref<16x128xf32, #tpu.memory_space<vmem>>) attributes {dimension_semantics = [#tpu.dimension_semantics<parallel>, #tpu.dimension_semantics<parallel>, #tpu.dimension_semantics<arbitrary>], iteration_bounds = array<i64: 2, 1, 1>, scalar_prefetch = 0 : i64, scratch_operands = 1 : i64, tpu.core_type = #tpu.core_type<tc>, window_params = [{transform_indices = @transform_0, window_bounds = array<i64: 16, 384>}, {transform_indices = @transform_1, window_bounds = array<i64: 384, 128>}, {transform_indices = @transform_2, window_bounds = array<i64: 16, 128>}]} {
    %c0_i32 = arith.constant 0 : i32
    %0 = arith.cmpi eq, %arg2, %c0_i32 : i32
    %1 = arith.extui %0 : i1 to i32
    %c0_i32_0 = arith.constant 0 : i32
    %2 = arith.cmpi ne, %1, %c0_i32_0 : i32
    scf.if %2 {
      %cst_10 = arith.constant 0.000000e+00 : f32
      %12 = vector.broadcast %cst_10 : f32 to vector<16x128xf32>
      %c0_11 = arith.constant 0 : index
      %c0_12 = arith.constant 0 : index
      %13 = vector.load %arg6[%c0_11, %c0_12] : memref<16x128xf32, #tpu.memory_space<vmem>>, vector<16x128xf32>
      tpu.vector_store %arg6[%c0_11, %c0_12], %12 {strides = array<i32>} : memref<16x128xf32, #tpu.memory_space<vmem>>, vector<16x128xf32>,
    } else {
    }
    %c0 = arith.constant 0 : index
    %c0_1 = arith.constant 0 : index
    %3 = vector.load %arg6[%c0, %c0_1] : memref<16x128xf32, #tpu.memory_space<vmem>>, vector<16x128xf32>
    %c0_2 = arith.constant 0 : index
    %c0_3 = arith.constant 0 : index
    %4 = vector.load %arg3[%c0_2, %c0_3] : memref<16x384xbf16, #tpu.memory_space<vmem>>, vector<16x384xbf16>
    %c0_4 = arith.constant 0 : index
    %c0_5 = arith.constant 0 : index
    %5 = vector.load %arg4[%c0_4, %c0_5] : memref<384x128xbf16, #tpu.memory_space<vmem>>, vector<384x128xbf16>
    %cst = arith.constant dense<0.000000e+00> : vector<16x128xf32>
    %6 = tpu.matmul %4, %5, %cst {dimension_numbers = #tpu.dot_dimension_numbers<[1], [0], [0], [1], [0, 0, 1, 1], [], []>} : vector<16x384xbf16>, vector<384x128xbf16>, vector<16x128xf32> -> vector<16x128xf32>
    %7 = arith.addf %3, %6 : vector<16x128xf32>
    %c0_6 = arith.constant 0 : index
    %c0_7 = arith.constant 0 : index
    %8 = vector.load %arg6[%c0_6, %c0_7] : memref<16x128xf32, #tpu.memory_space<vmem>>, vector<16x128xf32>
    tpu.vector_store %arg6[%c0_6, %c0_7], %7 {strides = array<i32>} : memref<16x128xf32, #tpu.memory_space<vmem>>, vector<16x128xf32>,
    %c0_i32_8 = arith.constant 0 : i32
    %9 = arith.cmpi eq, %arg2, %c0_i32_8 : i32
    %10 = arith.extui %9 : i1 to i32
    %c0_i32_9 = arith.constant 0 : i32
    %11 = arith.cmpi ne, %10, %c0_i32_9 : i32
    scf.if %11 {
      %c0_10 = arith.constant 0 : index
      %c0_11 = arith.constant 0 : index
      %12 = vector.load %arg6[%c0_10, %c0_11] : memref<16x128xf32, #tpu.memory_space<vmem>>, vector<16x128xf32>
      %13 = arith.truncf %12 : vector<16x128xf32> to vector<16x128xbf16>
      %c0_12 = arith.constant 0 : index
      %c0_13 = arith.constant 0 : index
      %14 = vector.load %arg5[%c0_12, %c0_13] : memref<16x128xbf16, #tpu.memory_space<vmem>>, vector<16x128xbf16>
      tpu.vector_store %arg5[%c0_12, %c0_13], %13 {strides = array<i32>} : memref<16x128xbf16, #tpu.memory_space<vmem>>, vector<16x128xbf16>,
    } else {
    }
    return
  }
  func.func @transform_0(%arg0: i32, %arg1: i32, %arg2: i32) -> (i32, i32) {
    %c0_i32 = arith.constant 0 : i32
    return %arg0, %arg2 : i32, i32
  }
  func.func @transform_1(%arg0: i32, %arg1: i32, %arg2: i32) -> (i32, i32) {
    %c0_i32 = arith.constant 0 : i32
    return %arg2, %arg1 : i32, i32
  }
  func.func @transform_2(%arg0: i32, %arg1: i32, %arg2: i32) -> (i32, i32) {
    %c0_i32 = arith.constant 0 : i32
    return %arg0, %arg1 : i32, i32
  }
}

module attributes {stable_mosaic.version = 11 : i64} {
  func.func @_attn_kernel(%arg0: i32, %arg1: i32, %arg2: memref<1x16x96xbf16, #tpu.memory_space<vmem>>, %arg3: memref<1x16x96xbf16, #tpu.memory_space<vmem>>, %arg4: memref<1x16x32xbf16, #tpu.memory_space<vmem>>) attributes {dimension_semantics = [#tpu.dimension_semantics<parallel>, #tpu.dimension_semantics<parallel>], iteration_bounds = array<i64: 2, 1>, scalar_prefetch = 0 : i64, scratch_operands = 0 : i64, tpu.core_type = #tpu.core_type<tc>, window_params = [{transform_indices = @transform_0, window_bounds = array<i64: 1, 16, 96>}, {transform_indices = @transform_1, window_bounds = array<i64: 1, 16, 96>}, {transform_indices = @transform_2, window_bounds = array<i64: 1, 16, 32>}]} {
    %c0 = arith.constant 0 : index
    %c0_0 = arith.constant 0 : index
    %c0_1 = arith.constant 0 : index
    %0 = vector.load %arg2[%c0, %c0_0, %c0_1] : memref<1x16x96xbf16, #tpu.memory_space<vmem>>, vector<1x16x96xbf16>
    %1 = vector.shape_cast %0 : vector<1x16x96xbf16> to vector<16x96xbf16>
    %c0_2 = arith.constant 0 : index
    %c0_3 = arith.constant 0 : index
    %c0_4 = arith.constant 0 : index
    %2 = vector.load %arg3[%c0_2, %c0_3, %c0_4] : memref<1x16x96xbf16, #tpu.memory_space<vmem>>, vector<1x16x96xbf16>
    %3 = vector.shape_cast %2 : vector<1x16x96xbf16> to vector<16x96xbf16>
    %4 = vector.extract_strided_slice %1 {offsets = [0, 0], sizes = [16, 8], strides = [1, 1]} : vector<16x96xbf16> to vector<16x8xbf16>
    %5 = vector.extract_strided_slice %3 {offsets = [0, 32], sizes = [16, 8], strides = [1, 1]} : vector<16x96xbf16> to vector<16x8xbf16>
    %6 = vector.extract_strided_slice %3 {offsets = [0, 64], sizes = [16, 8], strides = [1, 1]} : vector<16x96xbf16> to vector<16x8xbf16>
    %cst = arith.constant dense<0.000000e+00> : vector<16x16xf32>
    %7 = tpu.matmul %4, %5, %cst {dimension_numbers = #tpu.dot_dimension_numbers<[1], [1], [0], [0], [0, 0, 1, 0], [], []>} : vector<16x8xbf16>, vector<16x8xbf16>, vector<16x16xf32> -> vector<16x16xf32>
    %cst_5 = arith.constant 0.353553385 : f32
    %8 = vector.broadcast %cst_5 : f32 to vector<16x16xf32>
    %9 = arith.mulf %7, %8 : vector<16x16xf32>
    %cst_6 = arith.constant dense<0xFF800000> : vector<16xf32>
    %10 = vector.multi_reduction <maximumf>, %9, %cst_6 [1] : vector<16x16xf32> to vector<16xf32>
    %11 = vector.shape_cast %10 : vector<16xf32> to vector<16x1xf32>
    %12 = vector.broadcast %11 : vector<16x1xf32> to vector<16x16xf32>
    %13 = arith.subf %9, %12 : vector<16x16xf32>
    %14 = math.exp %13 : vector<16x16xf32>
    %cst_7 = arith.constant dense<0.000000e+00> : vector<16xf32>
    %15 = vector.multi_reduction <add>, %14, %cst_7 [1] : vector<16x16xf32> to vector<16xf32>
    %16 = vector.shape_cast %15 : vector<16xf32> to vector<16x1xf32>
    %17 = arith.truncf %14 : vector<16x16xf32> to vector<16x16xbf16>
    %cst_8 = arith.constant dense<0.000000e+00> : vector<16x8xf32>
    %18 = tpu.matmul %17, %6, %cst_8 {dimension_numbers = #tpu.dot_dimension_numbers<[1], [0], [0], [1], [0, 0, 1, 1], [], []>} : vector<16x16xbf16>, vector<16x8xbf16>, vector<16x8xf32> -> vector<16x8xf32>
    %19 = vector.broadcast %16 : vector<16x1xf32> to vector<16x8xf32>
    %20 = arith.divf %18, %19 : vector<16x8xf32>
    %21 = vector.extract_strided_slice %1 {offsets = [0, 8], sizes = [16, 8], strides = [1, 1]} : vector<16x96xbf16> to vector<16x8xbf16>
    %22 = vector.extract_strided_slice %3 {offsets = [0, 40], sizes = [16, 8], strides = [1, 1]} : vector<16x96xbf16> to vector<16x8xbf16>
    %23 = vector.extract_strided_slice %3 {offsets = [0, 72], sizes = [16, 8], strides = [1, 1]} : vector<16x96xbf16> to vector<16x8xbf16>
    %cst_9 = arith.constant dense<0.000000e+00> : vector<16x16xf32>
    %24 = tpu.matmul %21, %22, %cst_9 {dimension_numbers = #tpu.dot_dimension_numbers<[1], [1], [0], [0], [0, 0, 1, 0], [], []>} : vector<16x8xbf16>, vector<16x8xbf16>, vector<16x16xf32> -> vector<16x16xf32>
    %cst_10 = arith.constant 0.353553385 : f32
    %25 = vector.broadcast %cst_10 : f32 to vector<16x16xf32>
    %26 = arith.mulf %24, %25 : vector<16x16xf32>
    %cst_11 = arith.constant dense<0xFF800000> : vector<16xf32>
    %27 = vector.multi_reduction <maximumf>, %26, %cst_11 [1] : vector<16x16xf32> to vector<16xf32>
    %28 = vector.shape_cast %27 : vector<16xf32> to vector<16x1xf32>
    %29 = vector.broadcast %28 : vector<16x1xf32> to vector<16x16xf32>
    %30 = arith.subf %26, %29 : vector<16x16xf32>
    %31 = math.exp %30 : vector<16x16xf32>
    %cst_12 = arith.constant dense<0.000000e+00> : vector<16xf32>
    %32 = vector.multi_reduction <add>, %31, %cst_12 [1] : vector<16x16xf32> to vector<16xf32>
    %33 = vector.shape_cast %32 : vector<16xf32> to vector<16x1xf32>
    %34 = arith.truncf %31 : vector<16x16xf32> to vector<16x16xbf16>
    %cst_13 = arith.constant dense<0.000000e+00> : vector<16x8xf32>
    %35 = tpu.matmul %34, %23, %cst_13 {dimension_numbers = #tpu.dot_dimension_numbers<[1], [0], [0], [1], [0, 0, 1, 1], [], []>} : vector<16x16xbf16>, vector<16x8xbf16>, vector<16x8xf32> -> vector<16x8xf32>
    %36 = vector.broadcast %33 : vector<16x1xf32> to vector<16x8xf32>
    %37 = arith.divf %35, %36 : vector<16x8xf32>
    %38 = vector.extract_strided_slice %1 {offsets = [0, 16], sizes = [16, 8], strides = [1, 1]} : vector<16x96xbf16> to vector<16x8xbf16>
    %39 = vector.extract_strided_slice %3 {offsets = [0, 48], sizes = [16, 8], strides = [1, 1]} : vector<16x96xbf16> to vector<16x8xbf16>
    %40 = vector.extract_strided_slice %3 {offsets = [0, 80], sizes = [16, 8], strides = [1, 1]} : vector<16x96xbf16> to vector<16x8xbf16>
    %cst_14 = arith.constant dense<0.000000e+00> : vector<16x16xf32>
    %41 = tpu.matmul %38, %39, %cst_14 {dimension_numbers = #tpu.dot_dimension_numbers<[1], [1], [0], [0], [0, 0, 1, 0], [], []>} : vector<16x8xbf16>, vector<16x8xbf16>, vector<16x16xf32> -> vector<16x16xf32>
    %cst_15 = arith.constant 0.353553385 : f32
    %42 = vector.broadcast %cst_15 : f32 to vector<16x16xf32>
    %43 = arith.mulf %41, %42 : vector<16x16xf32>
    %cst_16 = arith.constant dense<0xFF800000> : vector<16xf32>
    %44 = vector.multi_reduction <maximumf>, %43, %cst_16 [1] : vector<16x16xf32> to vector<16xf32>
    %45 = vector.shape_cast %44 : vector<16xf32> to vector<16x1xf32>
    %46 = vector.broadcast %45 : vector<16x1xf32> to vector<16x16xf32>
    %47 = arith.subf %43, %46 : vector<16x16xf32>
    %48 = math.exp %47 : vector<16x16xf32>
    %cst_17 = arith.constant dense<0.000000e+00> : vector<16xf32>
    %49 = vector.multi_reduction <add>, %48, %cst_17 [1] : vector<16x16xf32> to vector<16xf32>
    %50 = vector.shape_cast %49 : vector<16xf32> to vector<16x1xf32>
    %51 = arith.truncf %48 : vector<16x16xf32> to vector<16x16xbf16>
    %cst_18 = arith.constant dense<0.000000e+00> : vector<16x8xf32>
    %52 = tpu.matmul %51, %40, %cst_18 {dimension_numbers = #tpu.dot_dimension_numbers<[1], [0], [0], [1], [0, 0, 1, 1], [], []>} : vector<16x16xbf16>, vector<16x8xbf16>, vector<16x8xf32> -> vector<16x8xf32>
    %53 = vector.broadcast %50 : vector<16x1xf32> to vector<16x8xf32>
    %54 = arith.divf %52, %53 : vector<16x8xf32>
    %55 = vector.extract_strided_slice %1 {offsets = [0, 24], sizes = [16, 8], strides = [1, 1]} : vector<16x96xbf16> to vector<16x8xbf16>
    %56 = vector.extract_strided_slice %3 {offsets = [0, 56], sizes = [16, 8], strides = [1, 1]} : vector<16x96xbf16> to vector<16x8xbf16>
    %57 = vector.extract_strided_slice %3 {offsets = [0, 88], sizes = [16, 8], strides = [1, 1]} : vector<16x96xbf16> to vector<16x8xbf16>
    %cst_19 = arith.constant dense<0.000000e+00> : vector<16x16xf32>
    %58 = tpu.matmul %55, %56, %cst_19 {dimension_numbers = #tpu.dot_dimension_numbers<[1], [1], [0], [0], [0, 0, 1, 0], [], []>} : vector<16x8xbf16>, vector<16x8xbf16>, vector<16x16xf32> -> vector<16x16xf32>
    %cst_20 = arith.constant 0.353553385 : f32
    %59 = vector.broadcast %cst_20 : f32 to vector<16x16xf32>
    %60 = arith.mulf %58, %59 : vector<16x16xf32>
    %cst_21 = arith.constant dense<0xFF800000> : vector<16xf32>
    %61 = vector.multi_reduction <maximumf>, %60, %cst_21 [1] : vector<16x16xf32> to vector<16xf32>
    %62 = vector.shape_cast %61 : vector<16xf32> to vector<16x1xf32>
    %63 = vector.broadcast %62 : vector<16x1xf32> to vector<16x16xf32>
    %64 = arith.subf %60, %63 : vector<16x16xf32>
    %65 = math.exp %64 : vector<16x16xf32>
    %cst_22 = arith.constant dense<0.000000e+00> : vector<16xf32>
    %66 = vector.multi_reduction <add>, %65, %cst_22 [1] : vector<16x16xf32> to vector<16xf32>
    %67 = vector.shape_cast %66 : vector<16xf32> to vector<16x1xf32>
    %68 = arith.truncf %65 : vector<16x16xf32> to vector<16x16xbf16>
    %cst_23 = arith.constant dense<0.000000e+00> : vector<16x8xf32>
    %69 = tpu.matmul %68, %57, %cst_23 {dimension_numbers = #tpu.dot_dimension_numbers<[1], [0], [0], [1], [0, 0, 1, 1], [], []>} : vector<16x16xbf16>, vector<16x8xbf16>, vector<16x8xf32> -> vector<16x8xf32>
    %70 = vector.broadcast %67 : vector<16x1xf32> to vector<16x8xf32>
    %71 = arith.divf %69, %70 : vector<16x8xf32>
    %72 = tpu.concatenate %20, %37, %54, %71 in 1 : vector<16x8xf32>, vector<16x8xf32>, vector<16x8xf32>, vector<16x8xf32> -> vector<16x32xf32>
    %73 = arith.truncf %72 : vector<16x32xf32> to vector<16x32xbf16>
    %74 = vector.shape_cast %73 : vector<16x32xbf16> to vector<1x16x32xbf16>
    %c0_24 = arith.constant 0 : index
    %c0_25 = arith.constant 0 : index
    %c0_26 = arith.constant 0 : index
    %75 = vector.load %arg4[%c0_24, %c0_25, %c0_26] : memref<1x16x32xbf16, #tpu.memory_space<vmem>>, vector<1x16x32xbf16>
    tpu.vector_store %arg4[%c0_24, %c0_25, %c0_26], %74 {strides = array<i32>} : memref<1x16x32xbf16, #tpu.memory_space<vmem>>, vector<1x16x32xbf16>,
    return
  }
  func.func @transform_0(%arg0: i32, %arg1: i32) -> (i32, i32, i32) {
    %c0_i32 = arith.constant 0 : i32
    %c0_i32_0 = arith.constant 0 : i32
    return %arg0, %arg1, %c0_i32 : i32, i32, i32
  }
  func.func @transform_1(%arg0: i32, %arg1: i32) -> (i32, i32, i32) {
    %c0_i32 = arith.constant 0 : i32
    %c0_i32_0 = arith.constant 0 : i32
    %c0_i32_1 = arith.constant 0 : i32
    return %arg0, %c0_i32, %c0_i32_0 : i32, i32, i32
  }
  func.func @transform_2(%arg0: i32, %arg1: i32) -> (i32, i32, i32) {
    %c0_i32 = arith.constant 0 : i32
    %c0_i32_0 = arith.constant 0 : i32
    return %arg0, %arg1, %c0_i32 : i32, i32, i32
  }
}

module attributes {stable_mosaic.version = 11 : i64} {
  func.func @_mm_kernel(%arg0: i32, %arg1: i32, %arg2: i32, %arg3: memref<16x128xbf16, #tpu.memory_space<vmem>>, %arg4: memref<128x128xbf16, #tpu.memory_space<vmem>>, %arg5: memref<1x128xf32, #tpu.memory_space<vmem>>, %arg6: memref<16x128xbf16, #tpu.memory_space<vmem>>, %arg7: memref<16x128xf32, #tpu.memory_space<vmem>>) attributes {dimension_semantics = [#tpu.dimension_semantics<parallel>, #tpu.dimension_semantics<parallel>, #tpu.dimension_semantics<arbitrary>], iteration_bounds = array<i64: 2, 1, 1>, scalar_prefetch = 0 : i64, scratch_operands = 1 : i64, tpu.core_type = #tpu.core_type<tc>, window_params = [{transform_indices = @transform_0, window_bounds = array<i64: 16, 128>}, {transform_indices = @transform_1, window_bounds = array<i64: 128, 128>}, {transform_indices = @transform_2, window_bounds = array<i64: 1, 128>}, {transform_indices = @transform_3, window_bounds = array<i64: 16, 128>}]} {
    %c0_i32 = arith.constant 0 : i32
    %0 = arith.cmpi eq, %arg2, %c0_i32 : i32
    %1 = arith.extui %0 : i1 to i32
    %c0_i32_0 = arith.constant 0 : i32
    %2 = arith.cmpi ne, %1, %c0_i32_0 : i32
    scf.if %2 {
      %cst_10 = arith.constant 0.000000e+00 : f32
      %12 = vector.broadcast %cst_10 : f32 to vector<16x128xf32>
      %c0_11 = arith.constant 0 : index
      %c0_12 = arith.constant 0 : index
      %13 = vector.load %arg7[%c0_11, %c0_12] : memref<16x128xf32, #tpu.memory_space<vmem>>, vector<16x128xf32>
      tpu.vector_store %arg7[%c0_11, %c0_12], %12 {strides = array<i32>} : memref<16x128xf32, #tpu.memory_space<vmem>>, vector<16x128xf32>,
    } else {
    }
    %c0 = arith.constant 0 : index
    %c0_1 = arith.constant 0 : index
    %3 = vector.load %arg7[%c0, %c0_1] : memref<16x128xf32, #tpu.memory_space<vmem>>, vector<16x128xf32>
    %c0_2 = arith.constant 0 : index
    %c0_3 = arith.constant 0 : index
    %4 = vector.load %arg3[%c0_2, %c0_3] : memref<16x128xbf16, #tpu.memory_space<vmem>>, vector<16x128xbf16>
    %c0_4 = arith.constant 0 : index
    %c0_5 = arith.constant 0 : index
    %5 = vector.load %arg4[%c0_4, %c0_5] : memref<128x128xbf16, #tpu.memory_space<vmem>>, vector<128x128xbf16>
    %cst = arith.constant dense<0.000000e+00> : vector<16x128xf32>
    %6 = tpu.matmul %4, %5, %cst {dimension_numbers = #tpu.dot_dimension_numbers<[1], [0], [0], [1], [0, 0, 1, 1], [], []>} : vector<16x128xbf16>, vector<128x128xbf16>, vector<16x128xf32> -> vector<16x128xf32>
    %7 = arith.addf %3, %6 : vector<16x128xf32>
    %c0_6 = arith.constant 0 : index
    %c0_7 = arith.constant 0 : index
    %8 = vector.load %arg7[%c0_6, %c0_7] : memref<16x128xf32, #tpu.memory_space<vmem>>, vector<16x128xf32>
    tpu.vector_store %arg7[%c0_6, %c0_7], %7 {strides = array<i32>} : memref<16x128xf32, #tpu.memory_space<vmem>>, vector<16x128xf32>,
    %c0_i32_8 = arith.constant 0 : i32
    %9 = arith.cmpi eq, %arg2, %c0_i32_8 : i32
    %10 = arith.extui %9 : i1 to i32
    %c0_i32_9 = arith.constant 0 : i32
    %11 = arith.cmpi ne, %10, %c0_i32_9 : i32
    scf.if %11 {
      %c0_10 = arith.constant 0 : index
      %c0_11 = arith.constant 0 : index
      %12 = vector.load %arg7[%c0_10, %c0_11] : memref<16x128xf32, #tpu.memory_space<vmem>>, vector<16x128xf32>
      %c0_12 = arith.constant 0 : index
      %c0_13 = arith.constant 0 : index
      %13 = vector.load %arg5[%c0_12, %c0_13] : memref<1x128xf32, #tpu.memory_space<vmem>>, vector<1x128xf32>
      %14 = vector.broadcast %13 : vector<1x128xf32> to vector<16x128xf32>
      %15 = arith.addf %12, %14 : vector<16x128xf32>
      %cst_14 = arith.constant 5.000000e-01 : f32
      %16 = vector.broadcast %cst_14 : f32 to vector<16x128xf32>
      %17 = arith.mulf %16, %15 : vector<16x128xf32>
      %cst_15 = arith.constant 0.707106769 : f32
      %18 = vector.broadcast %cst_15 : f32 to vector<16x128xf32>
      %19 = arith.mulf %15, %18 : vector<16x128xf32>
      %20 = math.erf %19 : vector<16x128xf32>
      %cst_16 = arith.constant 1.000000e+00 : f32
      %21 = vector.broadcast %cst_16 : f32 to vector<16x128xf32>
      %22 = arith.addf %21, %20 : vector<16x128xf32>
      %23 = arith.mulf %17, %22 : vector<16x128xf32>
      %24 = arith.truncf %23 : vector<16x128xf32> to vector<16x128xbf16>
      %c0_17 = arith.constant 0 : index
      %c0_18 = arith.constant 0 : index
      %25 = vector.load %arg6[%c0_17, %c0_18] : memref<16x128xbf16, #tpu.memory_space<vmem>>, vector<16x128xbf16>
      tpu.vector_store %arg6[%c0_17, %c0_18], %24 {strides = array<i32>} : memref<16x128xbf16, #tpu.memory_space<vmem>>, vector<16x128xbf16>,
    } else {
    }
    return
  }
  func.func @transform_0(%arg0: i32, %arg1: i32, %arg2: i32) -> (i32, i32) {
    %c0_i32 = arith.constant 0 : i32
    return %arg0, %arg2 : i32, i32
  }
  func.func @transform_1(%arg0: i32, %arg1: i32, %arg2: i32) -> (i32, i32) {
    %c0_i32 = arith.constant 0 : i32
    return %arg2, %arg1 : i32, i32
  }
  func.func @transform_2(%arg0: i32, %arg1: i32, %arg2: i32) -> (i32, i32) {
    %c0_i32 = arith.constant 0 : i32
    %c0_i32_0 = arith.constant 0 : i32
    return %c0_i32, %arg1 : i32, i32
  }
  func.func @transform_3(%arg0: i32, %arg1: i32, %arg2: i32) -> (i32, i32) {
    %c0_i32 = arith.constant 0 : i32
    return %arg0, %arg1 : i32, i32
  }
}

module attributes {stable_mosaic.version = 11 : i64} {
  func.func @_mm_kernel(%arg0: i32, %arg1: i32, %arg2: i32, %arg3: memref<16x128xbf16, #tpu.memory_space<vmem>>, %arg4: memref<128x128xbf16, #tpu.memory_space<vmem>>, %arg5: memref<1x128xf32, #tpu.memory_space<vmem>>, %arg6: memref<16x128xbf16, #tpu.memory_space<vmem>>, %arg7: memref<16x128xbf16, #tpu.memory_space<vmem>>, %arg8: memref<16x128xf32, #tpu.memory_space<vmem>>) attributes {dimension_semantics = [#tpu.dimension_semantics<parallel>, #tpu.dimension_semantics<parallel>, #tpu.dimension_semantics<arbitrary>], iteration_bounds = array<i64: 2, 1, 1>, scalar_prefetch = 0 : i64, scratch_operands = 1 : i64, tpu.core_type = #tpu.core_type<tc>, window_params = [{transform_indices = @transform_0, window_bounds = array<i64: 16, 128>}, {transform_indices = @transform_1, window_bounds = array<i64: 128, 128>}, {transform_indices = @transform_2, window_bounds = array<i64: 1, 128>}, {transform_indices = @transform_3, window_bounds = array<i64: 16, 128>}, {transform_indices = @transform_4, window_bounds = array<i64: 16, 128>}]} {
    %c0_i32 = arith.constant 0 : i32
    %0 = arith.cmpi eq, %arg2, %c0_i32 : i32
    %1 = arith.extui %0 : i1 to i32
    %c0_i32_0 = arith.constant 0 : i32
    %2 = arith.cmpi ne, %1, %c0_i32_0 : i32
    scf.if %2 {
      %cst_10 = arith.constant 0.000000e+00 : f32
      %12 = vector.broadcast %cst_10 : f32 to vector<16x128xf32>
      %c0_11 = arith.constant 0 : index
      %c0_12 = arith.constant 0 : index
      %13 = vector.load %arg8[%c0_11, %c0_12] : memref<16x128xf32, #tpu.memory_space<vmem>>, vector<16x128xf32>
      tpu.vector_store %arg8[%c0_11, %c0_12], %12 {strides = array<i32>} : memref<16x128xf32, #tpu.memory_space<vmem>>, vector<16x128xf32>,
    } else {
    }
    %c0 = arith.constant 0 : index
    %c0_1 = arith.constant 0 : index
    %3 = vector.load %arg8[%c0, %c0_1] : memref<16x128xf32, #tpu.memory_space<vmem>>, vector<16x128xf32>
    %c0_2 = arith.constant 0 : index
    %c0_3 = arith.constant 0 : index
    %4 = vector.load %arg3[%c0_2, %c0_3] : memref<16x128xbf16, #tpu.memory_space<vmem>>, vector<16x128xbf16>
    %c0_4 = arith.constant 0 : index
    %c0_5 = arith.constant 0 : index
    %5 = vector.load %arg4[%c0_4, %c0_5] : memref<128x128xbf16, #tpu.memory_space<vmem>>, vector<128x128xbf16>
    %cst = arith.constant dense<0.000000e+00> : vector<16x128xf32>
    %6 = tpu.matmul %4, %5, %cst {dimension_numbers = #tpu.dot_dimension_numbers<[1], [0], [0], [1], [0, 0, 1, 1], [], []>} : vector<16x128xbf16>, vector<128x128xbf16>, vector<16x128xf32> -> vector<16x128xf32>
    %7 = arith.addf %3, %6 : vector<16x128xf32>
    %c0_6 = arith.constant 0 : index
    %c0_7 = arith.constant 0 : index
    %8 = vector.load %arg8[%c0_6, %c0_7] : memref<16x128xf32, #tpu.memory_space<vmem>>, vector<16x128xf32>
    tpu.vector_store %arg8[%c0_6, %c0_7], %7 {strides = array<i32>} : memref<16x128xf32, #tpu.memory_space<vmem>>, vector<16x128xf32>,
    %c0_i32_8 = arith.constant 0 : i32
    %9 = arith.cmpi eq, %arg2, %c0_i32_8 : i32
    %10 = arith.extui %9 : i1 to i32
    %c0_i32_9 = arith.constant 0 : i32
    %11 = arith.cmpi ne, %10, %c0_i32_9 : i32
    scf.if %11 {
      %c0_10 = arith.constant 0 : index
      %c0_11 = arith.constant 0 : index
      %12 = vector.load %arg8[%c0_10, %c0_11] : memref<16x128xf32, #tpu.memory_space<vmem>>, vector<16x128xf32>
      %c0_12 = arith.constant 0 : index
      %c0_13 = arith.constant 0 : index
      %13 = vector.load %arg5[%c0_12, %c0_13] : memref<1x128xf32, #tpu.memory_space<vmem>>, vector<1x128xf32>
      %14 = vector.broadcast %13 : vector<1x128xf32> to vector<16x128xf32>
      %15 = arith.addf %12, %14 : vector<16x128xf32>
      %c0_14 = arith.constant 0 : index
      %c0_15 = arith.constant 0 : index
      %16 = vector.load %arg6[%c0_14, %c0_15] : memref<16x128xbf16, #tpu.memory_space<vmem>>, vector<16x128xbf16>
      %17 = arith.extf %16 : vector<16x128xbf16> to vector<16x128xf32>
      %18 = arith.addf %15, %17 : vector<16x128xf32>
      %19 = arith.truncf %18 : vector<16x128xf32> to vector<16x128xbf16>
      %c0_16 = arith.constant 0 : index
      %c0_17 = arith.constant 0 : index
      %20 = vector.load %arg7[%c0_16, %c0_17] : memref<16x128xbf16, #tpu.memory_space<vmem>>, vector<16x128xbf16>
      tpu.vector_store %arg7[%c0_16, %c0_17], %19 {strides = array<i32>} : memref<16x128xbf16, #tpu.memory_space<vmem>>, vector<16x128xbf16>,
    } else {
    }
    return
  }
  func.func @transform_0(%arg0: i32, %arg1: i32, %arg2: i32) -> (i32, i32) {
    %c0_i32 = arith.constant 0 : i32
    return %arg0, %arg2 : i32, i32
  }
  func.func @transform_1(%arg0: i32, %arg1: i32, %arg2: i32) -> (i32, i32) {
    %c0_i32 = arith.constant 0 : i32
    return %arg2, %arg1 : i32, i32
  }
  func.func @transform_2(%arg0: i32, %arg1: i32, %arg2: i32) -> (i32, i32) {
    %c0_i32 = arith.constant 0 : i32
    %c0_i32_0 = arith.constant 0 : i32
    return %c0_i32, %arg1 : i32, i32
  }
  func.func @transform_3(%arg0: i32, %arg1: i32, %arg2: i32) -> (i32, i32) {
    %c0_i32 = arith.constant 0 : i32
    return %arg0, %arg1 : i32, i32
  }
  func.func @transform_4(%arg0: i32, %arg1: i32, %arg2: i32) -> (i32, i32) {
    %c0_i32 = arith.constant 0 : i32
    return %arg0, %arg1 : i32, i32
  }
}

module attributes {stable_mosaic.version = 11 : i64} {
  func.func @_mm_kernel(%arg0: i32, %arg1: i32, %arg2: i32, %arg3: memref<16x128xbf16, #tpu.memory_space<vmem>>, %arg4: memref<128x128xbf16, #tpu.memory_space<vmem>>, %arg5: memref<1x128xf32, #tpu.memory_space<vmem>>, %arg6: memref<16x128xbf16, #tpu.memory_space<vmem>>, %arg7: memref<16x128xbf16, #tpu.memory_space<vmem>>, %arg8: memref<16x128xf32, #tpu.memory_space<vmem>>) attributes {dimension_semantics = [#tpu.dimension_semantics<parallel>, #tpu.dimension_semantics<parallel>, #tpu.dimension_semantics<arbitrary>], iteration_bounds = array<i64: 2, 1, 1>, scalar_prefetch = 0 : i64, scratch_operands = 1 : i64, tpu.core_type = #tpu.core_type<tc>, window_params = [{transform_indices = @transform_0, window_bounds = array<i64: 16, 128>}, {transform_indices = @transform_1, window_bounds = array<i64: 128, 128>}, {transform_indices = @transform_2, window_bounds = array<i64: 1, 128>}, {transform_indices = @transform_3, window_bounds = array<i64: 16, 128>}, {transform_indices = @transform_4, window_bounds = array<i64: 16, 128>}]} {
    %c0_i32 = arith.constant 0 : i32
    %0 = arith.cmpi eq, %arg2, %c0_i32 : i32
    %1 = arith.extui %0 : i1 to i32
    %c0_i32_0 = arith.constant 0 : i32
    %2 = arith.cmpi ne, %1, %c0_i32_0 : i32
    scf.if %2 {
      %cst_10 = arith.constant 0.000000e+00 : f32
      %12 = vector.broadcast %cst_10 : f32 to vector<16x128xf32>
      %c0_11 = arith.constant 0 : index
      %c0_12 = arith.constant 0 : index
      %13 = vector.load %arg8[%c0_11, %c0_12] : memref<16x128xf32, #tpu.memory_space<vmem>>, vector<16x128xf32>
      tpu.vector_store %arg8[%c0_11, %c0_12], %12 {strides = array<i32>} : memref<16x128xf32, #tpu.memory_space<vmem>>, vector<16x128xf32>,
    } else {
    }
    %c0 = arith.constant 0 : index
    %c0_1 = arith.constant 0 : index
    %3 = vector.load %arg8[%c0, %c0_1] : memref<16x128xf32, #tpu.memory_space<vmem>>, vector<16x128xf32>
    %c0_2 = arith.constant 0 : index
    %c0_3 = arith.constant 0 : index
    %4 = vector.load %arg3[%c0_2, %c0_3] : memref<16x128xbf16, #tpu.memory_space<vmem>>, vector<16x128xbf16>
    %c0_4 = arith.constant 0 : index
    %c0_5 = arith.constant 0 : index
    %5 = vector.load %arg4[%c0_4, %c0_5] : memref<128x128xbf16, #tpu.memory_space<vmem>>, vector<128x128xbf16>
    %cst = arith.constant dense<0.000000e+00> : vector<16x128xf32>
    %6 = tpu.matmul %4, %5, %cst {dimension_numbers = #tpu.dot_dimension_numbers<[1], [0], [0], [1], [0, 0, 1, 1], [], []>} : vector<16x128xbf16>, vector<128x128xbf16>, vector<16x128xf32> -> vector<16x128xf32>
    %7 = arith.addf %3, %6 : vector<16x128xf32>
    %c0_6 = arith.constant 0 : index
    %c0_7 = arith.constant 0 : index
    %8 = vector.load %arg8[%c0_6, %c0_7] : memref<16x128xf32, #tpu.memory_space<vmem>>, vector<16x128xf32>
    tpu.vector_store %arg8[%c0_6, %c0_7], %7 {strides = array<i32>} : memref<16x128xf32, #tpu.memory_space<vmem>>, vector<16x128xf32>,
    %c0_i32_8 = arith.constant 0 : i32
    %9 = arith.cmpi eq, %arg2, %c0_i32_8 : i32
    %10 = arith.extui %9 : i1 to i32
    %c0_i32_9 = arith.constant 0 : i32
    %11 = arith.cmpi ne, %10, %c0_i32_9 : i32
    scf.if %11 {
      %c0_10 = arith.constant 0 : index
      %c0_11 = arith.constant 0 : index
      %12 = vector.load %arg8[%c0_10, %c0_11] : memref<16x128xf32, #tpu.memory_space<vmem>>, vector<16x128xf32>
      %c0_12 = arith.constant 0 : index
      %c0_13 = arith.constant 0 : index
      %13 = vector.load %arg5[%c0_12, %c0_13] : memref<1x128xf32, #tpu.memory_space<vmem>>, vector<1x128xf32>
      %14 = vector.broadcast %13 : vector<1x128xf32> to vector<16x128xf32>
      %15 = arith.addf %12, %14 : vector<16x128xf32>
      %c0_14 = arith.constant 0 : index
      %c0_15 = arith.constant 0 : index
      %16 = vector.load %arg6[%c0_14, %c0_15] : memref<16x128xbf16, #tpu.memory_space<vmem>>, vector<16x128xbf16>
      %17 = arith.extf %16 : vector<16x128xbf16> to vector<16x128xf32>
      %18 = arith.addf %15, %17 : vector<16x128xf32>
      %19 = arith.truncf %18 : vector<16x128xf32> to vector<16x128xbf16>
      %c0_16 = arith.constant 0 : index
      %c0_17 = arith.constant 0 : index
      %20 = vector.load %arg7[%c0_16, %c0_17] : memref<16x128xbf16, #tpu.memory_space<vmem>>, vector<16x128xbf16>
      tpu.vector_store %arg7[%c0_16, %c0_17], %19 {strides = array<i32>} : memref<16x128xbf16, #tpu.memory_space<vmem>>, vector<16x128xbf16>,
    } else {
    }
    return
  }
  func.func @transform_0(%arg0: i32, %arg1: i32, %arg2: i32) -> (i32, i32) {
    %c0_i32 = arith.constant 0 : i32
    return %arg0, %arg2 : i32, i32
  }
  func.func @transform_1(%arg0: i32, %arg1: i32, %arg2: i32) -> (i32, i32) {
    %c0_i32 = arith.constant 0 : i32
    return %arg2, %arg1 : i32, i32
  }
  func.func @transform_2(%arg0: i32, %arg1: i32, %arg2: i32) -> (i32, i32) {
    %c0_i32 = arith.constant 0 : i32
    %c0_i32_0 = arith.constant 0 : i32
    return %c0_i32, %arg1 : i32, i32
  }
  func.func @transform_3(%arg0: i32, %arg1: i32, %arg2: i32) -> (i32, i32) {
    %c0_i32 = arith.constant 0 : i32
    return %arg0, %arg1 : i32, i32
  }
  func.func @transform_4(%arg0: i32, %arg1: i32, %arg2: i32) -> (i32, i32) {
    %c0_i32 = arith.constant 0 : i32
    return %arg0, %arg1 : i32, i32
  }
}

</mosaic_0001>

<llo_original>
// kernel: run.17
$region0: #{run.17}
  #allocation0 [shape = 'u32[]', space=smem, size = 0x4, offset = 0x4, fixed_abs, tag = 'smem constant byte address 0x4 - core index']
  #allocation1 [shape = 'u32[144,128]{1,0:T(1,128)}', space=vmem, size = 0x12000, scoped, tag = 'internal scratch']
  %s0 = inlined_call_operand.vmem [shape: bf16[32,32], index: 0, kind: input, shape index: {}]
  %s1 = inlined_call_operand.vmem [shape: f32[1,32], index: 1, kind: input, shape index: {}]
  %s2 = inlined_call_operand.vmem [shape: f32[1,32], index: 2, kind: input, shape index: {}]
  %s3 = inlined_call_operand.vmem [shape: bf16[32,32], index: 3, kind: output, shape index: {}]
  %s4 = sld [smem:[#allocation0]]
  $region45: #{run.17} parent=0
    _
  %s6 = ssub.s32 1, %s4
  %s7 = scalar_select 0, %s6, %s4
  loop: start=0, step=1, limit=4
  $region2: #{run.17} parent=0 // loop_pre_header
    _
  $region3: #{run.17} parent=0 // loop_header
    %s9 = sphi 0, %s13
    %p10 = scmp.ge.s32.totalorder %s9, 4
    %s19 = sphi 0, %s21
    %s22 = sphi 0, %s19
    %s23 = sphi 0, %s22
    %s39 = sphi 0, %s23
    %s43 = sphi 0, %s43
    %s45 = sphi 0, %s43
    %s46 = sphi 0, %s45
    %s60 = sphi 0, %s46
    %s64 = sphi 0, %s64
    %s66 = sphi 0, %s64
    %s67 = sphi 0, %s66
    %s81 = sphi 0, %s67
    %s87 = sphi 0, %s89
    %s90 = sphi 0, %s87
    %s91 = sphi 0, %s90
    %s107 = sphi 0, %s91
  $region4: #{run.17} parent=0 // loop_header_branch
    %12 = sbr.rel (%p10) target = $region8
  $region5: #{run.17} parent=0 // loop_body
    %s14 = ssub.s32 %s9, 1
    %s15 = ssub.s32 %s9, 2
    %s16 = sadd.s32 %s9, 1
    %s17 = ssub.s32 %s9, %s16
    %p18 = scmp.eq.s32.totalorder %s17, 0
    %s20 = sadd.s32 %s19, 1
    %s21 = scalar_select %p18, %s19, %s20
    %p24 = pneg %p18
    %p25 = scmp.eq.s32.totalorder %s9, 1
    %p26 = por %p24, %p25
    %p27 = scmp.ne.s32.totalorder %s19, %s22
    %p28 = scmp.eq.s32.totalorder %s9, 0
    %p29 = por %p27, %p28
    %p30 = scmp.ne.s32.totalorder %s19, %s22
    %p31 = scmp.eq.s32.totalorder %s14, 1
    %p32 = por %p30, %p31
    %p33 = scmp.ne.s32.totalorder %s22, %s23
    %p34 = scmp.eq.s32.totalorder %s14, 0
    %p35 = por %p33, %p34
    %p36 = scmp.ne.s32.totalorder %s22, %s23
    %p37 = scmp.eq.s32.totalorder %s15, 1
    %p38 = por %p36, %p37
    %p40 = scmp.ne.s32.totalorder %s23, %s39
    %p41 = scmp.eq.s32.totalorder %s15, 0
    %p42 = por %p40, %p41
    %s44 = sadd.s32 %s43, 1
    %p47 = scmp.eq.s32.totalorder %s9, 1
    %p48 = scmp.ne.s32.totalorder %s43, %s45
    %p49 = scmp.eq.s32.totalorder %s9, 0
    %p50 = por %p48, %p49
    %p51 = scmp.ne.s32.totalorder %s43, %s45
    %p52 = scmp.eq.s32.totalorder %s14, 1
    %p53 = por %p51, %p52
    %p54 = scmp.ne.s32.totalorder %s45, %s46
    %p55 = scmp.eq.s32.totalorder %s14, 0
    %p56 = por %p54, %p55
    %p57 = scmp.ne.s32.totalorder %s45, %s46
    %p58 = scmp.eq.s32.totalorder %s15, 1
    %p59 = por %p57, %p58
    %p61 = scmp.ne.s32.totalorder %s46, %s60
    %p62 = scmp.eq.s32.totalorder %s15, 0
    %p63 = por %p61, %p62
    %s65 = sadd.s32 %s64, 1
    %p68 = scmp.eq.s32.totalorder %s9, 1
    %p69 = scmp.ne.s32.totalorder %s64, %s66
    %p70 = scmp.eq.s32.totalorder %s9, 0
    %p71 = por %p69, %p70
    %p72 = scmp.ne.s32.totalorder %s64, %s66
    %p73 = scmp.eq.s32.totalorder %s14, 1
    %p74 = por %p72, %p73
    %p75 = scmp.ne.s32.totalorder %s66, %s67
    %p76 = scmp.eq.s32.totalorder %s14, 0
    %p77 = por %p75, %p76
    %p78 = scmp.ne.s32.totalorder %s66, %s67
    %p79 = scmp.eq.s32.totalorder %s15, 1
    %p80 = por %p78, %p79
    %p82 = scmp.ne.s32.totalorder %s67, %s81
    %p83 = scmp.eq.s32.totalorder %s15, 0
    %p84 = por %p82, %p83
    %s85 = ssub.s32 %s9, %s16
    %p86 = scmp.eq.s32.totalorder %s85, 0
    %s88 = sadd.s32 %s87, 1
    %s89 = scalar_select %p86, %s87, %s88
    %p92 = pneg %p86
    %p93 = scmp.eq.s32.totalorder %s9, 1
    %p94 = por %p92, %p93
    %p95 = scmp.ne.s32.totalorder %s87, %s90
    %p96 = scmp.eq.s32.totalorder %s9, 0
    %p97 = por %p95, %p96
    %p98 = scmp.ne.s32.totalorder %s87, %s90
    %p99 = scmp.eq.s32.totalorder %s14, 1
    %p100 = por %p98, %p99
    %p101 = scmp.ne.s32.totalorder %s90, %s91
    %p102 = scmp.eq.s32.totalorder %s14, 0
    %p103 = por %p101, %p102
    %p104 = scmp.ne.s32.totalorder %s90, %s91
    %p105 = scmp.eq.s32.totalorder %s15, 1
    %p106 = por %p104, %p105
    %p108 = scmp.ne.s32.totalorder %s91, %s107
    %p109 = scmp.eq.s32.totalorder %s15, 0
    %p110 = por %p108, %p109
    %p111 = scmp.le.s32.totalorder 1, %s9
    %p112 = scmp.lt.s32.totalorder %s9, 3
    %p113 = pnand %p111, %p112
    %p114 = pneg %p113
    // Predicated region
    $region9: #{run.17} parent=5 // pred_check
      _
    $region10: #{run.17} parent=5 // pred_check_branch
      %116 = sbr.rel (%p113) target = $region12
    $region11: #{run.17} parent=5 // pred_region
      %s117 = ssub.s32 %s9, 1
      // Predicated region
      $region13: #{run.17} parent=11 // pred_check
        %p118 = pneg %p56
      $region14: #{run.17} parent=11 // pred_check_branch
        %120 = sbr.rel (%p118) target = $region16
      $region15: #{run.17} parent=11 // pred_region
        _
      $region16: #{run.17} parent=11 // pred_fallthru
        _
      // Predicated region
      $region17: #{run.17} parent=11 // pred_check
        %p121 = pneg %p77
      $region18: #{run.17} parent=11 // pred_check_branch
        %123 = sbr.rel (%p121) target = $region20
      $region19: #{run.17} parent=11 // pred_region
        _
      $region20: #{run.17} parent=11 // pred_fallthru
        _
    $region12: #{run.17} parent=5 // pred_fallthru
      _
    %p124 = scmp.lt.s32.totalorder %s9, 2
    // Predicated region
    $region21: #{run.17} parent=5 // pred_check
      %p125 = pneg %p124
    $region22: #{run.17} parent=5 // pred_check_branch
      %127 = sbr.rel (%p125) target = $region24
    $region23: #{run.17} parent=5 // pred_region
      // Predicated region
      $region25: #{run.17} parent=23 // pred_check
        %p128 = pneg %p29
      $region26: #{run.17} parent=23 // pred_check_branch
        %130 = sbr.rel (%p128) target = $region28
      $region27: #{run.17} parent=23 // pred_region
        %s131 = smul.u32 2, %s9
        %p132 = scmp.lt.s32.totalorder %s131, 3
        %s133 = scalar_select %p132, %s131, 3
        %s134 = smul.addr %s133, 4
        %s135 = scalar_lea.vmem %s0, %s134
        %s136 = smul.u32 2, %s9
      $region28: #{run.17} parent=23 // pred_fallthru
        _
    $region24: #{run.17} parent=5 // pred_fallthru
      _
    %p137 = scmp.le.s32.totalorder 1, %s9
    %p138 = scmp.lt.s32.totalorder %s9, 3
    %p139 = pnand %p137, %p138
    %p140 = pneg %p139
    // Predicated region
    $region29: #{run.17} parent=5 // pred_check
      _
    $region30: #{run.17} parent=5 // pred_check_branch
      %142 = sbr.rel (%p139) target = $region32
    $region31: #{run.17} parent=5 // pred_region
      %s143 = ssub.s32 %s9, 1
      %s144 = smul.u32 2, %s14
      %p145 = scmp.lt.s32.totalorder %s144, 3
      %s146 = scalar_select %p145, %s144, 3
      %s147 = smul.addr %s146, 4
      %s148 = scalar_lea.vmem %s0, %s147
      %p149 = pneg %p35
      %p150 = pneg %p32
      %p151 = pneg %p56
      %p152 = pneg %p53
      %p153 = pneg %p77
      %p154 = pneg %p74
      %p155 = pneg %p103
      %p156 = pneg %p100
      %s157 = smul.u32 2, %s14
      %p158 = scmp.lt.s32.totalorder %s157, 3
      %s159 = scalar_select %p158, %s157, 3
      %s160 = smul.addr %s159, 4
      %s161 = scalar_lea.vmem %s3, %s160
      %s162 = smul.u32 2, %s14
      %p163 = scmp.lt.s32.totalorder %s162, 3
      %s164 = scalar_select %p163, %s162, 3
      %s165 = smul.addr %s164, 4
      %s166 = scalar_lea.vmem %s0, %s165
      %s167 = smul.u32 2, %s14
      %s168 = smul.u32 2, %s14
      %p169 = scmp.lt.s32.totalorder %s168, 3
      %s170 = scalar_select %p169, %s168, 3
      %s171 = smul.addr %s170, 4
      %s172 = scalar_lea.vmem %s3, %s171
      %s173 = smul.u32 2, %s14
      %v174 = vld [vmem:[%s166] sm:$0xf]
      %v175 = vld [vmem:[%s166 + $0x4] sm:$0xf]
      %v176 = vunpack.c.l.bf16 %v174
      %v177 = vunpack.c.l.bf16 %v175
      %vm178 = vcmask 261120
      %v179 = vsel %vm178, %v176, 0.0
      %180 = vadd.xlane.f32.xlu0 %v179
      %v181 = vpop.xlane.xlu0 %180
      %v182 = vsel %vm178, %v177, 0.0
      %183 = vadd.xlane.f32.xlu0 %v182
      %v184 = vpop.xlane.xlu0 %183
      %v185 = vrcp.pop 32.0
      %v186 = vmul.f32 %v181, %v185
      %v187 = vmul.f32 %v184, %v185
      %v188 = vsub.f32 %v176, %v186
      %v189 = vsub.f32 %v177, %v187
      %v190 = vmul.f32 %v188, %v188
      %v191 = vmul.f32 %v189, %v189
      %v192 = vsel %vm178, %v190, 0.0
      %193 = vadd.xlane.f32.xlu0 %v192
      %v194 = vpop.xlane.xlu0 %193
      %v195 = vsel %vm178, %v191, 0.0
      %196 = vadd.xlane.f32.xlu0 %v195
      %v197 = vpop.xlane.xlu0 %196
      %v198 = vmul.f32 %v194, %v185
      %v199 = vmul.f32 %v197, %v185
      %v200 = vadd.f32 %v198, 1e-05
      %v201 = vadd.f32 %v199, 1e-05
      %v202 = vrsqrt.pop %v200
      %v203 = vrsqrt.pop %v201
      %v204 = vmul.f32 %v188, %v202
      %v205 = vmul.f32 %v189, %v203
      %v206 = vld [vmem:[%s1] sm:$0x1]
      %v208 = vlaneseq
      %v209 = vshrl.u32 %v208, 7
      %v210 = vsub.s32 0, %v209
      %v211 = vrot.slane %v206, %v210
      %v213 = vmul.f32 %v204, %v211
      %v214 = vmul.f32 %v205, %v211
      %v215 = vld [vmem:[%s2] sm:$0x1]
      %v217 = vlaneseq
      %v218 = vshrl.u32 %v217, 7
      %v219 = vsub.s32 0, %v218
      %v220 = vrot.slane %v215, %v219
      %v222 = vadd.f32 %v213, %v220
      %v223 = vadd.f32 %v214, %v220
      %v224 = vpack.c.bf16 %v223, %v222
      %v226 = vunpack.c.l.b16 %v224
      %v227 = vunpack.c.h.b16 %v224
      %v228 = vpack.c.b16 %v226, %v226
      %v229 = vpack.c.b16 %v227, %v227
      %vm232 = vcmask 257024
      %233 = vst.msk [vmem:[%s172] sm:$0xf] %vm232, %v228
      %234 = vst.msk [vmem:[%s172 + $0x4] sm:$0xf] %vm232, %v229
      %s235 = smul.u32 2, %s14
      %p236 = scmp.lt.s32.totalorder %s235, 3
      %s237 = scalar_select %p236, %s235, 3
      %s238 = smul.addr %s237, 4
      %s239 = scalar_lea.vmem %s3, %s238
      // Predicated region
      $region33: #{run.17} parent=31 // pred_check
        %p240 = pneg %p100
      $region34: #{run.17} parent=31 // pred_check_branch
        %242 = sbr.rel (%p240) target = $region36
      $region35: #{run.17} parent=31 // pred_region
        %s243 = smul.u32 2, %s14
      $region36: #{run.17} parent=31 // pred_fallthru
        _
    $region32: #{run.17} parent=5 // pred_fallthru
      _
    %p244 = scmp.le.s32.totalorder 2, %s9
    // Predicated region
    $region37: #{run.17} parent=5 // pred_check
      %p245 = pneg %p244
    $region38: #{run.17} parent=5 // pred_check_branch
      %247 = sbr.rel (%p245) target = $region40
    $region39: #{run.17} parent=5 // pred_region
      %s248 = ssub.s32 %s9, 2
      // Predicated region
      $region41: #{run.17} parent=39 // pred_check
        %p249 = pneg %p106
      $region42: #{run.17} parent=39 // pred_check_branch
        %251 = sbr.rel (%p249) target = $region44
      $region43: #{run.17} parent=39 // pred_region
        %s252 = smul.u32 2, %s15
        %p253 = scmp.lt.s32.totalorder %s252, 3
        %s254 = scalar_select %p253, %s252, 3
        %s255 = smul.addr %s254, 4
        %s256 = scalar_lea.vmem %s3, %s255
      $region44: #{run.17} parent=39 // pred_fallthru
        _
    $region40: #{run.17} parent=5 // pred_fallthru
      _
  $region6: #{run.17} parent=0 // loop_footer
    %s13 = sadd.s32 1, %s9
  $region7: #{run.17} parent=0 // loop_footer_branch
    %8 = sbr.rel target = $region3
  $region8: #{run.17} parent=0 // loop_exit
    _

// kernel: run.16
$region0: #{run.16}
  #allocation0 [shape = 'u32[]', space=smem, size = 0x4, offset = 0x4, fixed_abs, tag = 'smem constant byte address 0x4 - core index']
  #allocation1 [shape = 'u32[144,128]{1,0:T(1,128)}', space=vmem, size = 0x12000, scoped, tag = 'internal scratch']
  #allocation2 [shape = 'f32[16,128]{1,0:T(8,128)}', space=vmem, size = 0x2000, scoped, tag = 'scratch operand']
  %s0 = inlined_call_operand.vmem [shape: bf16[32,256], index: 0, kind: input, shape index: {}]
  %s1 = inlined_call_operand.vmem [shape: bf16[256,128], index: 1, kind: input, shape index: {}]
  %s2 = inlined_call_operand.vmem [shape: f32[1,128], index: 2, kind: input, shape index: {}]
  %s3 = inlined_call_operand.vmem [shape: bf16[32,128], index: 3, kind: output, shape index: {}]
  %s4 = sld [smem:[#allocation0]]
  $region53: #{run.16} parent=0
    _
  %s6 = ssub.s32 1, %s4
  %s7 = scalar_select 0, %s6, %s4
  loop: start=0, step=1, limit=4
  $region2: #{run.16} parent=0 // loop_pre_header
    _
  $region3: #{run.16} parent=0 // loop_header
    %s9 = sphi 0, %s13
    %p10 = scmp.ge.s32.totalorder %s9, 4
    %s16 = sphi 0, %s35
    %s17 = sphi 0, %s31
    %s18 = sphi 0, %s27
    %s19 = sphi 0, %s16
    %s20 = sphi 0, %s17
    %s21 = sphi 0, %s18
    %s22 = sphi 0, %s19
    %s23 = sphi 0, %s20
    %s24 = sphi 0, %s21
    %s40 = sphi 0, %s42
    %s43 = sphi 0, %s40
    %s44 = sphi 0, %s43
    %s60 = sphi 0, %s44
    %s68 = sphi 0, %s70
    %s71 = sphi 0, %s68
    %s72 = sphi 0, %s71
    %s88 = sphi 0, %s72
    %s94 = sphi 0, %s96
    %s97 = sphi 0, %s94
    %s98 = sphi 0, %s97
    %s114 = sphi 0, %s98
    %s122 = sphi 0, %s124
    %s125 = sphi 0, %s122
    %s126 = sphi 0, %s125
    %s142 = sphi 0, %s126
  $region4: #{run.16} parent=0 // loop_header_branch
    %12 = sbr.rel (%p10) target = $region8
  $region5: #{run.16} parent=0 // loop_body
    %s14 = ssub.s32 %s9, 1
    %s15 = ssub.s32 %s9, 2
    %s25 = sadd.s32 1, %s18
    %p26 = scmp.ge.s32.totalorder %s25, 1
    %s27 = scalar_select %p26, 0, %s25
    %s28 = sadd.s32 1, %s17
    %s29 = scalar_select %p26, %s28, %s17
    %p30 = scmp.ge.s32.totalorder %s29, 1
    %s31 = scalar_select %p30, 0, %s29
    %s32 = sadd.s32 1, %s16
    %s33 = scalar_select %p30, %s32, %s16
    %p34 = scmp.ge.s32.totalorder %s33, 2
    %s35 = scalar_select %p34, 0, %s33
    %s36 = ssub.s32 %s16, %s35
    %s37 = ssub.s32 %s18, %s27
    %s38 = sor.u32 %s36, %s37
    %p39 = scmp.eq.s32.totalorder %s38, 0
    %s41 = sadd.s32 %s40, 1
    %s42 = scalar_select %p39, %s40, %s41
    %p45 = pneg %p39
    %p46 = scmp.eq.s32.totalorder %s9, 1
    %p47 = por %p45, %p46
    %p48 = scmp.ne.s32.totalorder %s40, %s43
    %p49 = scmp.eq.s32.totalorder %s9, 0
    %p50 = por %p48, %p49
    %p51 = scmp.ne.s32.totalorder %s40, %s43
    %p52 = scmp.eq.s32.totalorder %s14, 1
    %p53 = por %p51, %p52
    %p54 = scmp.ne.s32.totalorder %s43, %s44
    %p55 = scmp.eq.s32.totalorder %s14, 0
    %p56 = por %p54, %p55
    %p57 = scmp.ne.s32.totalorder %s43, %s44
    %p58 = scmp.eq.s32.totalorder %s15, 1
    %p59 = por %p57, %p58
    %p61 = scmp.ne.s32.totalorder %s44, %s60
    %p62 = scmp.eq.s32.totalorder %s15, 0
    %p63 = por %p61, %p62
    %s64 = ssub.s32 %s18, %s27
    %s65 = ssub.s32 %s17, %s31
    %s66 = sor.u32 %s64, %s65
    %p67 = scmp.eq.s32.totalorder %s66, 0
    %s69 = sadd.s32 %s68, 1
    %s70 = scalar_select %p67, %s68, %s69
    %p73 = pneg %p67
    %p74 = scmp.eq.s32.totalorder %s9, 1
    %p75 = por %p73, %p74
    %p76 = scmp.ne.s32.totalorder %s68, %s71
    %p77 = scmp.eq.s32.totalorder %s9, 0
    %p78 = por %p76, %p77
    %p79 = scmp.ne.s32.totalorder %s68, %s71
    %p80 = scmp.eq.s32.totalorder %s14, 1
    %p81 = por %p79, %p80
    %p82 = scmp.ne.s32.totalorder %s71, %s72
    %p83 = scmp.eq.s32.totalorder %s14, 0
    %p84 = por %p82, %p83
    %p85 = scmp.ne.s32.totalorder %s71, %s72
    %p86 = scmp.eq.s32.totalorder %s15, 1
    %p87 = por %p85, %p86
    %p89 = scmp.ne.s32.totalorder %s72, %s88
    %p90 = scmp.eq.s32.totalorder %s15, 0
    %p91 = por %p89, %p90
    %s92 = ssub.s32 %s17, %s31
    %p93 = scmp.eq.s32.totalorder %s92, 0
    %s95 = sadd.s32 %s94, 1
    %s96 = scalar_select %p93, %s94, %s95
    %p99 = pneg %p93
    %p100 = scmp.eq.s32.totalorder %s9, 1
    %p101 = por %p99, %p100
    %p102 = scmp.ne.s32.totalorder %s94, %s97
    %p103 = scmp.eq.s32.totalorder %s9, 0
    %p104 = por %p102, %p103
    %p105 = scmp.ne.s32.totalorder %s94, %s97
    %p106 = scmp.eq.s32.totalorder %s14, 1
    %p107 = por %p105, %p106
    %p108 = scmp.ne.s32.totalorder %s97, %s98
    %p109 = scmp.eq.s32.totalorder %s14, 0
    %p110 = por %p108, %p109
    %p111 = scmp.ne.s32.totalorder %s97, %s98
    %p112 = scmp.eq.s32.totalorder %s15, 1
    %p113 = por %p111, %p112
    %p115 = scmp.ne.s32.totalorder %s98, %s114
    %p116 = scmp.eq.s32.totalorder %s15, 0
    %p117 = por %p115, %p116
    %s118 = ssub.s32 %s16, %s35
    %s119 = ssub.s32 %s17, %s31
    %s120 = sor.u32 %s118, %s119
    %p121 = scmp.eq.s32.totalorder %s120, 0
    %s123 = sadd.s32 %s122, 1
    %s124 = scalar_select %p121, %s122, %s123
    %p127 = pneg %p121
    %p128 = scmp.eq.s32.totalorder %s9, 1
    %p129 = por %p127, %p128
    %p130 = scmp.ne.s32.totalorder %s122, %s125
    %p131 = scmp.eq.s32.totalorder %s9, 0
    %p132 = por %p130, %p131
    %p133 = scmp.ne.s32.totalorder %s122, %s125
    %p134 = scmp.eq.s32.totalorder %s14, 1
    %p135 = por %p133, %p134
    %p136 = scmp.ne.s32.totalorder %s125, %s126
    %p137 = scmp.eq.s32.totalorder %s14, 0
    %p138 = por %p136, %p137
    %p139 = scmp.ne.s32.totalorder %s125, %s126
    %p140 = scmp.eq.s32.totalorder %s15, 1
    %p141 = por %p139, %p140
    %p143 = scmp.ne.s32.totalorder %s126, %s142
    %p144 = scmp.eq.s32.totalorder %s15, 0
    %p145 = por %p143, %p144
    %p146 = scmp.le.s32.totalorder 1, %s9
    %p147 = scmp.lt.s32.totalorder %s9, 3
    %p148 = pnand %p146, %p147
    %p149 = pneg %p148
    // Predicated region
    $region9: #{run.16} parent=5 // pred_check
      _
    $region10: #{run.16} parent=5 // pred_check_branch
      %151 = sbr.rel (%p148) target = $region12
    $region11: #{run.16} parent=5 // pred_region
      %s152 = ssub.s32 %s9, 1
      // Predicated region
      $region13: #{run.16} parent=11 // pred_check
        %p153 = pneg %p84
      $region14: #{run.16} parent=11 // pred_check_branch
        %155 = sbr.rel (%p153) target = $region16
      $region15: #{run.16} parent=11 // pred_region
        %s156 = smul.u32 32, %s21
        %p157 = scmp.lt.s32.totalorder %s156, 31
        %s158 = scalar_select %p157, %s156, 31
        %p159 = scmp.lt.s32.totalorder %s20, 0
        %s160 = scalar_select %p159, %s20, 0
        %s161 = sadd.s32 %s160, %s158
        %s162 = smul.addr %s161, 4
        %s163 = scalar_lea.vmem %s1, %s162
        %s164 = smul.u32 32, %s21
      $region16: #{run.16} parent=11 // pred_fallthru
        _
      // Predicated region
      $region17: #{run.16} parent=11 // pred_check
        %p165 = pneg %p110
      $region18: #{run.16} parent=11 // pred_check_branch
        %167 = sbr.rel (%p165) target = $region20
      $region19: #{run.16} parent=11 // pred_region
        %p168 = scmp.lt.s32.totalorder %s20, 0
        %s169 = scalar_select %p168, %s20, 0
        %s170 = scalar_lea.vmem %s2, %s169
      $region20: #{run.16} parent=11 // pred_fallthru
        _
    $region12: #{run.16} parent=5 // pred_fallthru
      _
    %p171 = scmp.lt.s32.totalorder %s9, 2
    // Predicated region
    $region21: #{run.16} parent=5 // pred_check
      %p172 = pneg %p171
    $region22: #{run.16} parent=5 // pred_check_branch
      %174 = sbr.rel (%p172) target = $region24
    $region23: #{run.16} parent=5 // pred_region
      // Predicated region
      $region25: #{run.16} parent=23 // pred_check
        %p175 = pneg %p50
      $region26: #{run.16} parent=23 // pred_check_branch
        %177 = sbr.rel (%p175) target = $region28
      $region27: #{run.16} parent=23 // pred_region
        %s178 = smul.u32 2, %s16
        %s179 = smul.u32 2, %s18
        %p180 = scmp.lt.s32.totalorder %s178, 3
        %s181 = scalar_select %p180, %s178, 3
        %p182 = scmp.lt.s32.totalorder %s179, 1
        %s183 = scalar_select %p182, %s179, 1
        %s184 = smul.addr %s181, 2
        %s185 = sadd.s32 %s183, %s184
        %s186 = smul.addr %s185, 4
        %s187 = scalar_lea.vmem %s0, %s186
        %s188 = smul.u32 2, %s16
        %s189 = smul.u32 2, %s18
      $region28: #{run.16} parent=23 // pred_fallthru
        _
    $region24: #{run.16} parent=5 // pred_fallthru
      _
    %p190 = scmp.le.s32.totalorder 1, %s9
    %p191 = scmp.lt.s32.totalorder %s9, 3
    %p192 = pnand %p190, %p191
    %p193 = pneg %p192
    // Predicated region
    $region29: #{run.16} parent=5 // pred_check
      _
    $region30: #{run.16} parent=5 // pred_check_branch
      %195 = sbr.rel (%p192) target = $region32
    $region31: #{run.16} parent=5 // pred_region
      %s196 = ssub.s32 %s9, 1
      %s197 = smul.u32 2, %s19
      %s198 = smul.u32 2, %s21
      %p199 = scmp.lt.s32.totalorder %s197, 3
      %s200 = scalar_select %p199, %s197, 3
      %p201 = scmp.lt.s32.totalorder %s198, 1
      %s202 = scalar_select %p201, %s198, 1
      %s203 = smul.addr %s200, 2
      %s204 = sadd.s32 %s202, %s203
      %s205 = smul.addr %s204, 4
      %s206 = scalar_lea.vmem %s0, %s205
      %p207 = pneg %p56
      %p208 = pneg %p53
      %s209 = smul.u32 32, %s21
      %p210 = scmp.lt.s32.totalorder %s209, 31
      %s211 = scalar_select %p210, %s209, 31
      %p212 = scmp.lt.s32.totalorder %s20, 0
      %s213 = scalar_select %p212, %s20, 0
      %s214 = sadd.s32 %s213, %s211
      %s215 = smul.addr %s214, 4
      %s216 = scalar_lea.vmem %s1, %s215
      %p217 = pneg %p84
      %p218 = pneg %p81
      %p219 = scmp.lt.s32.totalorder %s20, 0
      %s220 = scalar_select %p219, %s20, 0
      %s221 = scalar_lea.vmem %s2, %s220
      %p222 = pneg %p110
      %p223 = pneg %p107
      %p224 = pneg %p138
      %p225 = pneg %p135
      %s226 = smul.u32 2, %s19
      %p227 = scmp.lt.s32.totalorder %s226, 3
      %s228 = scalar_select %p227, %s226, 3
      %p229 = scmp.lt.s32.totalorder %s20, 0
      %s230 = scalar_select %p229, %s20, 0
      %s231 = sadd.s32 %s230, %s228
      %s232 = smul.addr %s231, 4
      %s233 = scalar_lea.vmem %s3, %s232
      %s234 = smul.u32 2, %s19
      %s235 = smul.u32 2, %s21
      %p236 = scmp.lt.s32.totalorder %s234, 3
      %s237 = scalar_select %p236, %s234, 3
      %p238 = scmp.lt.s32.totalorder %s235, 1
      %s239 = scalar_select %p238, %s235, 1
      %s240 = smul.addr %s237, 2
      %s241 = sadd.s32 %s239, %s240
      %s242 = smul.addr %s241, 4
      %s243 = scalar_lea.vmem %s0, %s242
      %s244 = smul.u32 2, %s19
      %s245 = smul.u32 2, %s21
      %s246 = smul.u32 32, %s21
      %p247 = scmp.lt.s32.totalorder %s246, 31
      %s248 = scalar_select %p247, %s246, 31
      %p249 = scmp.lt.s32.totalorder %s20, 0
      %s250 = scalar_select %p249, %s20, 0
      %s251 = sadd.s32 %s250, %s248
      %s252 = smul.addr %s251, 4
      %s253 = scalar_lea.vmem %s1, %s252
      %s254 = smul.u32 32, %s21
      %p255 = scmp.lt.s32.totalorder %s20, 0
      %s256 = scalar_select %p255, %s20, 0
      %s257 = scalar_lea.vmem %s2, %s256
      %s258 = smul.u32 2, %s19
      %p259 = scmp.lt.s32.totalorder %s258, 3
      %s260 = scalar_select %p259, %s258, 3
      %p261 = scmp.lt.s32.totalorder %s20, 0
      %s262 = scalar_select %p261, %s20, 0
      %s263 = sadd.s32 %s262, %s260
      %s264 = smul.addr %s263, 4
      %s265 = scalar_lea.vmem %s3, %s264
      %s266 = smul.u32 2, %s19
      %p268 = scmp.eq.s32.totalorder %s21, 0
      // Predicated region
      $region33: #{run.16} parent=31 // pred_check
        %p269 = pneg %p268
      $region34: #{run.16} parent=31 // pred_check_branch
        %271 = sbr.rel (%p269) target = $region36
      $region35: #{run.16} parent=31 // pred_region
        %272 = vst [vmem:[#allocation2] sm:$0xff] 0.0
        %273 = vst [vmem:[#allocation2 + $0x8] sm:$0xff] 0.0
      $region36: #{run.16} parent=31 // pred_fallthru
        _
      %v274 = vld [vmem:[#allocation2] sm:$0xff]
      %v275 = vld [vmem:[#allocation2 + $0x8] sm:$0xff]
      %v276 = vld [vmem:[%s243] sm:$0xff]
      %v277 = vld [vmem:[%s243 + $0x8] sm:$0xff]
      %v278 = vld [vmem:[%s253] sm:$0xf]
      %v279 = vld [vmem:[%s253 + $0x4] sm:$0xf]
      %v280 = vld [vmem:[%s253 + $0x8] sm:$0xf]
      %v281 = vld [vmem:[%s253 + $0xc] sm:$0xf]
      %v282 = vld [vmem:[%s253 + $0x10] sm:$0xf]
      %v283 = vld [vmem:[%s253 + $0x14] sm:$0xf]
      %v284 = vld [vmem:[%s253 + $0x18] sm:$0xf]
      %v285 = vld [vmem:[%s253 + $0x1c] sm:$0xf]
      %v286 = vld [vmem:[%s253 + $0x20] sm:$0xf]
      %v287 = vld [vmem:[%s253 + $0x24] sm:$0xf]
      %v288 = vld [vmem:[%s253 + $0x28] sm:$0xf]
      %v289 = vld [vmem:[%s253 + $0x2c] sm:$0xf]
      %v290 = vld [vmem:[%s253 + $0x30] sm:$0xf]
      %v291 = vld [vmem:[%s253 + $0x34] sm:$0xf]
      %v292 = vld [vmem:[%s253 + $0x38] sm:$0xf]
      %v293 = vld [vmem:[%s253 + $0x3c] sm:$0xf]
      %v294 = vld [vmem:[%s253 + $0x40] sm:$0xf]
      %v295 = vld [vmem:[%s253 + $0x44] sm:$0xf]
      %v296 = vld [vmem:[%s253 + $0x48] sm:$0xf]
      %v297 = vld [vmem:[%s253 + $0x4c] sm:$0xf]
      %v298 = vld [vmem:[%s253 + $0x50] sm:$0xf]
      %v299 = vld [vmem:[%s253 + $0x54] sm:$0xf]
      %v300 = vld [vmem:[%s253 + $0x58] sm:$0xf]
      %v301 = vld [vmem:[%s253 + $0x5c] sm:$0xf]
      %v302 = vld [vmem:[%s253 + $0x60] sm:$0xf]
      %v303 = vld [vmem:[%s253 + $0x64] sm:$0xf]
      %v304 = vld [vmem:[%s253 + $0x68] sm:$0xf]
      %v305 = vld [vmem:[%s253 + $0x6c] sm:$0xf]
      %v306 = vld [vmem:[%s253 + $0x70] sm:$0xf]
      %v307 = vld [vmem:[%s253 + $0x74] sm:$0xf]
      %v308 = vld [vmem:[%s253 + $0x78] sm:$0xf]
      %v309 = vld [vmem:[%s253 + $0x7c] sm:$0xf]
      %v312 = vunpack.c.l.b16 %v276
      %v313 = vunpack.c.h.b16 %v276
      %v314 = vunpack.c.l.b16 %v277
      %v315 = vunpack.c.h.b16 %v277
      %v316 = vpack.c.b16 %v314, %v312
      %v317 = vpack.c.b16 %v315, %v313
      %v352 = vunpack.c.l.b16 %v278
      %v353 = vunpack.c.l.b16 %v279
      %v354 = vunpack.c.l.b16 %v280
      %v355 = vunpack.c.l.b16 %v281
      %v356 = vunpack.c.l.b16 %v282
      %v357 = vunpack.c.l.b16 %v283
      %v358 = vunpack.c.l.b16 %v284
      %v359 = vunpack.c.l.b16 %v285
      %v360 = vunpack.c.l.b16 %v286
      %v361 = vunpack.c.l.b16 %v287
      %v362 = vunpack.c.l.b16 %v288
      %v363 = vunpack.c.l.b16 %v289
      %v364 = vunpack.c.l.b16 %v290
      %v365 = vunpack.c.l.b16 %v291
      %v366 = vunpack.c.l.b16 %v292
      %v367 = vunpack.c.l.b16 %v293
      %v368 = vunpack.c.l.b16 %v294
      %v369 = vunpack.c.l.b16 %v295
      %v370 = vunpack.c.l.b16 %v296
      %v371 = vunpack.c.l.b16 %v297
      %v372 = vunpack.c.l.b16 %v298
      %v373 = vunpack.c.l.b16 %v299
      %v374 = vunpack.c.l.b16 %v300
      %v375 = vunpack.c.l.b16 %v301
      %v376 = vunpack.c.l.b16 %v302
      %v377 = vunpack.c.l.b16 %v303
      %v378 = vunpack.c.l.b16 %v304
      %v379 = vunpack.c.l.b16 %v305
      %v380 = vunpack.c.l.b16 %v306
      %v381 = vunpack.c.l.b16 %v307
      %v382 = vunpack.c.l.b16 %v308
      %v383 = vunpack.c.l.b16 %v309
      %v384 = vpack.c.b16 %v353, %v352
      %v385 = vpack.c.b16 %v355, %v354
      %v386 = vpack.c.b16 %v357, %v356
      %v387 = vpack.c.b16 %v359, %v358
      %v388 = vpack.c.b16 %v361, %v360
      %v389 = vpack.c.b16 %v363, %v362
      %v390 = vpack.c.b16 %v365, %v364
      %v391 = vpack.c.b16 %v367, %v366
      %v392 = vpack.c.b16 %v369, %v368
      %v393 = vpack.c.b16 %v371, %v370
      %v394 = vpack.c.b16 %v373, %v372
      %v395 = vpack.c.b16 %v375, %v374
      %v396 = vpack.c.b16 %v377, %v376
      %v397 = vpack.c.b16 %v379, %v378
      %v398 = vpack.c.b16 %v381, %v380
      %v399 = vpack.c.b16 %v383, %v382
      %416 = vmatprep.subr.bf16.mxu0 0
      %417 = vmatpush1.bf16.msra.mxu0 %v384
      %418 = vmatprep.subr.bf16.mxu0 0
      %419 = vmatpush1.bf16.msra.mxu0 %v385
      %420 = vmatprep.subr.bf16.mxu0 0
      %421 = vmatpush1.bf16.msra.mxu0 %v386
      %422 = vmatprep.subr.bf16.mxu0 0
      %423 = vmatpush1.bf16.msra.mxu0 %v387
      %424 = vmatprep.subr.bf16.mxu0 0
      %425 = vmatpush1.bf16.msra.mxu0 %v388
      %426 = vmatprep.subr.bf16.mxu0 0
      %427 = vmatpush1.bf16.msra.mxu0 %v389
      %428 = vmatprep.subr.bf16.mxu0 0
      %429 = vmatpush1.bf16.msra.mxu0 %v390
      %430 = vmatprep.subr.bf16.mxu0 0
      %431 = vmatpush1.bf16.msra.mxu0 %v391
      %432 = vmatprep.subr.bf16.mxu0 0
      %433 = vmatpush1.bf16.msra.mxu0 %v392
      %434 = vmatprep.subr.bf16.mxu0 0
      %435 = vmatpush1.bf16.msra.mxu0 %v393
      %436 = vmatprep.subr.bf16.mxu0 0
      %437 = vmatpush1.bf16.msra.mxu0 %v394
      %438 = vmatprep.subr.bf16.mxu0 0
      %439 = vmatpush1.bf16.msra.mxu0 %v395
      %440 = vmatprep.subr.bf16.mxu0 0
      %441 = vmatpush1.bf16.msra.mxu0 %v396
      %442 = vmatprep.subr.bf16.mxu0 0
      %443 = vmatpush1.bf16.msra.mxu0 %v397
      %444 = vmatprep.subr.bf16.mxu0 0
      %445 = vmatpush1.bf16.msra.mxu0 %v398
      %446 = vmatprep.subr.bf16.mxu0 0
      %447 = vmatpush1.bf16.msra.mxu0 %v399
      %448 = vmatprep.mubr.bf16.mxu0 %v317
      %449 = vmatmul.mubr.bf16.gmra.mrb[0].mxu0 %v316
      %v450 = vpop.f32.mrb[0].mxu0
      %v451 = vadd.f32 0.0, %v450
      %v452 = vpop.f32.mrb[0].mxu0
      %v453 = vpop.f32.mrb[0].mxu0
      %v454 = vadd.f32 0.0, %v453
      %v455 = vpop.f32.mrb[0].mxu0
      %456 = vdwg.mxu0
      %v457 = vadd.f32 %v274, %v451
      %v458 = vadd.f32 %v275, %v454
      %459 = vst [vmem:[#allocation2] sm:$0xff] %v457
      %460 = vst [vmem:[#allocation2 + $0x8] sm:$0xff] %v458
      // Predicated region
      $region37: #{run.16} parent=31 // pred_check
        %p461 = pneg %p268
      $region38: #{run.16} parent=31 // pred_check_branch
        %463 = sbr.rel (%p461) target = $region40
      $region39: #{run.16} parent=31 // pred_region
        %v464 = vld [vmem:[#allocation2] sm:$0xff]
        %v465 = vld [vmem:[#allocation2 + $0x8] sm:$0xff]
        %v466 = vld [vmem:[%s257] sm:$0x1]
        %v468 = vlaneseq
        %v469 = vshrl.u32 %v468, 7
        %v470 = vsub.s32 0, %v469
        %v471 = vrot.slane %v466, %v470
        %v473 = vadd.f32 %v464, %v471
        %v474 = vadd.f32 %v465, %v471
        %v475 = vpack.c.bf16 %v474, %v473
        %v477 = vunpack.c.l.b16 %v475
        %v478 = vunpack.c.h.b16 %v475
        %v479 = vpack.c.b16 %v477, %v477
        %v480 = vpack.c.b16 %v478, %v478
        %483 = vst [vmem:[%s265] sm:$0xf] %v479
        %484 = vst [vmem:[%s265 + $0x4] sm:$0xf] %v480
      $region40: #{run.16} parent=31 // pred_fallthru
        _
      %s485 = smul.u32 2, %s19
      %p486 = scmp.lt.s32.totalorder %s485, 3
      %s487 = scalar_select %p486, %s485, 3
      %p488 = scmp.lt.s32.totalorder %s20, 0
      %s489 = scalar_select %p488, %s20, 0
      %s490 = sadd.s32 %s489, %s487
      %s491 = smul.addr %s490, 4
      %s492 = scalar_lea.vmem %s3, %s491
      // Predicated region
      $region41: #{run.16} parent=31 // pred_check
        %p493 = pneg %p135
      $region42: #{run.16} parent=31 // pred_check_branch
        %495 = sbr.rel (%p493) target = $region44
      $region43: #{run.16} parent=31 // pred_region
        %s496 = smul.u32 2, %s19
      $region44: #{run.16} parent=31 // pred_fallthru
        _
    $region32: #{run.16} parent=5 // pred_fallthru
      _
    %p497 = scmp.le.s32.totalorder 2, %s9
    // Predicated region
    $region45: #{run.16} parent=5 // pred_check
      %p498 = pneg %p497
    $region46: #{run.16} parent=5 // pred_check_branch
      %500 = sbr.rel (%p498) target = $region48
    $region47: #{run.16} parent=5 // pred_region
      %s501 = ssub.s32 %s9, 2
      // Predicated region
      $region49: #{run.16} parent=47 // pred_check
        %p502 = pneg %p141
      $region50: #{run.16} parent=47 // pred_check_branch
        %504 = sbr.rel (%p502) target = $region52
      $region51: #{run.16} parent=47 // pred_region
        %s505 = smul.u32 2, %s22
        %p506 = scmp.lt.s32.totalorder %s505, 3
        %s507 = scalar_select %p506, %s505, 3
        %p508 = scmp.lt.s32.totalorder %s23, 0
        %s509 = scalar_select %p508, %s23, 0
        %s510 = sadd.s32 %s509, %s507
        %s511 = smul.addr %s510, 4
        %s512 = scalar_lea.vmem %s3, %s511
      $region52: #{run.16} parent=47 // pred_fallthru
        _
    $region48: #{run.16} parent=5 // pred_fallthru
      _
  $region6: #{run.16} parent=0 // loop_footer
    %s13 = sadd.s32 1, %s9
  $region7: #{run.16} parent=0 // loop_footer_branch
    %8 = sbr.rel target = $region3
  $region8: #{run.16} parent=0 // loop_exit
    _

// kernel: run.19
$region0: #{run.19}
  #allocation0 [shape = 'u32[]', space=smem, size = 0x4, offset = 0x4, fixed_abs, tag = 'smem constant byte address 0x4 - core index']
  #allocation1 [shape = 'u32[144,128]{1,0:T(1,128)}', space=vmem, size = 0x12000, scoped, tag = 'internal scratch']
  #allocation2 [shape = 'f32[16,128]{1,0:T(8,128)}', space=vmem, size = 0x2000, scoped, tag = 'scratch operand']
  %s0 = inlined_call_operand.vmem [shape: bf16[32,384], index: 0, kind: input, shape index: {}]
  %s1 = inlined_call_operand.vmem [shape: bf16[384,128], index: 1, kind: input, shape index: {}]
  %s2 = inlined_call_operand.vmem [shape: bf16[32,128], index: 2, kind: output, shape index: {}]
  %s3 = sld [smem:[#allocation0]]
  $region49: #{run.19} parent=0
    _
  %s5 = ssub.s32 1, %s3
  %s6 = scalar_select 0, %s5, %s3
  loop: start=0, step=1, limit=4
  $region2: #{run.19} parent=0 // loop_pre_header
    _
  $region3: #{run.19} parent=0 // loop_header
    %s8 = sphi 0, %s12
    %p9 = scmp.ge.s32.totalorder %s8, 4
    %s15 = sphi 0, %s34
    %s16 = sphi 0, %s30
    %s17 = sphi 0, %s26
    %s18 = sphi 0, %s15
    %s19 = sphi 0, %s16
    %s20 = sphi 0, %s17
    %s21 = sphi 0, %s18
    %s22 = sphi 0, %s19
    %s23 = sphi 0, %s20
    %s39 = sphi 0, %s41
    %s42 = sphi 0, %s39
    %s43 = sphi 0, %s42
    %s59 = sphi 0, %s43
    %s67 = sphi 0, %s69
    %s70 = sphi 0, %s67
    %s71 = sphi 0, %s70
    %s87 = sphi 0, %s71
    %s95 = sphi 0, %s97
    %s98 = sphi 0, %s95
    %s99 = sphi 0, %s98
    %s115 = sphi 0, %s99
  $region4: #{run.19} parent=0 // loop_header_branch
    %11 = sbr.rel (%p9) target = $region8
  $region5: #{run.19} parent=0 // loop_body
    %s13 = ssub.s32 %s8, 1
    %s14 = ssub.s32 %s8, 2
    %s24 = sadd.s32 1, %s17
    %p25 = scmp.ge.s32.totalorder %s24, 1
    %s26 = scalar_select %p25, 0, %s24
    %s27 = sadd.s32 1, %s16
    %s28 = scalar_select %p25, %s27, %s16
    %p29 = scmp.ge.s32.totalorder %s28, 1
    %s30 = scalar_select %p29, 0, %s28
    %s31 = sadd.s32 1, %s15
    %s32 = scalar_select %p29, %s31, %s15
    %p33 = scmp.ge.s32.totalorder %s32, 2
    %s34 = scalar_select %p33, 0, %s32
    %s35 = ssub.s32 %s15, %s34
    %s36 = ssub.s32 %s17, %s26
    %s37 = sor.u32 %s35, %s36
    %p38 = scmp.eq.s32.totalorder %s37, 0
    %s40 = sadd.s32 %s39, 1
    %s41 = scalar_select %p38, %s39, %s40
    %p44 = pneg %p38
    %p45 = scmp.eq.s32.totalorder %s8, 1
    %p46 = por %p44, %p45
    %p47 = scmp.ne.s32.totalorder %s39, %s42
    %p48 = scmp.eq.s32.totalorder %s8, 0
    %p49 = por %p47, %p48
    %p50 = scmp.ne.s32.totalorder %s39, %s42
    %p51 = scmp.eq.s32.totalorder %s13, 1
    %p52 = por %p50, %p51
    %p53 = scmp.ne.s32.totalorder %s42, %s43
    %p54 = scmp.eq.s32.totalorder %s13, 0
    %p55 = por %p53, %p54
    %p56 = scmp.ne.s32.totalorder %s42, %s43
    %p57 = scmp.eq.s32.totalorder %s14, 1
    %p58 = por %p56, %p57
    %p60 = scmp.ne.s32.totalorder %s43, %s59
    %p61 = scmp.eq.s32.totalorder %s14, 0
    %p62 = por %p60, %p61
    %s63 = ssub.s32 %s17, %s26
    %s64 = ssub.s32 %s16, %s30
    %s65 = sor.u32 %s63, %s64
    %p66 = scmp.eq.s32.totalorder %s65, 0
    %s68 = sadd.s32 %s67, 1
    %s69 = scalar_select %p66, %s67, %s68
    %p72 = pneg %p66
    %p73 = scmp.eq.s32.totalorder %s8, 1
    %p74 = por %p72, %p73
    %p75 = scmp.ne.s32.totalorder %s67, %s70
    %p76 = scmp.eq.s32.totalorder %s8, 0
    %p77 = por %p75, %p76
    %p78 = scmp.ne.s32.totalorder %s67, %s70
    %p79 = scmp.eq.s32.totalorder %s13, 1
    %p80 = por %p78, %p79
    %p81 = scmp.ne.s32.totalorder %s70, %s71
    %p82 = scmp.eq.s32.totalorder %s13, 0
    %p83 = por %p81, %p82
    %p84 = scmp.ne.s32.totalorder %s70, %s71
    %p85 = scmp.eq.s32.totalorder %s14, 1
    %p86 = por %p84, %p85
    %p88 = scmp.ne.s32.totalorder %s71, %s87
    %p89 = scmp.eq.s32.totalorder %s14, 0
    %p90 = por %p88, %p89
    %s91 = ssub.s32 %s15, %s34
    %s92 = ssub.s32 %s16, %s30
    %s93 = sor.u32 %s91, %s92
    %p94 = scmp.eq.s32.totalorder %s93, 0
    %s96 = sadd.s32 %s95, 1
    %s97 = scalar_select %p94, %s95, %s96
    %p100 = pneg %p94
    %p101 = scmp.eq.s32.totalorder %s8, 1
    %p102 = por %p100, %p101
    %p103 = scmp.ne.s32.totalorder %s95, %s98
    %p104 = scmp.eq.s32.totalorder %s8, 0
    %p105 = por %p103, %p104
    %p106 = scmp.ne.s32.totalorder %s95, %s98
    %p107 = scmp.eq.s32.totalorder %s13, 1
    %p108 = por %p106, %p107
    %p109 = scmp.ne.s32.totalorder %s98, %s99
    %p110 = scmp.eq.s32.totalorder %s13, 0
    %p111 = por %p109, %p110
    %p112 = scmp.ne.s32.totalorder %s98, %s99
    %p113 = scmp.eq.s32.totalorder %s14, 1
    %p114 = por %p112, %p113
    %p116 = scmp.ne.s32.totalorder %s99, %s115
    %p117 = scmp.eq.s32.totalorder %s14, 0
    %p118 = por %p116, %p117
    %p119 = scmp.le.s32.totalorder 1, %s8
    %p120 = scmp.lt.s32.totalorder %s8, 3
    %p121 = pnand %p119, %p120
    %p122 = pneg %p121
    // Predicated region
    $region9: #{run.19} parent=5 // pred_check
      _
    $region10: #{run.19} parent=5 // pred_check_branch
      %124 = sbr.rel (%p121) target = $region12
    $region11: #{run.19} parent=5 // pred_region
      %s125 = ssub.s32 %s8, 1
      // Predicated region
      $region13: #{run.19} parent=11 // pred_check
        %p126 = pneg %p83
      $region14: #{run.19} parent=11 // pred_check_branch
        %128 = sbr.rel (%p126) target = $region16
      $region15: #{run.19} parent=11 // pred_region
        %s129 = smul.u32 48, %s20
        %p130 = scmp.lt.s32.totalorder %s129, 47
        %s131 = scalar_select %p130, %s129, 47
        %p132 = scmp.lt.s32.totalorder %s19, 0
        %s133 = scalar_select %p132, %s19, 0
        %s134 = sadd.s32 %s133, %s131
        %s135 = smul.addr %s134, 4
        %s136 = scalar_lea.vmem %s1, %s135
        %s137 = smul.u32 48, %s20
      $region16: #{run.19} parent=11 // pred_fallthru
        _
    $region12: #{run.19} parent=5 // pred_fallthru
      _
    %p138 = scmp.lt.s32.totalorder %s8, 2
    // Predicated region
    $region17: #{run.19} parent=5 // pred_check
      %p139 = pneg %p138
    $region18: #{run.19} parent=5 // pred_check_branch
      %141 = sbr.rel (%p139) target = $region20
    $region19: #{run.19} parent=5 // pred_region
      // Predicated region
      $region21: #{run.19} parent=19 // pred_check
        %p142 = pneg %p49
      $region22: #{run.19} parent=19 // pred_check_branch
        %144 = sbr.rel (%p142) target = $region24
      $region23: #{run.19} parent=19 // pred_region
        %s145 = smul.u32 2, %s15
        %s146 = smul.u32 3, %s17
        %p147 = scmp.lt.s32.totalorder %s145, 3
        %s148 = scalar_select %p147, %s145, 3
        %p149 = scmp.lt.s32.totalorder %s146, 2
        %s150 = scalar_select %p149, %s146, 2
        %s151 = smul.addr %s148, 3
        %s152 = sadd.s32 %s150, %s151
        %s153 = smul.addr %s152, 4
        %s154 = scalar_lea.vmem %s0, %s153
        %s155 = smul.u32 2, %s15
        %s156 = smul.u32 3, %s17
      $region24: #{run.19} parent=19 // pred_fallthru
        _
    $region20: #{run.19} parent=5 // pred_fallthru
      _
    %p157 = scmp.le.s32.totalorder 1, %s8
    %p158 = scmp.lt.s32.totalorder %s8, 3
    %p159 = pnand %p157, %p158
    %p160 = pneg %p159
    // Predicated region
    $region25: #{run.19} parent=5 // pred_check
      _
    $region26: #{run.19} parent=5 // pred_check_branch
      %162 = sbr.rel (%p159) target = $region28
    $region27: #{run.19} parent=5 // pred_region
      %s163 = ssub.s32 %s8, 1
      %s164 = smul.u32 2, %s18
      %s165 = smul.u32 3, %s20
      %p166 = scmp.lt.s32.totalorder %s164, 3
      %s167 = scalar_select %p166, %s164, 3
      %p168 = scmp.lt.s32.totalorder %s165, 2
      %s169 = scalar_select %p168, %s165, 2
      %s170 = smul.addr %s167, 3
      %s171 = sadd.s32 %s169, %s170
      %s172 = smul.addr %s171, 4
      %s173 = scalar_lea.vmem %s0, %s172
      %p174 = pneg %p55
      %p175 = pneg %p52
      %s176 = smul.u32 48, %s20
      %p177 = scmp.lt.s32.totalorder %s176, 47
      %s178 = scalar_select %p177, %s176, 47
      %p179 = scmp.lt.s32.totalorder %s19, 0
      %s180 = scalar_select %p179, %s19, 0
      %s181 = sadd.s32 %s180, %s178
      %s182 = smul.addr %s181, 4
      %s183 = scalar_lea.vmem %s1, %s182
      %p184 = pneg %p83
      %p185 = pneg %p80
      %p186 = pneg %p111
      %p187 = pneg %p108
      %s188 = smul.u32 2, %s18
      %p189 = scmp.lt.s32.totalorder %s188, 3
      %s190 = scalar_select %p189, %s188, 3
      %p191 = scmp.lt.s32.totalorder %s19, 0
      %s192 = scalar_select %p191, %s19, 0
      %s193 = sadd.s32 %s192, %s190
      %s194 = smul.addr %s193, 4
      %s195 = scalar_lea.vmem %s2, %s194
      %s196 = smul.u32 2, %s18
      %s197 = smul.u32 3, %s20
      %p198 = scmp.lt.s32.totalorder %s196, 3
      %s199 = scalar_select %p198, %s196, 3
      %p200 = scmp.lt.s32.totalorder %s197, 2
      %s201 = scalar_select %p200, %s197, 2
      %s202 = smul.addr %s199, 3
      %s203 = sadd.s32 %s201, %s202
      %s204 = smul.addr %s203, 4
      %s205 = scalar_lea.vmem %s0, %s204
      %s206 = smul.u32 2, %s18
      %s207 = smul.u32 3, %s20
      %s208 = smul.u32 48, %s20
      %p209 = scmp.lt.s32.totalorder %s208, 47
      %s210 = scalar_select %p209, %s208, 47
      %p211 = scmp.lt.s32.totalorder %s19, 0
      %s212 = scalar_select %p211, %s19, 0
      %s213 = sadd.s32 %s212, %s210
      %s214 = smul.addr %s213, 4
      %s215 = scalar_lea.vmem %s1, %s214
      %s216 = smul.u32 48, %s20
      %s217 = smul.u32 2, %s18
      %p218 = scmp.lt.s32.totalorder %s217, 3
      %s219 = scalar_select %p218, %s217, 3
      %p220 = scmp.lt.s32.totalorder %s19, 0
      %s221 = scalar_select %p220, %s19, 0
      %s222 = sadd.s32 %s221, %s219
      %s223 = smul.addr %s222, 4
      %s224 = scalar_lea.vmem %s2, %s223
      %s225 = smul.u32 2, %s18
      %p227 = scmp.eq.s32.totalorder %s20, 0
      // Predicated region
      $region29: #{run.19} parent=27 // pred_check
        %p228 = pneg %p227
      $region30: #{run.19} parent=27 // pred_check_branch
        %230 = sbr.rel (%p228) target = $region32
      $region31: #{run.19} parent=27 // pred_region
        %231 = vst [vmem:[#allocation2] sm:$0xff] 0.0
        %232 = vst [vmem:[#allocation2 + $0x8] sm:$0xff] 0.0
      $region32: #{run.19} parent=27 // pred_fallthru
        _
      %v233 = vld [vmem:[#allocation2] sm:$0xff]
      %v234 = vld [vmem:[#allocation2 + $0x8] sm:$0xff]
      %v235 = vld [vmem:[%s205] sm:$0xff]
      %v236 = vld [vmem:[%s205 + $0x8] sm:$0xf]
      %v237 = vld [vmem:[%s205 + $0xc] sm:$0xff]
      %v238 = vld [vmem:[%s205 + $0x14] sm:$0xf]
      %v239 = vld [vmem:[%s215] sm:$0xf]
      %v240 = vld [vmem:[%s215 + $0x4] sm:$0xf]
      %v241 = vld [vmem:[%s215 + $0x8] sm:$0xf]
      %v242 = vld [vmem:[%s215 + $0xc] sm:$0xf]
      %v243 = vld [vmem:[%s215 + $0x10] sm:$0xf]
      %v244 = vld [vmem:[%s215 + $0x14] sm:$0xf]
      %v245 = vld [vmem:[%s215 + $0x18] sm:$0xf]
      %v246 = vld [vmem:[%s215 + $0x1c] sm:$0xf]
      %v247 = vld [vmem:[%s215 + $0x20] sm:$0xf]
      %v248 = vld [vmem:[%s215 + $0x24] sm:$0xf]
      %v249 = vld [vmem:[%s215 + $0x28] sm:$0xf]
      %v250 = vld [vmem:[%s215 + $0x2c] sm:$0xf]
      %v251 = vld [vmem:[%s215 + $0x30] sm:$0xf]
      %v252 = vld [vmem:[%s215 + $0x34] sm:$0xf]
      %v253 = vld [vmem:[%s215 + $0x38] sm:$0xf]
      %v254 = vld [vmem:[%s215 + $0x3c] sm:$0xf]
      %v255 = vld [vmem:[%s215 + $0x40] sm:$0xf]
      %v256 = vld [vmem:[%s215 + $0x44] sm:$0xf]
      %v257 = vld [vmem:[%s215 + $0x48] sm:$0xf]
      %v258 = vld [vmem:[%s215 + $0x4c] sm:$0xf]
      %v259 = vld [vmem:[%s215 + $0x50] sm:$0xf]
      %v260 = vld [vmem:[%s215 + $0x54] sm:$0xf]
      %v261 = vld [vmem:[%s215 + $0x58] sm:$0xf]
      %v262 = vld [vmem:[%s215 + $0x5c] sm:$0xf]
      %v263 = vld [vmem:[%s215 + $0x60] sm:$0xf]
      %v264 = vld [vmem:[%s215 + $0x64] sm:$0xf]
      %v265 = vld [vmem:[%s215 + $0x68] sm:$0xf]
      %v266 = vld [vmem:[%s215 + $0x6c] sm:$0xf]
      %v267 = vld [vmem:[%s215 + $0x70] sm:$0xf]
      %v268 = vld [vmem:[%s215 + $0x74] sm:$0xf]
      %v269 = vld [vmem:[%s215 + $0x78] sm:$0xf]
      %v270 = vld [vmem:[%s215 + $0x7c] sm:$0xf]
      %v271 = vld [vmem:[%s215 + $0x80] sm:$0xf]
      %v272 = vld [vmem:[%s215 + $0x84] sm:$0xf]
      %v273 = vld [vmem:[%s215 + $0x88] sm:$0xf]
      %v274 = vld [vmem:[%s215 + $0x8c] sm:$0xf]
      %v275 = vld [vmem:[%s215 + $0x90] sm:$0xf]
      %v276 = vld [vmem:[%s215 + $0x94] sm:$0xf]
      %v277 = vld [vmem:[%s215 + $0x98] sm:$0xf]
      %v278 = vld [vmem:[%s215 + $0x9c] sm:$0xf]
      %v279 = vld [vmem:[%s215 + $0xa0] sm:$0xf]
      %v280 = vld [vmem:[%s215 + $0xa4] sm:$0xf]
      %v281 = vld [vmem:[%s215 + $0xa8] sm:$0xf]
      %v282 = vld [vmem:[%s215 + $0xac] sm:$0xf]
      %v283 = vld [vmem:[%s215 + $0xb0] sm:$0xf]
      %v284 = vld [vmem:[%s215 + $0xb4] sm:$0xf]
      %v285 = vld [vmem:[%s215 + $0xb8] sm:$0xf]
      %v286 = vld [vmem:[%s215 + $0xbc] sm:$0xf]
      %v291 = vunpack.c.l.b16 %v235
      %v292 = vunpack.c.h.b16 %v235
      %v293 = vunpack.c.l.b16 %v236
      %v294 = vunpack.c.l.b16 %v237
      %v295 = vunpack.c.h.b16 %v237
      %v296 = vunpack.c.l.b16 %v238
      %v297 = vpack.c.b16 %v294, %v291
      %v298 = vpack.c.b16 %v295, %v292
      %v299 = vpack.c.b16 %v296, %v293
      %v351 = vunpack.c.l.b16 %v239
      %v352 = vunpack.c.l.b16 %v240
      %v353 = vunpack.c.l.b16 %v241
      %v354 = vunpack.c.l.b16 %v242
      %v355 = vunpack.c.l.b16 %v243
      %v356 = vunpack.c.l.b16 %v244
      %v357 = vunpack.c.l.b16 %v245
      %v358 = vunpack.c.l.b16 %v246
      %v359 = vunpack.c.l.b16 %v247
      %v360 = vunpack.c.l.b16 %v248
      %v361 = vunpack.c.l.b16 %v249
      %v362 = vunpack.c.l.b16 %v250
      %v363 = vunpack.c.l.b16 %v251
      %v364 = vunpack.c.l.b16 %v252
      %v365 = vunpack.c.l.b16 %v253
      %v366 = vunpack.c.l.b16 %v254
      %v367 = vunpack.c.l.b16 %v255
      %v368 = vunpack.c.l.b16 %v256
      %v369 = vunpack.c.l.b16 %v257
      %v370 = vunpack.c.l.b16 %v258
      %v371 = vunpack.c.l.b16 %v259
      %v372 = vunpack.c.l.b16 %v260
      %v373 = vunpack.c.l.b16 %v261
      %v374 = vunpack.c.l.b16 %v262
      %v375 = vunpack.c.l.b16 %v263
      %v376 = vunpack.c.l.b16 %v264
      %v377 = vunpack.c.l.b16 %v265
      %v378 = vunpack.c.l.b16 %v266
      %v379 = vunpack.c.l.b16 %v267
      %v380 = vunpack.c.l.b16 %v268
      %v381 = vunpack.c.l.b16 %v269
      %v382 = vunpack.c.l.b16 %v270
      %v383 = vunpack.c.l.b16 %v271
      %v384 = vunpack.c.l.b16 %v272
      %v385 = vunpack.c.l.b16 %v273
      %v386 = vunpack.c.l.b16 %v274
      %v387 = vunpack.c.l.b16 %v275
      %v388 = vunpack.c.l.b16 %v276
      %v389 = vunpack.c.l.b16 %v277
      %v390 = vunpack.c.l.b16 %v278
      %v391 = vunpack.c.l.b16 %v279
      %v392 = vunpack.c.l.b16 %v280
      %v393 = vunpack.c.l.b16 %v281
      %v394 = vunpack.c.l.b16 %v282
      %v395 = vunpack.c.l.b16 %v283
      %v396 = vunpack.c.l.b16 %v284
      %v397 = vunpack.c.l.b16 %v285
      %v398 = vunpack.c.l.b16 %v286
      %v399 = vpack.c.b16 %v352, %v351
      %v400 = vpack.c.b16 %v354, %v353
      %v401 = vpack.c.b16 %v356, %v355
      %v402 = vpack.c.b16 %v358, %v357
      %v403 = vpack.c.b16 %v360, %v359
      %v404 = vpack.c.b16 %v362, %v361
      %v405 = vpack.c.b16 %v364, %v363
      %v406 = vpack.c.b16 %v366, %v365
      %v407 = vpack.c.b16 %v368, %v367
      %v408 = vpack.c.b16 %v370, %v369
      %v409 = vpack.c.b16 %v372, %v371
      %v410 = vpack.c.b16 %v374, %v373
      %v411 = vpack.c.b16 %v376, %v375
      %v412 = vpack.c.b16 %v378, %v377
      %v413 = vpack.c.b16 %v380, %v379
      %v414 = vpack.c.b16 %v382, %v381
      %v415 = vpack.c.b16 %v384, %v383
      %v416 = vpack.c.b16 %v386, %v385
      %v417 = vpack.c.b16 %v388, %v387
      %v418 = vpack.c.b16 %v390, %v389
      %v419 = vpack.c.b16 %v392, %v391
      %v420 = vpack.c.b16 %v394, %v393
      %v421 = vpack.c.b16 %v396, %v395
      %v422 = vpack.c.b16 %v398, %v397
      %447 = vmatprep.subr.bf16.mxu0 0
      %448 = vmatpush1.bf16.msra.mxu0 %v399
      %449 = vmatprep.subr.bf16.mxu0 0
      %450 = vmatpush1.bf16.msra.mxu0 %v400
      %451 = vmatprep.subr.bf16.mxu0 0
      %452 = vmatpush1.bf16.msra.mxu0 %v401
      %453 = vmatprep.subr.bf16.mxu0 0
      %454 = vmatpush1.bf16.msra.mxu0 %v402
      %455 = vmatprep.subr.bf16.mxu0 0
      %456 = vmatpush1.bf16.msra.mxu0 %v403
      %457 = vmatprep.subr.bf16.mxu0 0
      %458 = vmatpush1.bf16.msra.mxu0 %v404
      %459 = vmatprep.subr.bf16.mxu0 0
      %460 = vmatpush1.bf16.msra.mxu0 %v405
      %461 = vmatprep.subr.bf16.mxu0 0
      %462 = vmatpush1.bf16.msra.mxu0 %v406
      %463 = vmatprep.subr.bf16.mxu0 0
      %464 = vmatpush1.bf16.msra.mxu0 %v407
      %465 = vmatprep.subr.bf16.mxu0 0
      %466 = vmatpush1.bf16.msra.mxu0 %v408
      %467 = vmatprep.subr.bf16.mxu0 0
      %468 = vmatpush1.bf16.msra.mxu0 %v409
      %469 = vmatprep.subr.bf16.mxu0 0
      %470 = vmatpush1.bf16.msra.mxu0 %v410
      %471 = vmatprep.subr.bf16.mxu0 0
      %472 = vmatpush1.bf16.msra.mxu0 %v411
      %473 = vmatprep.subr.bf16.mxu0 0
      %474 = vmatpush1.bf16.msra.mxu0 %v412
      %475 = vmatprep.subr.bf16.mxu0 0
      %476 = vmatpush1.bf16.msra.mxu0 %v413
      %477 = vmatprep.subr.bf16.mxu0 0
      %478 = vmatpush1.bf16.msra.mxu0 %v414
      %479 = vmatprep.mubr.bf16.mxu0 %v298
      %480 = vmatmul.mubr.bf16.gmra.mrb[0].mxu0 %v297
      %v481 = vpop.f32.mrb[0].mxu0
      %v482 = vadd.f32 0.0, %v481
      %v483 = vpop.f32.mrb[0].mxu0
      %v484 = vpop.f32.mrb[0].mxu0
      %v485 = vadd.f32 0.0, %v484
      %v486 = vpop.f32.mrb[0].mxu0
      %487 = vdwg.mxu0
      %488 = vmatprep.subr.bf16.mxu0 0
      %489 = vmatpush1.bf16.msra.mxu0 %v415
      %490 = vmatprep.subr.bf16.mxu0 0
      %491 = vmatpush1.bf16.msra.mxu0 %v416
      %492 = vmatprep.subr.bf16.mxu0 0
      %493 = vmatpush1.bf16.msra.mxu0 %v417
      %494 = vmatprep.subr.bf16.mxu0 0
      %495 = vmatpush1.bf16.msra.mxu0 %v418
      %496 = vmatprep.subr.bf16.mxu0 0
      %497 = vmatpush1.bf16.msra.mxu0 %v419
      %498 = vmatprep.subr.bf16.mxu0 0
      %499 = vmatpush1.bf16.msra.mxu0 %v420
      %500 = vmatprep.subr.bf16.mxu0 0
      %501 = vmatpush1.bf16.msra.mxu0 %v421
      %502 = vmatprep.subr.bf16.mxu0 0
      %503 = vmatpush1.bf16.msra.mxu0 %v422
      %504 = vmatprep.subr.bf16.mxu0 0
      %505 = vmatpush1.bf16.msra.mxu0 0
      %506 = vmatprep.subr.bf16.mxu0 0
      %507 = vmatpush1.bf16.msra.mxu0 0
      %508 = vmatprep.subr.bf16.mxu0 0
      %509 = vmatpush1.bf16.msra.mxu0 0
      %510 = vmatprep.subr.bf16.mxu0 0
      %511 = vmatpush1.bf16.msra.mxu0 0
      %512 = vmatprep.subr.bf16.mxu0 0
      %513 = vmatpush1.bf16.msra.mxu0 0
      %514 = vmatprep.subr.bf16.mxu0 0
      %515 = vmatpush1.bf16.msra.mxu0 0
      %516 = vmatprep.subr.bf16.mxu0 0
      %517 = vmatpush1.bf16.msra.mxu0 0
      %518 = vmatprep.subr.bf16.mxu0 0
      %519 = vmatpush1.bf16.msra.mxu0 0
      %520 = vmatprep.mubr.bf16.mxu0 0
      %521 = vmatmul.mubr.bf16.gmra.mrb[0].mxu0 %v299
      %v522 = vpop.f32.mrb[0].mxu0
      %v523 = vadd.f32 %v482, %v522
      %v524 = vpop.f32.mrb[0].mxu0
      %v525 = vpop.f32.mrb[0].mxu0
      %v526 = vadd.f32 %v485, %v525
      %v527 = vpop.f32.mrb[0].mxu0
      %528 = vdwg.mxu0
      %v529 = vadd.f32 %v233, %v523
      %v530 = vadd.f32 %v234, %v526
      %531 = vst [vmem:[#allocation2] sm:$0xff] %v529
      %532 = vst [vmem:[#allocation2 + $0x8] sm:$0xff] %v530
      // Predicated region
      $region33: #{run.19} parent=27 // pred_check
        %p533 = pneg %p227
      $region34: #{run.19} parent=27 // pred_check_branch
        %535 = sbr.rel (%p533) target = $region36
      $region35: #{run.19} parent=27 // pred_region
        %v536 = vld [vmem:[#allocation2] sm:$0xff]
        %v537 = vld [vmem:[#allocation2 + $0x8] sm:$0xff]
        %v538 = vpack.c.bf16 %v537, %v536
        %v540 = vunpack.c.l.b16 %v538
        %v541 = vunpack.c.h.b16 %v538
        %v542 = vpack.c.b16 %v540, %v540
        %v543 = vpack.c.b16 %v541, %v541
        %546 = vst [vmem:[%s224] sm:$0xf] %v542
        %547 = vst [vmem:[%s224 + $0x4] sm:$0xf] %v543
      $region36: #{run.19} parent=27 // pred_fallthru
        _
      %s548 = smul.u32 2, %s18
      %p549 = scmp.lt.s32.totalorder %s548, 3
      %s550 = scalar_select %p549, %s548, 3
      %p551 = scmp.lt.s32.totalorder %s19, 0
      %s552 = scalar_select %p551, %s19, 0
      %s553 = sadd.s32 %s552, %s550
      %s554 = smul.addr %s553, 4
      %s555 = scalar_lea.vmem %s2, %s554
      // Predicated region
      $region37: #{run.19} parent=27 // pred_check
        %p556 = pneg %p108
      $region38: #{run.19} parent=27 // pred_check_branch
        %558 = sbr.rel (%p556) target = $region40
      $region39: #{run.19} parent=27 // pred_region
        %s559 = smul.u32 2, %s18
      $region40: #{run.19} parent=27 // pred_fallthru
        _
    $region28: #{run.19} parent=5 // pred_fallthru
      _
    %p560 = scmp.le.s32.totalorder 2, %s8
    // Predicated region
    $region41: #{run.19} parent=5 // pred_check
      %p561 = pneg %p560
    $region42: #{run.19} parent=5 // pred_check_branch
      %563 = sbr.rel (%p561) target = $region44
    $region43: #{run.19} parent=5 // pred_region
      %s564 = ssub.s32 %s8, 2
      // Predicated region
      $region45: #{run.19} parent=43 // pred_check
        %p565 = pneg %p114
      $region46: #{run.19} parent=43 // pred_check_branch
        %567 = sbr.rel (%p565) target = $region48
      $region47: #{run.19} parent=43 // pred_region
        %s568 = smul.u32 2, %s21
        %p569 = scmp.lt.s32.totalorder %s568, 3
        %s570 = scalar_select %p569, %s568, 3
        %p571 = scmp.lt.s32.totalorder %s22, 0
        %s572 = scalar_select %p571, %s22, 0
        %s573 = sadd.s32 %s572, %s570
        %s574 = smul.addr %s573, 4
        %s575 = scalar_lea.vmem %s2, %s574
      $region48: #{run.19} parent=43 // pred_fallthru
        _
    $region44: #{run.19} parent=5 // pred_fallthru
      _
  $region6: #{run.19} parent=0 // loop_footer
    %s12 = sadd.s32 1, %s8
  $region7: #{run.19} parent=0 // loop_footer_branch
    %7 = sbr.rel target = $region3
  $region8: #{run.19} parent=0 // loop_exit
    _

// kernel: run.20
$region0: #{run.20}
  #allocation0 [shape = 'u32[]', space=smem, size = 0x4, offset = 0x4, fixed_abs, tag = 'smem constant byte address 0x4 - core index']
  #allocation1 [shape = 'u32[144,128]{1,0:T(1,128)}', space=vmem, size = 0x12000, scoped, tag = 'internal scratch']
  %s0 = inlined_call_operand.vmem [shape: bf16[2,16,96], index: 0, kind: input, shape index: {}, may-alias: {0,1}]
  %s1 = inlined_call_operand.vmem [shape: bf16[2,16,96], index: 1, kind: input, shape index: {}, may-alias: {0,1}]
  %s2 = inlined_call_operand.vmem [shape: bf16[2,16,32], index: 2, kind: output, shape index: {}]
  %s3 = sld [smem:[#allocation0]]
  $region41: #{run.20} parent=0
    _
  %s5 = ssub.s32 1, %s3
  %s6 = scalar_select 0, %s5, %s3
  loop: start=0, step=1, limit=4
  $region2: #{run.20} parent=0 // loop_pre_header
    _
  $region3: #{run.20} parent=0 // loop_header
    %s8 = sphi 0, %s12
    %p9 = scmp.ge.s32.totalorder %s8, 4
    %s15 = sphi 0, %s27
    %s16 = sphi 0, %s23
    %s17 = sphi 0, %s15
    %s18 = sphi 0, %s16
    %s19 = sphi 0, %s17
    %s20 = sphi 0, %s18
    %s32 = sphi 0, %s34
    %s35 = sphi 0, %s32
    %s36 = sphi 0, %s35
    %s52 = sphi 0, %s36
    %s58 = sphi 0, %s60
    %s61 = sphi 0, %s58
    %s62 = sphi 0, %s61
    %s78 = sphi 0, %s62
    %s86 = sphi 0, %s88
    %s89 = sphi 0, %s86
    %s90 = sphi 0, %s89
    %s106 = sphi 0, %s90
  $region4: #{run.20} parent=0 // loop_header_branch
    %11 = sbr.rel (%p9) target = $region8
  $region5: #{run.20} parent=0 // loop_body
    %s13 = ssub.s32 %s8, 1
    %s14 = ssub.s32 %s8, 2
    %s21 = sadd.s32 1, %s16
    %p22 = scmp.ge.s32.totalorder %s21, 1
    %s23 = scalar_select %p22, 0, %s21
    %s24 = sadd.s32 1, %s15
    %s25 = scalar_select %p22, %s24, %s15
    %p26 = scmp.ge.s32.totalorder %s25, 2
    %s27 = scalar_select %p26, 0, %s25
    %s28 = ssub.s32 %s15, %s27
    %s29 = ssub.s32 %s16, %s23
    %s30 = sor.u32 %s28, %s29
    %p31 = scmp.eq.s32.totalorder %s30, 0
    %s33 = sadd.s32 %s32, 1
    %s34 = scalar_select %p31, %s32, %s33
    %p37 = pneg %p31
    %p38 = scmp.eq.s32.totalorder %s8, 1
    %p39 = por %p37, %p38
    %p40 = scmp.ne.s32.totalorder %s32, %s35
    %p41 = scmp.eq.s32.totalorder %s8, 0
    %p42 = por %p40, %p41
    %p43 = scmp.ne.s32.totalorder %s32, %s35
    %p44 = scmp.eq.s32.totalorder %s13, 1
    %p45 = por %p43, %p44
    %p46 = scmp.ne.s32.totalorder %s35, %s36
    %p47 = scmp.eq.s32.totalorder %s13, 0
    %p48 = por %p46, %p47
    %p49 = scmp.ne.s32.totalorder %s35, %s36
    %p50 = scmp.eq.s32.totalorder %s14, 1
    %p51 = por %p49, %p50
    %p53 = scmp.ne.s32.totalorder %s36, %s52
    %p54 = scmp.eq.s32.totalorder %s14, 0
    %p55 = por %p53, %p54
    %s56 = ssub.s32 %s15, %s27
    %p57 = scmp.eq.s32.totalorder %s56, 0
    %s59 = sadd.s32 %s58, 1
    %s60 = scalar_select %p57, %s58, %s59
    %p63 = pneg %p57
    %p64 = scmp.eq.s32.totalorder %s8, 1
    %p65 = por %p63, %p64
    %p66 = scmp.ne.s32.totalorder %s58, %s61
    %p67 = scmp.eq.s32.totalorder %s8, 0
    %p68 = por %p66, %p67
    %p69 = scmp.ne.s32.totalorder %s58, %s61
    %p70 = scmp.eq.s32.totalorder %s13, 1
    %p71 = por %p69, %p70
    %p72 = scmp.ne.s32.totalorder %s61, %s62
    %p73 = scmp.eq.s32.totalorder %s13, 0
    %p74 = por %p72, %p73
    %p75 = scmp.ne.s32.totalorder %s61, %s62
    %p76 = scmp.eq.s32.totalorder %s14, 1
    %p77 = por %p75, %p76
    %p79 = scmp.ne.s32.totalorder %s62, %s78
    %p80 = scmp.eq.s32.totalorder %s14, 0
    %p81 = por %p79, %p80
    %s82 = ssub.s32 %s15, %s27
    %s83 = ssub.s32 %s16, %s23
    %s84 = sor.u32 %s82, %s83
    %p85 = scmp.eq.s32.totalorder %s84, 0
    %s87 = sadd.s32 %s86, 1
    %s88 = scalar_select %p85, %s86, %s87
    %p91 = pneg %p85
    %p92 = scmp.eq.s32.totalorder %s8, 1
    %p93 = por %p91, %p92
    %p94 = scmp.ne.s32.totalorder %s86, %s89
    %p95 = scmp.eq.s32.totalorder %s8, 0
    %p96 = por %p94, %p95
    %p97 = scmp.ne.s32.totalorder %s86, %s89
    %p98 = scmp.eq.s32.totalorder %s13, 1
    %p99 = por %p97, %p98
    %p100 = scmp.ne.s32.totalorder %s89, %s90
    %p101 = scmp.eq.s32.totalorder %s13, 0
    %p102 = por %p100, %p101
    %p103 = scmp.ne.s32.totalorder %s89, %s90
    %p104 = scmp.eq.s32.totalorder %s14, 1
    %p105 = por %p103, %p104
    %p107 = scmp.ne.s32.totalorder %s90, %s106
    %p108 = scmp.eq.s32.totalorder %s14, 0
    %p109 = por %p107, %p108
    %p110 = scmp.le.s32.totalorder 1, %s8
    %p111 = scmp.lt.s32.totalorder %s8, 3
    %p112 = pnand %p110, %p111
    %p113 = pneg %p112
    // Predicated region
    $region9: #{run.20} parent=5 // pred_check
      _
    $region10: #{run.20} parent=5 // pred_check_branch
      %115 = sbr.rel (%p112) target = $region12
    $region11: #{run.20} parent=5 // pred_region
      %s116 = ssub.s32 %s8, 1
    $region12: #{run.20} parent=5 // pred_fallthru
      _
    %p117 = scmp.lt.s32.totalorder %s8, 2
    // Predicated region
    $region13: #{run.20} parent=5 // pred_check
      %p118 = pneg %p117
    $region14: #{run.20} parent=5 // pred_check_branch
      %120 = sbr.rel (%p118) target = $region16
    $region15: #{run.20} parent=5 // pred_region
      // Predicated region
      $region17: #{run.20} parent=15 // pred_check
        %p121 = pneg %p42
      $region18: #{run.20} parent=15 // pred_check_branch
        %123 = sbr.rel (%p121) target = $region20
      $region19: #{run.20} parent=15 // pred_region
        %s124 = smul.u32 2, %s16
        %p125 = scmp.lt.s32.totalorder %s15, 1
        %s126 = scalar_select %p125, %s15, 1
        %p127 = scmp.lt.s32.totalorder %s124, 1
        %s128 = scalar_select %p127, %s124, 1
        %s129 = smul.addr %s126, 2
        %s130 = sadd.s32 %s128, %s129
        %s131 = smul.addr %s130, 4
        %s132 = scalar_lea.vmem %s0, %s131
        %s133 = smul.u32 2, %s16
      $region20: #{run.20} parent=15 // pred_fallthru
        _
      // Predicated region
      $region21: #{run.20} parent=15 // pred_check
        %p134 = pneg %p68
      $region22: #{run.20} parent=15 // pred_check_branch
        %136 = sbr.rel (%p134) target = $region24
      $region23: #{run.20} parent=15 // pred_region
        %p137 = scmp.lt.s32.totalorder %s15, 1
        %s138 = scalar_select %p137, %s15, 1
        %s139 = smul.addr %s138, 2
        %s140 = smul.addr %s139, 4
        %s141 = scalar_lea.vmem %s1, %s140
      $region24: #{run.20} parent=15 // pred_fallthru
        _
    $region16: #{run.20} parent=5 // pred_fallthru
      _
    %p142 = scmp.le.s32.totalorder 1, %s8
    %p143 = scmp.lt.s32.totalorder %s8, 3
    %p144 = pnand %p142, %p143
    %p145 = pneg %p144
    // Predicated region
    $region25: #{run.20} parent=5 // pred_check
      _
    $region26: #{run.20} parent=5 // pred_check_branch
      %147 = sbr.rel (%p144) target = $region28
    $region27: #{run.20} parent=5 // pred_region
      %s148 = ssub.s32 %s8, 1
      %s149 = smul.u32 2, %s18
      %p150 = scmp.lt.s32.totalorder %s17, 1
      %s151 = scalar_select %p150, %s17, 1
      %p152 = scmp.lt.s32.totalorder %s149, 1
      %s153 = scalar_select %p152, %s149, 1
      %s154 = smul.addr %s151, 2
      %s155 = sadd.s32 %s153, %s154
      %s156 = smul.addr %s155, 4
      %s157 = scalar_lea.vmem %s0, %s156
      %p158 = pneg %p48
      %p159 = pneg %p45
      %p160 = scmp.lt.s32.totalorder %s17, 1
      %s161 = scalar_select %p160, %s17, 1
      %s162 = smul.addr %s161, 2
      %s163 = smul.addr %s162, 4
      %s164 = scalar_lea.vmem %s1, %s163
      %p165 = pneg %p74
      %p166 = pneg %p71
      %p167 = pneg %p102
      %p168 = pneg %p99
      %s169 = smul.u32 2, %s18
      %p170 = scmp.lt.s32.totalorder %s17, 1
      %s171 = scalar_select %p170, %s17, 1
      %p172 = scmp.lt.s32.totalorder %s169, 1
      %s173 = scalar_select %p172, %s169, 1
      %s174 = smul.addr %s171, 2
      %s175 = sadd.s32 %s173, %s174
      %s176 = smul.addr %s175, 4
      %s177 = scalar_lea.vmem %s2, %s176
      %s178 = smul.u32 2, %s18
      %p179 = scmp.lt.s32.totalorder %s17, 1
      %s180 = scalar_select %p179, %s17, 1
      %p181 = scmp.lt.s32.totalorder %s178, 1
      %s182 = scalar_select %p181, %s178, 1
      %s183 = smul.addr %s180, 2
      %s184 = sadd.s32 %s182, %s183
      %s185 = smul.addr %s184, 4
      %s186 = scalar_lea.vmem %s0, %s185
      %s187 = smul.u32 2, %s18
      %p188 = scmp.lt.s32.totalorder %s17, 1
      %s189 = scalar_select %p188, %s17, 1
      %s190 = smul.addr %s189, 2
      %s191 = smul.addr %s190, 4
      %s192 = scalar_lea.vmem %s1, %s191
      %s193 = smul.u32 2, %s18
      %p194 = scmp.lt.s32.totalorder %s17, 1
      %s195 = scalar_select %p194, %s17, 1
      %p196 = scmp.lt.s32.totalorder %s193, 1
      %s197 = scalar_select %p196, %s193, 1
      %s198 = smul.addr %s195, 2
      %s199 = sadd.s32 %s197, %s198
      %s200 = smul.addr %s199, 4
      %s201 = scalar_lea.vmem %s2, %s200
      %s202 = smul.u32 2, %s18
      %v204 = vld [vmem:[%s186] sm:$0xf]
      %v205 = vld [vmem:[%s186 + $0x4] sm:$0xf]
      %v206 = vld [vmem:[%s192] sm:$0xf]
      %v207 = vld [vmem:[%s192 + $0x4] sm:$0xf]
      %v210 = vunpack.c.l.b16 %v204
      %v211 = vunpack.c.l.b16 %v205
      %v212 = vpack.c.b16 %v211, %v210
      %v215 = vunpack.c.l.b16 %v206
      %v216 = vunpack.c.l.b16 %v207
      %v217 = vpack.c.b16 %v216, %v215
      %218 = vrot.lane.b32.xlu0 %v217, 96
      %v219 = vpop.permute.xlu0 %218
      %vm220 = vcmask 64512
      %v222 = vsel %vm220, %v212, 0
      %v225 = vsel %vm220, %v219, 0
      %227 = vmatprep.subr.bf16.mxu0 0
      %228 = vmatpush1.bf16.xpose.msra.mxu0 %v225
      %229 = vmatprep.subr.bf16.mxu0 0
      %230 = vmatpush1.bf16.xpose.msra.mxu0 0
      %231 = vmatprep.subr.bf16.mxu0 0
      %232 = vmatpush1.bf16.xpose.msra.mxu0 0
      %233 = vmatprep.subr.bf16.mxu0 0
      %234 = vmatpush1.bf16.xpose.msra.mxu0 0
      %235 = vmatprep.subr.bf16.mxu0 0
      %236 = vmatpush1.bf16.xpose.msra.mxu0 0
      %237 = vmatprep.subr.bf16.mxu0 0
      %238 = vmatpush1.bf16.xpose.msra.mxu0 0
      %239 = vmatprep.subr.bf16.mxu0 0
      %240 = vmatpush1.bf16.xpose.msra.mxu0 0
      %241 = vmatprep.subr.bf16.mxu0 0
      %242 = vmatpush1.bf16.xpose.msra.mxu0 0
      %243 = vmatprep.subr.bf16.mxu0 0
      %244 = vmatpush1.bf16.xpose.msra.mxu0 0
      %245 = vmatprep.subr.bf16.mxu0 0
      %246 = vmatpush1.bf16.xpose.msra.mxu0 0
      %247 = vmatprep.subr.bf16.mxu0 0
      %248 = vmatpush1.bf16.xpose.msra.mxu0 0
      %249 = vmatprep.subr.bf16.mxu0 0
      %250 = vmatpush1.bf16.xpose.msra.mxu0 0
      %251 = vmatprep.subr.bf16.mxu0 0
      %252 = vmatpush1.bf16.xpose.msra.mxu0 0
      %253 = vmatprep.subr.bf16.mxu0 0
      %254 = vmatpush1.bf16.xpose.msra.mxu0 0
      %255 = vmatprep.subr.bf16.mxu0 0
      %256 = vmatpush1.bf16.xpose.msra.mxu0 0
      %257 = vmatprep.subr.bf16.mxu0 0
      %258 = vmatpush1.bf16.xpose.msra.mxu0 0
      %259 = vmatprep.mubr.bf16.mxu0 0
      %260 = vmatmul.mubr.bf16.gmra.mrb[0].mxu0 %v222
      %v261 = vpop.f32.mrb[0].mxu0
      %v262 = vadd.f32 0.0, %v261
      %v263 = vpop.f32.mrb[0].mxu0
      %v264 = vpop.f32.mrb[0].mxu0
      %v265 = vadd.f32 0.0, %v264
      %v266 = vpop.f32.mrb[0].mxu0
      %267 = vdwg.mxu0
      %v268 = vmul.f32 %v262, 0.35355338
      %v269 = vmul.f32 %v265, 0.35355338
      %vm270 = vcmask 130048
      %v271 = vsel %vm270, %v268, -inf
      %272 = vmax.xlane.f32.xlu0 %v271
      %v273 = vpop.xlane.xlu0 %272
      %v274 = vsel %vm270, %v269, -inf
      %275 = vmax.xlane.f32.xlu0 %v274
      %v276 = vpop.xlane.xlu0 %275
      %v277 = vsub.f32 %v268, %v273
      %v278 = vsub.f32 %v269, %v276
      %v279 = vmul.f32 %v277, 1.442695
      %v280 = vpow.pop %v279
      %v281 = vmul.f32 %v278, 1.442695
      %v282 = vpow.pop %v281
      %v283 = vsel %vm270, %v280, 0.0
      %284 = vadd.xlane.f32.xlu0 %v283
      %v285 = vpop.xlane.xlu0 %284
      %v286 = vsel %vm270, %v282, 0.0
      %287 = vadd.xlane.f32.xlu0 %v286
      %v288 = vpop.xlane.xlu0 %287
      %v289 = vpack.c.bf16 %v282, %v280
      %290 = vrot.lane.b32.xlu0 %v217, 64
      %v291 = vpop.permute.xlu0 %290
      %v294 = vsel %vm270, %v289, 0
      %296 = vmatprep.subr.bf16.mxu0 0
      %297 = vmatpush1.bf16.msra.mxu0 %v291
      %298 = vmatprep.subr.bf16.mxu0 0
      %299 = vmatpush1.bf16.msra.mxu0 0
      %300 = vmatprep.subr.bf16.mxu0 0
      %301 = vmatpush1.bf16.msra.mxu0 0
      %302 = vmatprep.subr.bf16.mxu0 0
      %303 = vmatpush1.bf16.msra.mxu0 0
      %304 = vmatprep.subr.bf16.mxu0 0
      %305 = vmatpush1.bf16.msra.mxu0 0
      %306 = vmatprep.subr.bf16.mxu0 0
      %307 = vmatpush1.bf16.msra.mxu0 0
      %308 = vmatprep.subr.bf16.mxu0 0
      %309 = vmatpush1.bf16.msra.mxu0 0
      %310 = vmatprep.subr.bf16.mxu0 0
      %311 = vmatpush1.bf16.msra.mxu0 0
      %312 = vmatprep.subr.bf16.mxu0 0
      %313 = vmatpush1.bf16.msra.mxu0 0
      %314 = vmatprep.subr.bf16.mxu0 0
      %315 = vmatpush1.bf16.msra.mxu0 0
      %316 = vmatprep.subr.bf16.mxu0 0
      %317 = vmatpush1.bf16.msra.mxu0 0
      %318 = vmatprep.subr.bf16.mxu0 0
      %319 = vmatpush1.bf16.msra.mxu0 0
      %320 = vmatprep.subr.bf16.mxu0 0
      %321 = vmatpush1.bf16.msra.mxu0 0
      %322 = vmatprep.subr.bf16.mxu0 0
      %323 = vmatpush1.bf16.msra.mxu0 0
      %324 = vmatprep.subr.bf16.mxu0 0
      %325 = vmatpush1.bf16.msra.mxu0 0
      %326 = vmatprep.subr.bf16.mxu0 0
      %327 = vmatpush1.bf16.msra.mxu0 0
      %328 = vmatprep.mubr.bf16.mxu0 0
      %329 = vmatmul.mubr.bf16.gmra.mrb[0].mxu0 %v294
      %v330 = vpop.f32.mrb[0].mxu0
      %v331 = vadd.f32 0.0, %v330
      %v332 = vpop.f32.mrb[0].mxu0
      %v333 = vpop.f32.mrb[0].mxu0
      %v334 = vadd.f32 0.0, %v333
      %v335 = vpop.f32.mrb[0].mxu0
      %336 = vdwg.mxu0
      %v337 = vrcp.pop %v285
      %v338 = vmul.f32 %v331, %v337
      %v339 = vrcp.pop %v288
      %v340 = vmul.f32 %v334, %v339
      %341 = vrot.lane.b32.xlu0 %v212, 120
      %v342 = vpop.permute.xlu0 %341
      %343 = vrot.lane.b32.xlu0 %v217, 88
      %v344 = vpop.permute.xlu0 %343
      %v346 = vsel %vm220, %v342, 0
      %v349 = vsel %vm220, %v344, 0
      %351 = vmatprep.subr.bf16.mxu0 0
      %352 = vmatpush1.bf16.xpose.msra.mxu0 %v349
      %353 = vmatprep.subr.bf16.mxu0 0
      %354 = vmatpush1.bf16.xpose.msra.mxu0 0
      %355 = vmatprep.subr.bf16.mxu0 0
      %356 = vmatpush1.bf16.xpose.msra.mxu0 0
      %357 = vmatprep.subr.bf16.mxu0 0
      %358 = vmatpush1.bf16.xpose.msra.mxu0 0
      %359 = vmatprep.subr.bf16.mxu0 0
      %360 = vmatpush1.bf16.xpose.msra.mxu0 0
      %361 = vmatprep.subr.bf16.mxu0 0
      %362 = vmatpush1.bf16.xpose.msra.mxu0 0
      %363 = vmatprep.subr.bf16.mxu0 0
      %364 = vmatpush1.bf16.xpose.msra.mxu0 0
      %365 = vmatprep.subr.bf16.mxu0 0
      %366 = vmatpush1.bf16.xpose.msra.mxu0 0
      %367 = vmatprep.subr.bf16.mxu0 0
      %368 = vmatpush1.bf16.xpose.msra.mxu0 0
      %369 = vmatprep.subr.bf16.mxu0 0
      %370 = vmatpush1.bf16.xpose.msra.mxu0 0
      %371 = vmatprep.subr.bf16.mxu0 0
      %372 = vmatpush1.bf16.xpose.msra.mxu0 0
      %373 = vmatprep.subr.bf16.mxu0 0
      %374 = vmatpush1.bf16.xpose.msra.mxu0 0
      %375 = vmatprep.subr.bf16.mxu0 0
      %376 = vmatpush1.bf16.xpose.msra.mxu0 0
      %377 = vmatprep.subr.bf16.mxu0 0
      %378 = vmatpush1.bf16.xpose.msra.mxu0 0
      %379 = vmatprep.subr.bf16.mxu0 0
      %380 = vmatpush1.bf16.xpose.msra.mxu0 0
      %381 = vmatprep.subr.bf16.mxu0 0
      %382 = vmatpush1.bf16.xpose.msra.mxu0 0
      %383 = vmatprep.mubr.bf16.mxu0 0
      %384 = vmatmul.mubr.bf16.gmra.mrb[0].mxu0 %v346
      %v385 = vpop.f32.mrb[0].mxu0
      %v386 = vadd.f32 0.0, %v385
      %v387 = vpop.f32.mrb[0].mxu0
      %v388 = vpop.f32.mrb[0].mxu0
      %v389 = vadd.f32 0.0, %v388
      %v390 = vpop.f32.mrb[0].mxu0
      %391 = vdwg.mxu0
      %v392 = vmul.f32 %v386, 0.35355338
      %v393 = vmul.f32 %v389, 0.35355338
      %v394 = vsel %vm270, %v392, -inf
      %395 = vmax.xlane.f32.xlu0 %v394
      %v396 = vpop.xlane.xlu0 %395
      %v397 = vsel %vm270, %v393, -inf
      %398 = vmax.xlane.f32.xlu0 %v397
      %v399 = vpop.xlane.xlu0 %398
      %v400 = vsub.f32 %v392, %v396
      %v401 = vsub.f32 %v393, %v399
      %v402 = vmul.f32 %v400, 1.442695
      %v403 = vpow.pop %v402
      %v404 = vmul.f32 %v401, 1.442695
      %v405 = vpow.pop %v404
      %v406 = vsel %vm270, %v403, 0.0
      %407 = vadd.xlane.f32.xlu0 %v406
      %v408 = vpop.xlane.xlu0 %407
      %v409 = vsel %vm270, %v405, 0.0
      %410 = vadd.xlane.f32.xlu0 %v409
      %v411 = vpop.xlane.xlu0 %410
      %v412 = vpack.c.bf16 %v405, %v403
      %413 = vrot.lane.b32.xlu0 %v217, 56
      %v414 = vpop.permute.xlu0 %413
      %v417 = vsel %vm270, %v412, 0
      %419 = vmatprep.subr.bf16.mxu0 0
      %420 = vmatpush1.bf16.msra.mxu0 %v414
      %421 = vmatprep.subr.bf16.mxu0 0
      %422 = vmatpush1.bf16.msra.mxu0 0
      %423 = vmatprep.subr.bf16.mxu0 0
      %424 = vmatpush1.bf16.msra.mxu0 0
      %425 = vmatprep.subr.bf16.mxu0 0
      %426 = vmatpush1.bf16.msra.mxu0 0
      %427 = vmatprep.subr.bf16.mxu0 0
      %428 = vmatpush1.bf16.msra.mxu0 0
      %429 = vmatprep.subr.bf16.mxu0 0
      %430 = vmatpush1.bf16.msra.mxu0 0
      %431 = vmatprep.subr.bf16.mxu0 0
      %432 = vmatpush1.bf16.msra.mxu0 0
      %433 = vmatprep.subr.bf16.mxu0 0
      %434 = vmatpush1.bf16.msra.mxu0 0
      %435 = vmatprep.subr.bf16.mxu0 0
      %436 = vmatpush1.bf16.msra.mxu0 0
      %437 = vmatprep.subr.bf16.mxu0 0
      %438 = vmatpush1.bf16.msra.mxu0 0
      %439 = vmatprep.subr.bf16.mxu0 0
      %440 = vmatpush1.bf16.msra.mxu0 0
      %441 = vmatprep.subr.bf16.mxu0 0
      %442 = vmatpush1.bf16.msra.mxu0 0
      %443 = vmatprep.subr.bf16.mxu0 0
      %444 = vmatpush1.bf16.msra.mxu0 0
      %445 = vmatprep.subr.bf16.mxu0 0
      %446 = vmatpush1.bf16.msra.mxu0 0
      %447 = vmatprep.subr.bf16.mxu0 0
      %448 = vmatpush1.bf16.msra.mxu0 0
      %449 = vmatprep.subr.bf16.mxu0 0
      %450 = vmatpush1.bf16.msra.mxu0 0
      %451 = vmatprep.mubr.bf16.mxu0 0
      %452 = vmatmul.mubr.bf16.gmra.mrb[0].mxu0 %v417
      %v453 = vpop.f32.mrb[0].mxu0
      %v454 = vadd.f32 0.0, %v453
      %v455 = vpop.f32.mrb[0].mxu0
      %v456 = vpop.f32.mrb[0].mxu0
      %v457 = vadd.f32 0.0, %v456
      %v458 = vpop.f32.mrb[0].mxu0
      %459 = vdwg.mxu0
      %v460 = vrcp.pop %v408
      %v461 = vmul.f32 %v454, %v460
      %v462 = vrcp.pop %v411
      %v463 = vmul.f32 %v457, %v462
      %464 = vrot.lane.b32.xlu0 %v212, 112
      %v465 = vpop.permute.xlu0 %464
      %466 = vrot.lane.b32.xlu0 %v217, 80
      %v467 = vpop.permute.xlu0 %466
      %v469 = vsel %vm220, %v465, 0
      %v472 = vsel %vm220, %v467, 0
      %474 = vmatprep.subr.bf16.mxu0 0
      %475 = vmatpush1.bf16.xpose.msra.mxu0 %v472
      %476 = vmatprep.subr.bf16.mxu0 0
      %477 = vmatpush1.bf16.xpose.msra.mxu0 0
      %478 = vmatprep.subr.bf16.mxu0 0
      %479 = vmatpush1.bf16.xpose.msra.mxu0 0
      %480 = vmatprep.subr.bf16.mxu0 0
      %481 = vmatpush1.bf16.xpose.msra.mxu0 0
      %482 = vmatprep.subr.bf16.mxu0 0
      %483 = vmatpush1.bf16.xpose.msra.mxu0 0
      %484 = vmatprep.subr.bf16.mxu0 0
      %485 = vmatpush1.bf16.xpose.msra.mxu0 0
      %486 = vmatprep.subr.bf16.mxu0 0
      %487 = vmatpush1.bf16.xpose.msra.mxu0 0
      %488 = vmatprep.subr.bf16.mxu0 0
      %489 = vmatpush1.bf16.xpose.msra.mxu0 0
      %490 = vmatprep.subr.bf16.mxu0 0
      %491 = vmatpush1.bf16.xpose.msra.mxu0 0
      %492 = vmatprep.subr.bf16.mxu0 0
      %493 = vmatpush1.bf16.xpose.msra.mxu0 0
      %494 = vmatprep.subr.bf16.mxu0 0
      %495 = vmatpush1.bf16.xpose.msra.mxu0 0
      %496 = vmatprep.subr.bf16.mxu0 0
      %497 = vmatpush1.bf16.xpose.msra.mxu0 0
      %498 = vmatprep.subr.bf16.mxu0 0
      %499 = vmatpush1.bf16.xpose.msra.mxu0 0
      %500 = vmatprep.subr.bf16.mxu0 0
      %501 = vmatpush1.bf16.xpose.msra.mxu0 0
      %502 = vmatprep.subr.bf16.mxu0 0
      %503 = vmatpush1.bf16.xpose.msra.mxu0 0
      %504 = vmatprep.subr.bf16.mxu0 0
      %505 = vmatpush1.bf16.xpose.msra.mxu0 0
      %506 = vmatprep.mubr.bf16.mxu0 0
      %507 = vmatmul.mubr.bf16.gmra.mrb[0].mxu0 %v469
      %v508 = vpop.f32.mrb[0].mxu0
      %v509 = vadd.f32 0.0, %v508
      %v510 = vpop.f32.mrb[0].mxu0
      %v511 = vpop.f32.mrb[0].mxu0
      %v512 = vadd.f32 0.0, %v511
      %v513 = vpop.f32.mrb[0].mxu0
      %514 = vdwg.mxu0
      %v515 = vmul.f32 %v509, 0.35355338
      %v516 = vmul.f32 %v512, 0.35355338
      %v517 = vsel %vm270, %v515, -inf
      %518 = vmax.xlane.f32.xlu0 %v517
      %v519 = vpop.xlane.xlu0 %518
      %v520 = vsel %vm270, %v516, -inf
      %521 = vmax.xlane.f32.xlu0 %v520
      %v522 = vpop.xlane.xlu0 %521
      %v523 = vsub.f32 %v515, %v519
      %v524 = vsub.f32 %v516, %v522
      %v525 = vmul.f32 %v523, 1.442695
      %v526 = vpow.pop %v525
      %v527 = vmul.f32 %v524, 1.442695
      %v528 = vpow.pop %v527
      %v529 = vsel %vm270, %v526, 0.0
      %530 = vadd.xlane.f32.xlu0 %v529
      %v531 = vpop.xlane.xlu0 %530
      %v532 = vsel %vm270, %v528, 0.0
      %533 = vadd.xlane.f32.xlu0 %v532
      %v534 = vpop.xlane.xlu0 %533
      %v535 = vpack.c.bf16 %v528, %v526
      %536 = vrot.lane.b32.xlu0 %v217, 48
      %v537 = vpop.permute.xlu0 %536
      %v540 = vsel %vm270, %v535, 0
      %542 = vmatprep.subr.bf16.mxu0 0
      %543 = vmatpush1.bf16.msra.mxu0 %v537
      %544 = vmatprep.subr.bf16.mxu0 0
      %545 = vmatpush1.bf16.msra.mxu0 0
      %546 = vmatprep.subr.bf16.mxu0 0
      %547 = vmatpush1.bf16.msra.mxu0 0
      %548 = vmatprep.subr.bf16.mxu0 0
      %549 = vmatpush1.bf16.msra.mxu0 0
      %550 = vmatprep.subr.bf16.mxu0 0
      %551 = vmatpush1.bf16.msra.mxu0 0
      %552 = vmatprep.subr.bf16.mxu0 0
      %553 = vmatpush1.bf16.msra.mxu0 0
      %554 = vmatprep.subr.bf16.mxu0 0
      %555 = vmatpush1.bf16.msra.mxu0 0
      %556 = vmatprep.subr.bf16.mxu0 0
      %557 = vmatpush1.bf16.msra.mxu0 0
      %558 = vmatprep.subr.bf16.mxu0 0
      %559 = vmatpush1.bf16.msra.mxu0 0
      %560 = vmatprep.subr.bf16.mxu0 0
      %561 = vmatpush1.bf16.msra.mxu0 0
      %562 = vmatprep.subr.bf16.mxu0 0
      %563 = vmatpush1.bf16.msra.mxu0 0
      %564 = vmatprep.subr.bf16.mxu0 0
      %565 = vmatpush1.bf16.msra.mxu0 0
      %566 = vmatprep.subr.bf16.mxu0 0
      %567 = vmatpush1.bf16.msra.mxu0 0
      %568 = vmatprep.subr.bf16.mxu0 0
      %569 = vmatpush1.bf16.msra.mxu0 0
      %570 = vmatprep.subr.bf16.mxu0 0
      %571 = vmatpush1.bf16.msra.mxu0 0
      %572 = vmatprep.subr.bf16.mxu0 0
      %573 = vmatpush1.bf16.msra.mxu0 0
      %574 = vmatprep.mubr.bf16.mxu0 0
      %575 = vmatmul.mubr.bf16.gmra.mrb[0].mxu0 %v540
      %v576 = vpop.f32.mrb[0].mxu0
      %v577 = vadd.f32 0.0, %v576
      %v578 = vpop.f32.mrb[0].mxu0
      %v579 = vpop.f32.mrb[0].mxu0
      %v580 = vadd.f32 0.0, %v579
      %v581 = vpop.f32.mrb[0].mxu0
      %582 = vdwg.mxu0
      %v583 = vrcp.pop %v531
      %v584 = vmul.f32 %v577, %v583
      %v585 = vrcp.pop %v534
      %v586 = vmul.f32 %v580, %v585
      %587 = vrot.lane.b32.xlu0 %v212, 104
      %v588 = vpop.permute.xlu0 %587
      %589 = vrot.lane.b32.xlu0 %v217, 72
      %v590 = vpop.permute.xlu0 %589
      %v592 = vsel %vm220, %v588, 0
      %v595 = vsel %vm220, %v590, 0
      %597 = vmatprep.subr.bf16.mxu0 0
      %598 = vmatpush1.bf16.xpose.msra.mxu0 %v595
      %599 = vmatprep.subr.bf16.mxu0 0
      %600 = vmatpush1.bf16.xpose.msra.mxu0 0
      %601 = vmatprep.subr.bf16.mxu0 0
      %602 = vmatpush1.bf16.xpose.msra.mxu0 0
      %603 = vmatprep.subr.bf16.mxu0 0
      %604 = vmatpush1.bf16.xpose.msra.mxu0 0
      %605 = vmatprep.subr.bf16.mxu0 0
      %606 = vmatpush1.bf16.xpose.msra.mxu0 0
      %607 = vmatprep.subr.bf16.mxu0 0
      %608 = vmatpush1.bf16.xpose.msra.mxu0 0
      %609 = vmatprep.subr.bf16.mxu0 0
      %610 = vmatpush1.bf16.xpose.msra.mxu0 0
      %611 = vmatprep.subr.bf16.mxu0 0
      %612 = vmatpush1.bf16.xpose.msra.mxu0 0
      %613 = vmatprep.subr.bf16.mxu0 0
      %614 = vmatpush1.bf16.xpose.msra.mxu0 0
      %615 = vmatprep.subr.bf16.mxu0 0
      %616 = vmatpush1.bf16.xpose.msra.mxu0 0
      %617 = vmatprep.subr.bf16.mxu0 0
      %618 = vmatpush1.bf16.xpose.msra.mxu0 0
      %619 = vmatprep.subr.bf16.mxu0 0
      %620 = vmatpush1.bf16.xpose.msra.mxu0 0
      %621 = vmatprep.subr.bf16.mxu0 0
      %622 = vmatpush1.bf16.xpose.msra.mxu0 0
      %623 = vmatprep.subr.bf16.mxu0 0
      %624 = vmatpush1.bf16.xpose.msra.mxu0 0
      %625 = vmatprep.subr.bf16.mxu0 0
      %626 = vmatpush1.bf16.xpose.msra.mxu0 0
      %627 = vmatprep.subr.bf16.mxu0 0
      %628 = vmatpush1.bf16.xpose.msra.mxu0 0
      %629 = vmatprep.mubr.bf16.mxu0 0
      %630 = vmatmul.mubr.bf16.gmra.mrb[0].mxu0 %v592
      %v631 = vpop.f32.mrb[0].mxu0
      %v632 = vadd.f32 0.0, %v631
      %v633 = vpop.f32.mrb[0].mxu0
      %v634 = vpop.f32.mrb[0].mxu0
      %v635 = vadd.f32 0.0, %v634
      %v636 = vpop.f32.mrb[0].mxu0
      %637 = vdwg.mxu0
      %v638 = vmul.f32 %v632, 0.35355338
      %v639 = vmul.f32 %v635, 0.35355338
      %v640 = vsel %vm270, %v638, -inf
      %641 = vmax.xlane.f32.xlu0 %v640
      %v642 = vpop.xlane.xlu0 %641
      %v643 = vsel %vm270, %v639, -inf
      %644 = vmax.xlane.f32.xlu0 %v643
      %v645 = vpop.xlane.xlu0 %644
      %v646 = vsub.f32 %v638, %v642
      %v647 = vsub.f32 %v639, %v645
      %v648 = vmul.f32 %v646, 1.442695
      %v649 = vpow.pop %v648
      %v650 = vmul.f32 %v647, 1.442695
      %v651 = vpow.pop %v650
      %v652 = vsel %vm270, %v649, 0.0
      %653 = vadd.xlane.f32.xlu0 %v652
      %v654 = vpop.xlane.xlu0 %653
      %v655 = vsel %vm270, %v651, 0.0
      %656 = vadd.xlane.f32.xlu0 %v655
      %v657 = vpop.xlane.xlu0 %656
      %v658 = vpack.c.bf16 %v651, %v649
      %659 = vrot.lane.b32.xlu0 %v217, 40
      %v660 = vpop.permute.xlu0 %659
      %v663 = vsel %vm270, %v658, 0
      %665 = vmatprep.subr.bf16.mxu0 0
      %666 = vmatpush1.bf16.msra.mxu0 %v660
      %667 = vmatprep.subr.bf16.mxu0 0
      %668 = vmatpush1.bf16.msra.mxu0 0
      %669 = vmatprep.subr.bf16.mxu0 0
      %670 = vmatpush1.bf16.msra.mxu0 0
      %671 = vmatprep.subr.bf16.mxu0 0
      %672 = vmatpush1.bf16.msra.mxu0 0
      %673 = vmatprep.subr.bf16.mxu0 0
      %674 = vmatpush1.bf16.msra.mxu0 0
      %675 = vmatprep.subr.bf16.mxu0 0
      %676 = vmatpush1.bf16.msra.mxu0 0
      %677 = vmatprep.subr.bf16.mxu0 0
      %678 = vmatpush1.bf16.msra.mxu0 0
      %679 = vmatprep.subr.bf16.mxu0 0
      %680 = vmatpush1.bf16.msra.mxu0 0
      %681 = vmatprep.subr.bf16.mxu0 0
      %682 = vmatpush1.bf16.msra.mxu0 0
      %683 = vmatprep.subr.bf16.mxu0 0
      %684 = vmatpush1.bf16.msra.mxu0 0
      %685 = vmatprep.subr.bf16.mxu0 0
      %686 = vmatpush1.bf16.msra.mxu0 0
      %687 = vmatprep.subr.bf16.mxu0 0
      %688 = vmatpush1.bf16.msra.mxu0 0
      %689 = vmatprep.subr.bf16.mxu0 0
      %690 = vmatpush1.bf16.msra.mxu0 0
      %691 = vmatprep.subr.bf16.mxu0 0
      %692 = vmatpush1.bf16.msra.mxu0 0
      %693 = vmatprep.subr.bf16.mxu0 0
      %694 = vmatpush1.bf16.msra.mxu0 0
      %695 = vmatprep.subr.bf16.mxu0 0
      %696 = vmatpush1.bf16.msra.mxu0 0
      %697 = vmatprep.mubr.bf16.mxu0 0
      %698 = vmatmul.mubr.bf16.gmra.mrb[0].mxu0 %v663
      %v699 = vpop.f32.mrb[0].mxu0
      %v700 = vadd.f32 0.0, %v699
      %v701 = vpop.f32.mrb[0].mxu0
      %v702 = vpop.f32.mrb[0].mxu0
      %v703 = vadd.f32 0.0, %v702
      %v704 = vpop.f32.mrb[0].mxu0
      %705 = vdwg.mxu0
      %v706 = vrcp.pop %v654
      %v707 = vmul.f32 %v700, %v706
      %v708 = vrcp.pop %v657
      %v709 = vmul.f32 %v703, %v708
      %712 = vrot.lane.b32.xlu0 %v461, 8
      %v713 = vpop.permute.xlu0 %712
      %714 = vrot.lane.b32.xlu0 %v463, 8
      %v715 = vpop.permute.xlu0 %714
      %720 = vrot.lane.b32.xlu0 %v584, 16
      %v721 = vpop.permute.xlu0 %720
      %722 = vrot.lane.b32.xlu0 %v586, 16
      %v723 = vpop.permute.xlu0 %722
      %728 = vrot.lane.b32.xlu0 %v707, 24
      %v729 = vpop.permute.xlu0 %728
      %730 = vrot.lane.b32.xlu0 %v709, 24
      %v731 = vpop.permute.xlu0 %730
      %v734 = vsel %vm220, %v338, %v713
      %v735 = vsel %vm220, %v340, %v715
      %v736 = vsel %vm270, %v734, %v721
      %v737 = vsel %vm270, %v735, %v723
      %vm738 = vcmask 195584
      %v739 = vsel %vm738, %v736, %v729
      %v740 = vsel %vm738, %v737, %v731
      %v741 = vpack.c.bf16 %v740, %v739
      %v743 = vunpack.c.l.b16 %v741
      %v744 = vunpack.c.h.b16 %v741
      %v745 = vpack.c.b16 %v743, %v743
      %v746 = vpack.c.b16 %v744, %v744
      %vm749 = vcmask 257024
      %750 = vst.msk [vmem:[%s201] sm:$0xf] %vm749, %v745
      %751 = vst.msk [vmem:[%s201 + $0x4] sm:$0xf] %vm749, %v746
      %s752 = smul.u32 2, %s18
      %p753 = scmp.lt.s32.totalorder %s17, 1
      %s754 = scalar_select %p753, %s17, 1
      %p755 = scmp.lt.s32.totalorder %s752, 1
      %s756 = scalar_select %p755, %s752, 1
      %s757 = smul.addr %s754, 2
      %s758 = sadd.s32 %s756, %s757
      %s759 = smul.addr %s758, 4
      %s760 = scalar_lea.vmem %s2, %s759
      // Predicated region
      $region29: #{run.20} parent=27 // pred_check
        %p761 = pneg %p99
      $region30: #{run.20} parent=27 // pred_check_branch
        %763 = sbr.rel (%p761) target = $region32
      $region31: #{run.20} parent=27 // pred_region
        %s764 = smul.u32 2, %s18
      $region32: #{run.20} parent=27 // pred_fallthru
        _
    $region28: #{run.20} parent=5 // pred_fallthru
      _
    %p765 = scmp.le.s32.totalorder 2, %s8
    // Predicated region
    $region33: #{run.20} parent=5 // pred_check
      %p766 = pneg %p765
    $region34: #{run.20} parent=5 // pred_check_branch
      %768 = sbr.rel (%p766) target = $region36
    $region35: #{run.20} parent=5 // pred_region
      %s769 = ssub.s32 %s8, 2
      // Predicated region
      $region37: #{run.20} parent=35 // pred_check
        %p770 = pneg %p105
      $region38: #{run.20} parent=35 // pred_check_branch
        %772 = sbr.rel (%p770) target = $region40
      $region39: #{run.20} parent=35 // pred_region
        %s773 = smul.u32 2, %s20
        %p774 = scmp.lt.s32.totalorder %s19, 1
        %s775 = scalar_select %p774, %s19, 1
        %p776 = scmp.lt.s32.totalorder %s773, 1
        %s777 = scalar_select %p776, %s773, 1
        %s778 = smul.addr %s775, 2
        %s779 = sadd.s32 %s777, %s778
        %s780 = smul.addr %s779, 4
        %s781 = scalar_lea.vmem %s2, %s780
      $region40: #{run.20} parent=35 // pred_fallthru
        _
    $region36: #{run.20} parent=5 // pred_fallthru
      _
  $region6: #{run.20} parent=0 // loop_footer
    %s12 = sadd.s32 1, %s8
  $region7: #{run.20} parent=0 // loop_footer_branch
    %7 = sbr.rel target = $region3
  $region8: #{run.20} parent=0 // loop_exit
    _

// kernel: run.23
$region0: #{run.23}
  #allocation0 [shape = 'u32[]', space=smem, size = 0x4, offset = 0x4, fixed_abs, tag = 'smem constant byte address 0x4 - core index']
  #allocation1 [shape = 'u32[144,128]{1,0:T(1,128)}', space=vmem, size = 0x12000, scoped, tag = 'internal scratch']
  #allocation2 [shape = 'f32[16,128]{1,0:T(8,128)}', space=vmem, size = 0x2000, scoped, tag = 'scratch operand']
  %s0 = inlined_call_operand.vmem [shape: bf16[32,128], index: 0, kind: input, shape index: {}]
  %s1 = inlined_call_operand.vmem [shape: bf16[128,128], index: 1, kind: input, shape index: {}]
  %s2 = inlined_call_operand.vmem [shape: f32[1,128], index: 2, kind: input, shape index: {}]
  %s3 = inlined_call_operand.vmem [shape: bf16[32,128], index: 3, kind: output, shape index: {}]
  %s4 = sld [smem:[#allocation0]]
  $region53: #{run.23} parent=0
    _
  %s6 = ssub.s32 1, %s4
  %s7 = scalar_select 0, %s6, %s4
  loop: start=0, step=1, limit=4
  $region2: #{run.23} parent=0 // loop_pre_header
    _
  $region3: #{run.23} parent=0 // loop_header
    %s9 = sphi 0, %s13
    %p10 = scmp.ge.s32.totalorder %s9, 4
    %s16 = sphi 0, %s35
    %s17 = sphi 0, %s31
    %s18 = sphi 0, %s27
    %s19 = sphi 0, %s16
    %s20 = sphi 0, %s17
    %s21 = sphi 0, %s18
    %s22 = sphi 0, %s19
    %s23 = sphi 0, %s20
    %s24 = sphi 0, %s21
    %s40 = sphi 0, %s42
    %s43 = sphi 0, %s40
    %s44 = sphi 0, %s43
    %s60 = sphi 0, %s44
    %s68 = sphi 0, %s70
    %s71 = sphi 0, %s68
    %s72 = sphi 0, %s71
    %s88 = sphi 0, %s72
    %s94 = sphi 0, %s96
    %s97 = sphi 0, %s94
    %s98 = sphi 0, %s97
    %s114 = sphi 0, %s98
    %s122 = sphi 0, %s124
    %s125 = sphi 0, %s122
    %s126 = sphi 0, %s125
    %s142 = sphi 0, %s126
  $region4: #{run.23} parent=0 // loop_header_branch
    %12 = sbr.rel (%p10) target = $region8
  $region5: #{run.23} parent=0 // loop_body
    %s14 = ssub.s32 %s9, 1
    %s15 = ssub.s32 %s9, 2
    %s25 = sadd.s32 1, %s18
    %p26 = scmp.ge.s32.totalorder %s25, 1
    %s27 = scalar_select %p26, 0, %s25
    %s28 = sadd.s32 1, %s17
    %s29 = scalar_select %p26, %s28, %s17
    %p30 = scmp.ge.s32.totalorder %s29, 1
    %s31 = scalar_select %p30, 0, %s29
    %s32 = sadd.s32 1, %s16
    %s33 = scalar_select %p30, %s32, %s16
    %p34 = scmp.ge.s32.totalorder %s33, 2
    %s35 = scalar_select %p34, 0, %s33
    %s36 = ssub.s32 %s16, %s35
    %s37 = ssub.s32 %s18, %s27
    %s38 = sor.u32 %s36, %s37
    %p39 = scmp.eq.s32.totalorder %s38, 0
    %s41 = sadd.s32 %s40, 1
    %s42 = scalar_select %p39, %s40, %s41
    %p45 = pneg %p39
    %p46 = scmp.eq.s32.totalorder %s9, 1
    %p47 = por %p45, %p46
    %p48 = scmp.ne.s32.totalorder %s40, %s43
    %p49 = scmp.eq.s32.totalorder %s9, 0
    %p50 = por %p48, %p49
    %p51 = scmp.ne.s32.totalorder %s40, %s43
    %p52 = scmp.eq.s32.totalorder %s14, 1
    %p53 = por %p51, %p52
    %p54 = scmp.ne.s32.totalorder %s43, %s44
    %p55 = scmp.eq.s32.totalorder %s14, 0
    %p56 = por %p54, %p55
    %p57 = scmp.ne.s32.totalorder %s43, %s44
    %p58 = scmp.eq.s32.totalorder %s15, 1
    %p59 = por %p57, %p58
    %p61 = scmp.ne.s32.totalorder %s44, %s60
    %p62 = scmp.eq.s32.totalorder %s15, 0
    %p63 = por %p61, %p62
    %s64 = ssub.s32 %s18, %s27
    %s65 = ssub.s32 %s17, %s31
    %s66 = sor.u32 %s64, %s65
    %p67 = scmp.eq.s32.totalorder %s66, 0
    %s69 = sadd.s32 %s68, 1
    %s70 = scalar_select %p67, %s68, %s69
    %p73 = pneg %p67
    %p74 = scmp.eq.s32.totalorder %s9, 1
    %p75 = por %p73, %p74
    %p76 = scmp.ne.s32.totalorder %s68, %s71
    %p77 = scmp.eq.s32.totalorder %s9, 0
    %p78 = por %p76, %p77
    %p79 = scmp.ne.s32.totalorder %s68, %s71
    %p80 = scmp.eq.s32.totalorder %s14, 1
    %p81 = por %p79, %p80
    %p82 = scmp.ne.s32.totalorder %s71, %s72
    %p83 = scmp.eq.s32.totalorder %s14, 0
    %p84 = por %p82, %p83
    %p85 = scmp.ne.s32.totalorder %s71, %s72
    %p86 = scmp.eq.s32.totalorder %s15, 1
    %p87 = por %p85, %p86
    %p89 = scmp.ne.s32.totalorder %s72, %s88
    %p90 = scmp.eq.s32.totalorder %s15, 0
    %p91 = por %p89, %p90
    %s92 = ssub.s32 %s17, %s31
    %p93 = scmp.eq.s32.totalorder %s92, 0
    %s95 = sadd.s32 %s94, 1
    %s96 = scalar_select %p93, %s94, %s95
    %p99 = pneg %p93
    %p100 = scmp.eq.s32.totalorder %s9, 1
    %p101 = por %p99, %p100
    %p102 = scmp.ne.s32.totalorder %s94, %s97
    %p103 = scmp.eq.s32.totalorder %s9, 0
    %p104 = por %p102, %p103
    %p105 = scmp.ne.s32.totalorder %s94, %s97
    %p106 = scmp.eq.s32.totalorder %s14, 1
    %p107 = por %p105, %p106
    %p108 = scmp.ne.s32.totalorder %s97, %s98
    %p109 = scmp.eq.s32.totalorder %s14, 0
    %p110 = por %p108, %p109
    %p111 = scmp.ne.s32.totalorder %s97, %s98
    %p112 = scmp.eq.s32.totalorder %s15, 1
    %p113 = por %p111, %p112
    %p115 = scmp.ne.s32.totalorder %s98, %s114
    %p116 = scmp.eq.s32.totalorder %s15, 0
    %p117 = por %p115, %p116
    %s118 = ssub.s32 %s16, %s35
    %s119 = ssub.s32 %s17, %s31
    %s120 = sor.u32 %s118, %s119
    %p121 = scmp.eq.s32.totalorder %s120, 0
    %s123 = sadd.s32 %s122, 1
    %s124 = scalar_select %p121, %s122, %s123
    %p127 = pneg %p121
    %p128 = scmp.eq.s32.totalorder %s9, 1
    %p129 = por %p127, %p128
    %p130 = scmp.ne.s32.totalorder %s122, %s125
    %p131 = scmp.eq.s32.totalorder %s9, 0
    %p132 = por %p130, %p131
    %p133 = scmp.ne.s32.totalorder %s122, %s125
    %p134 = scmp.eq.s32.totalorder %s14, 1
    %p135 = por %p133, %p134
    %p136 = scmp.ne.s32.totalorder %s125, %s126
    %p137 = scmp.eq.s32.totalorder %s14, 0
    %p138 = por %p136, %p137
    %p139 = scmp.ne.s32.totalorder %s125, %s126
    %p140 = scmp.eq.s32.totalorder %s15, 1
    %p141 = por %p139, %p140
    %p143 = scmp.ne.s32.totalorder %s126, %s142
    %p144 = scmp.eq.s32.totalorder %s15, 0
    %p145 = por %p143, %p144
    %p146 = scmp.le.s32.totalorder 1, %s9
    %p147 = scmp.lt.s32.totalorder %s9, 3
    %p148 = pnand %p146, %p147
    %p149 = pneg %p148
    // Predicated region
    $region9: #{run.23} parent=5 // pred_check
      _
    $region10: #{run.23} parent=5 // pred_check_branch
      %151 = sbr.rel (%p148) target = $region12
    $region11: #{run.23} parent=5 // pred_region
      %s152 = ssub.s32 %s9, 1
      // Predicated region
      $region13: #{run.23} parent=11 // pred_check
        %p153 = pneg %p84
      $region14: #{run.23} parent=11 // pred_check_branch
        %155 = sbr.rel (%p153) target = $region16
      $region15: #{run.23} parent=11 // pred_region
        %s156 = smul.u32 16, %s21
        %p157 = scmp.lt.s32.totalorder %s156, 15
        %s158 = scalar_select %p157, %s156, 15
        %p159 = scmp.lt.s32.totalorder %s20, 0
        %s160 = scalar_select %p159, %s20, 0
        %s161 = sadd.s32 %s160, %s158
        %s162 = smul.addr %s161, 4
        %s163 = scalar_lea.vmem %s1, %s162
        %s164 = smul.u32 16, %s21
      $region16: #{run.23} parent=11 // pred_fallthru
        _
      // Predicated region
      $region17: #{run.23} parent=11 // pred_check
        %p165 = pneg %p110
      $region18: #{run.23} parent=11 // pred_check_branch
        %167 = sbr.rel (%p165) target = $region20
      $region19: #{run.23} parent=11 // pred_region
        %p168 = scmp.lt.s32.totalorder %s20, 0
        %s169 = scalar_select %p168, %s20, 0
        %s170 = scalar_lea.vmem %s2, %s169
      $region20: #{run.23} parent=11 // pred_fallthru
        _
    $region12: #{run.23} parent=5 // pred_fallthru
      _
    %p171 = scmp.lt.s32.totalorder %s9, 2
    // Predicated region
    $region21: #{run.23} parent=5 // pred_check
      %p172 = pneg %p171
    $region22: #{run.23} parent=5 // pred_check_branch
      %174 = sbr.rel (%p172) target = $region24
    $region23: #{run.23} parent=5 // pred_region
      // Predicated region
      $region25: #{run.23} parent=23 // pred_check
        %p175 = pneg %p50
      $region26: #{run.23} parent=23 // pred_check_branch
        %177 = sbr.rel (%p175) target = $region28
      $region27: #{run.23} parent=23 // pred_region
        %s178 = smul.u32 2, %s16
        %p179 = scmp.lt.s32.totalorder %s178, 3
        %s180 = scalar_select %p179, %s178, 3
        %p181 = scmp.lt.s32.totalorder %s18, 0
        %s182 = scalar_select %p181, %s18, 0
        %s183 = sadd.s32 %s182, %s180
        %s184 = smul.addr %s183, 4
        %s185 = scalar_lea.vmem %s0, %s184
        %s186 = smul.u32 2, %s16
      $region28: #{run.23} parent=23 // pred_fallthru
        _
    $region24: #{run.23} parent=5 // pred_fallthru
      _
    %p187 = scmp.le.s32.totalorder 1, %s9
    %p188 = scmp.lt.s32.totalorder %s9, 3
    %p189 = pnand %p187, %p188
    %p190 = pneg %p189
    // Predicated region
    $region29: #{run.23} parent=5 // pred_check
      _
    $region30: #{run.23} parent=5 // pred_check_branch
      %192 = sbr.rel (%p189) target = $region32
    $region31: #{run.23} parent=5 // pred_region
      %s193 = ssub.s32 %s9, 1
      %s194 = smul.u32 2, %s19
      %p195 = scmp.lt.s32.totalorder %s194, 3
      %s196 = scalar_select %p195, %s194, 3
      %p197 = scmp.lt.s32.totalorder %s21, 0
      %s198 = scalar_select %p197, %s21, 0
      %s199 = sadd.s32 %s198, %s196
      %s200 = smul.addr %s199, 4
      %s201 = scalar_lea.vmem %s0, %s200
      %p202 = pneg %p56
      %p203 = pneg %p53
      %s204 = smul.u32 16, %s21
      %p205 = scmp.lt.s32.totalorder %s204, 15
      %s206 = scalar_select %p205, %s204, 15
      %p207 = scmp.lt.s32.totalorder %s20, 0
      %s208 = scalar_select %p207, %s20, 0
      %s209 = sadd.s32 %s208, %s206
      %s210 = smul.addr %s209, 4
      %s211 = scalar_lea.vmem %s1, %s210
      %p212 = pneg %p84
      %p213 = pneg %p81
      %p214 = scmp.lt.s32.totalorder %s20, 0
      %s215 = scalar_select %p214, %s20, 0
      %s216 = scalar_lea.vmem %s2, %s215
      %p217 = pneg %p110
      %p218 = pneg %p107
      %p219 = pneg %p138
      %p220 = pneg %p135
      %s221 = smul.u32 2, %s19
      %p222 = scmp.lt.s32.totalorder %s221, 3
      %s223 = scalar_select %p222, %s221, 3
      %p224 = scmp.lt.s32.totalorder %s20, 0
      %s225 = scalar_select %p224, %s20, 0
      %s226 = sadd.s32 %s225, %s223
      %s227 = smul.addr %s226, 4
      %s228 = scalar_lea.vmem %s3, %s227
      %s229 = smul.u32 2, %s19
      %p230 = scmp.lt.s32.totalorder %s229, 3
      %s231 = scalar_select %p230, %s229, 3
      %p232 = scmp.lt.s32.totalorder %s21, 0
      %s233 = scalar_select %p232, %s21, 0
      %s234 = sadd.s32 %s233, %s231
      %s235 = smul.addr %s234, 4
      %s236 = scalar_lea.vmem %s0, %s235
      %s237 = smul.u32 2, %s19
      %s238 = smul.u32 16, %s21
      %p239 = scmp.lt.s32.totalorder %s238, 15
      %s240 = scalar_select %p239, %s238, 15
      %p241 = scmp.lt.s32.totalorder %s20, 0
      %s242 = scalar_select %p241, %s20, 0
      %s243 = sadd.s32 %s242, %s240
      %s244 = smul.addr %s243, 4
      %s245 = scalar_lea.vmem %s1, %s244
      %s246 = smul.u32 16, %s21
      %p247 = scmp.lt.s32.totalorder %s20, 0
      %s248 = scalar_select %p247, %s20, 0
      %s249 = scalar_lea.vmem %s2, %s248
      %s250 = smul.u32 2, %s19
      %p251 = scmp.lt.s32.totalorder %s250, 3
      %s252 = scalar_select %p251, %s250, 3
      %p253 = scmp.lt.s32.totalorder %s20, 0
      %s254 = scalar_select %p253, %s20, 0
      %s255 = sadd.s32 %s254, %s252
      %s256 = smul.addr %s255, 4
      %s257 = scalar_lea.vmem %s3, %s256
      %s258 = smul.u32 2, %s19
      %p260 = scmp.eq.s32.totalorder %s21, 0
      // Predicated region
      $region33: #{run.23} parent=31 // pred_check
        %p261 = pneg %p260
      $region34: #{run.23} parent=31 // pred_check_branch
        %263 = sbr.rel (%p261) target = $region36
      $region35: #{run.23} parent=31 // pred_region
        %264 = vst [vmem:[#allocation2] sm:$0xff] 0.0
        %265 = vst [vmem:[#allocation2 + $0x8] sm:$0xff] 0.0
      $region36: #{run.23} parent=31 // pred_fallthru
        _
      %v266 = vld [vmem:[#allocation2] sm:$0xff]
      %v267 = vld [vmem:[#allocation2 + $0x8] sm:$0xff]
      %v268 = vld [vmem:[%s236] sm:$0xf]
      %v269 = vld [vmem:[%s236 + $0x4] sm:$0xf]
      %v270 = vld [vmem:[%s245] sm:$0xf]
      %v271 = vld [vmem:[%s245 + $0x4] sm:$0xf]
      %v272 = vld [vmem:[%s245 + $0x8] sm:$0xf]
      %v273 = vld [vmem:[%s245 + $0xc] sm:$0xf]
      %v274 = vld [vmem:[%s245 + $0x10] sm:$0xf]
      %v275 = vld [vmem:[%s245 + $0x14] sm:$0xf]
      %v276 = vld [vmem:[%s245 + $0x18] sm:$0xf]
      %v277 = vld [vmem:[%s245 + $0x1c] sm:$0xf]
      %v278 = vld [vmem:[%s245 + $0x20] sm:$0xf]
      %v279 = vld [vmem:[%s245 + $0x24] sm:$0xf]
      %v280 = vld [vmem:[%s245 + $0x28] sm:$0xf]
      %v281 = vld [vmem:[%s245 + $0x2c] sm:$0xf]
      %v282 = vld [vmem:[%s245 + $0x30] sm:$0xf]
      %v283 = vld [vmem:[%s245 + $0x34] sm:$0xf]
      %v284 = vld [vmem:[%s245 + $0x38] sm:$0xf]
      %v285 = vld [vmem:[%s245 + $0x3c] sm:$0xf]
      %v288 = vunpack.c.l.b16 %v268
      %v289 = vunpack.c.l.b16 %v269
      %v290 = vpack.c.b16 %v289, %v288
      %v308 = vunpack.c.l.b16 %v270
      %v309 = vunpack.c.l.b16 %v271
      %v310 = vunpack.c.l.b16 %v272
      %v311 = vunpack.c.l.b16 %v273
      %v312 = vunpack.c.l.b16 %v274
      %v313 = vunpack.c.l.b16 %v275
      %v314 = vunpack.c.l.b16 %v276
      %v315 = vunpack.c.l.b16 %v277
      %v316 = vunpack.c.l.b16 %v278
      %v317 = vunpack.c.l.b16 %v279
      %v318 = vunpack.c.l.b16 %v280
      %v319 = vunpack.c.l.b16 %v281
      %v320 = vunpack.c.l.b16 %v282
      %v321 = vunpack.c.l.b16 %v283
      %v322 = vunpack.c.l.b16 %v284
      %v323 = vunpack.c.l.b16 %v285
      %v324 = vpack.c.b16 %v309, %v308
      %v325 = vpack.c.b16 %v311, %v310
      %v326 = vpack.c.b16 %v313, %v312
      %v327 = vpack.c.b16 %v315, %v314
      %v328 = vpack.c.b16 %v317, %v316
      %v329 = vpack.c.b16 %v319, %v318
      %v330 = vpack.c.b16 %v321, %v320
      %v331 = vpack.c.b16 %v323, %v322
      %340 = vmatprep.subr.bf16.mxu0 0
      %341 = vmatpush1.bf16.msra.mxu0 %v324
      %342 = vmatprep.subr.bf16.mxu0 0
      %343 = vmatpush1.bf16.msra.mxu0 %v325
      %344 = vmatprep.subr.bf16.mxu0 0
      %345 = vmatpush1.bf16.msra.mxu0 %v326
      %346 = vmatprep.subr.bf16.mxu0 0
      %347 = vmatpush1.bf16.msra.mxu0 %v327
      %348 = vmatprep.subr.bf16.mxu0 0
      %349 = vmatpush1.bf16.msra.mxu0 %v328
      %350 = vmatprep.subr.bf16.mxu0 0
      %351 = vmatpush1.bf16.msra.mxu0 %v329
      %352 = vmatprep.subr.bf16.mxu0 0
      %353 = vmatpush1.bf16.msra.mxu0 %v330
      %354 = vmatprep.subr.bf16.mxu0 0
      %355 = vmatpush1.bf16.msra.mxu0 %v331
      %356 = vmatprep.subr.bf16.mxu0 0
      %357 = vmatpush1.bf16.msra.mxu0 0
      %358 = vmatprep.subr.bf16.mxu0 0
      %359 = vmatpush1.bf16.msra.mxu0 0
      %360 = vmatprep.subr.bf16.mxu0 0
      %361 = vmatpush1.bf16.msra.mxu0 0
      %362 = vmatprep.subr.bf16.mxu0 0
      %363 = vmatpush1.bf16.msra.mxu0 0
      %364 = vmatprep.subr.bf16.mxu0 0
      %365 = vmatpush1.bf16.msra.mxu0 0
      %366 = vmatprep.subr.bf16.mxu0 0
      %367 = vmatpush1.bf16.msra.mxu0 0
      %368 = vmatprep.subr.bf16.mxu0 0
      %369 = vmatpush1.bf16.msra.mxu0 0
      %370 = vmatprep.subr.bf16.mxu0 0
      %371 = vmatpush1.bf16.msra.mxu0 0
      %372 = vmatprep.mubr.bf16.mxu0 0
      %373 = vmatmul.mubr.bf16.gmra.mrb[0].mxu0 %v290
      %v374 = vpop.f32.mrb[0].mxu0
      %v375 = vadd.f32 0.0, %v374
      %v376 = vpop.f32.mrb[0].mxu0
      %v377 = vpop.f32.mrb[0].mxu0
      %v378 = vadd.f32 0.0, %v377
      %v379 = vpop.f32.mrb[0].mxu0
      %380 = vdwg.mxu0
      %v381 = vadd.f32 %v266, %v375
      %v382 = vadd.f32 %v267, %v378
      %383 = vst [vmem:[#allocation2] sm:$0xff] %v381
      %384 = vst [vmem:[#allocation2 + $0x8] sm:$0xff] %v382
      // Predicated region
      $region37: #{run.23} parent=31 // pred_check
        %p385 = pneg %p260
      $region38: #{run.23} parent=31 // pred_check_branch
        %387 = sbr.rel (%p385) target = $region40
      $region39: #{run.23} parent=31 // pred_region
        %v388 = vld [vmem:[#allocation2] sm:$0xff]
        %v389 = vld [vmem:[#allocation2 + $0x8] sm:$0xff]
        %v390 = vld [vmem:[%s249] sm:$0x1]
        %v392 = vlaneseq
        %v393 = vshrl.u32 %v392, 7
        %v394 = vsub.s32 0, %v393
        %v395 = vrot.slane %v390, %v394
        %v397 = vadd.f32 %v388, %v395
        %v398 = vadd.f32 %v389, %v395
        %v399 = vmul.f32 %v397, 0.5
        %v400 = vmul.f32 %v398, 0.5
        %v401 = vmul.f32 %v397, 0.70710677
        %v402 = vmul.f32 %v398, 0.70710677
        %v403 = verf.f32.pop %v401
        %v404 = verf.f32.pop %v402
        %v405 = vadd.f32 %v403, 1.0
        %v406 = vadd.f32 %v404, 1.0
        %v407 = vmul.f32 %v399, %v405
        %v408 = vmul.f32 %v400, %v406
        %v409 = vpack.c.bf16 %v408, %v407
        %v411 = vunpack.c.l.b16 %v409
        %v412 = vunpack.c.h.b16 %v409
        %v413 = vpack.c.b16 %v411, %v411
        %v414 = vpack.c.b16 %v412, %v412
        %417 = vst [vmem:[%s257] sm:$0xf] %v413
        %418 = vst [vmem:[%s257 + $0x4] sm:$0xf] %v414
      $region40: #{run.23} parent=31 // pred_fallthru
        _
      %s419 = smul.u32 2, %s19
      %p420 = scmp.lt.s32.totalorder %s419, 3
      %s421 = scalar_select %p420, %s419, 3
      %p422 = scmp.lt.s32.totalorder %s20, 0
      %s423 = scalar_select %p422, %s20, 0
      %s424 = sadd.s32 %s423, %s421
      %s425 = smul.addr %s424, 4
      %s426 = scalar_lea.vmem %s3, %s425
      // Predicated region
      $region41: #{run.23} parent=31 // pred_check
        %p427 = pneg %p135
      $region42: #{run.23} parent=31 // pred_check_branch
        %429 = sbr.rel (%p427) target = $region44
      $region43: #{run.23} parent=31 // pred_region
        %s430 = smul.u32 2, %s19
      $region44: #{run.23} parent=31 // pred_fallthru
        _
    $region32: #{run.23} parent=5 // pred_fallthru
      _
    %p431 = scmp.le.s32.totalorder 2, %s9
    // Predicated region
    $region45: #{run.23} parent=5 // pred_check
      %p432 = pneg %p431
    $region46: #{run.23} parent=5 // pred_check_branch
      %434 = sbr.rel (%p432) target = $region48
    $region47: #{run.23} parent=5 // pred_region
      %s435 = ssub.s32 %s9, 2
      // Predicated region
      $region49: #{run.23} parent=47 // pred_check
        %p436 = pneg %p141
      $region50: #{run.23} parent=47 // pred_check_branch
        %438 = sbr.rel (%p436) target = $region52
      $region51: #{run.23} parent=47 // pred_region
        %s439 = smul.u32 2, %s22
        %p440 = scmp.lt.s32.totalorder %s439, 3
        %s441 = scalar_select %p440, %s439, 3
        %p442 = scmp.lt.s32.totalorder %s23, 0
        %s443 = scalar_select %p442, %s23, 0
        %s444 = sadd.s32 %s443, %s441
        %s445 = smul.addr %s444, 4
        %s446 = scalar_lea.vmem %s3, %s445
      $region52: #{run.23} parent=47 // pred_fallthru
        _
    $region48: #{run.23} parent=5 // pred_fallthru
      _
  $region6: #{run.23} parent=0 // loop_footer
    %s13 = sadd.s32 1, %s9
  $region7: #{run.23} parent=0 // loop_footer_branch
    %8 = sbr.rel target = $region3
  $region8: #{run.23} parent=0 // loop_exit
    _

// kernel: run.21
$region0: #{run.21}
  #allocation0 [shape = 'u32[]', space=smem, size = 0x4, offset = 0x4, fixed_abs, tag = 'smem constant byte address 0x4 - core index']
  #allocation1 [shape = 'u32[144,128]{1,0:T(1,128)}', space=vmem, size = 0x12000, scoped, tag = 'internal scratch']
  #allocation2 [shape = 'f32[16,128]{1,0:T(8,128)}', space=vmem, size = 0x2000, scoped, tag = 'scratch operand']
  %s0 = inlined_call_operand.vmem [shape: bf16[32,128], index: 0, kind: input, shape index: {}]
  %s1 = inlined_call_operand.vmem [shape: bf16[128,128], index: 1, kind: input, shape index: {}]
  %s2 = inlined_call_operand.vmem [shape: f32[1,128], index: 2, kind: input, shape index: {}]
  %s3 = inlined_call_operand.vmem [shape: bf16[32,128], index: 3, kind: input, shape index: {}]
  %s4 = inlined_call_operand.vmem [shape: bf16[32,128], index: 4, kind: output, shape index: {}]
  %s5 = sld [smem:[#allocation0]]
  $region57: #{run.21} parent=0
    _
  %s7 = ssub.s32 1, %s5
  %s8 = scalar_select 0, %s7, %s5
  loop: start=0, step=1, limit=4
  $region2: #{run.21} parent=0 // loop_pre_header
    _
  $region3: #{run.21} parent=0 // loop_header
    %s10 = sphi 0, %s14
    %p11 = scmp.ge.s32.totalorder %s10, 4
    %s17 = sphi 0, %s36
    %s18 = sphi 0, %s32
    %s19 = sphi 0, %s28
    %s20 = sphi 0, %s17
    %s21 = sphi 0, %s18
    %s22 = sphi 0, %s19
    %s23 = sphi 0, %s20
    %s24 = sphi 0, %s21
    %s25 = sphi 0, %s22
    %s41 = sphi 0, %s43
    %s44 = sphi 0, %s41
    %s45 = sphi 0, %s44
    %s61 = sphi 0, %s45
    %s69 = sphi 0, %s71
    %s72 = sphi 0, %s69
    %s73 = sphi 0, %s72
    %s89 = sphi 0, %s73
    %s95 = sphi 0, %s97
    %s98 = sphi 0, %s95
    %s99 = sphi 0, %s98
    %s115 = sphi 0, %s99
    %s123 = sphi 0, %s125
    %s126 = sphi 0, %s123
    %s127 = sphi 0, %s126
    %s143 = sphi 0, %s127
    %s151 = sphi 0, %s153
    %s154 = sphi 0, %s151
    %s155 = sphi 0, %s154
    %s171 = sphi 0, %s155
  $region4: #{run.21} parent=0 // loop_header_branch
    %13 = sbr.rel (%p11) target = $region8
  $region5: #{run.21} parent=0 // loop_body
    %s15 = ssub.s32 %s10, 1
    %s16 = ssub.s32 %s10, 2
    %s26 = sadd.s32 1, %s19
    %p27 = scmp.ge.s32.totalorder %s26, 1
    %s28 = scalar_select %p27, 0, %s26
    %s29 = sadd.s32 1, %s18
    %s30 = scalar_select %p27, %s29, %s18
    %p31 = scmp.ge.s32.totalorder %s30, 1
    %s32 = scalar_select %p31, 0, %s30
    %s33 = sadd.s32 1, %s17
    %s34 = scalar_select %p31, %s33, %s17
    %p35 = scmp.ge.s32.totalorder %s34, 2
    %s36 = scalar_select %p35, 0, %s34
    %s37 = ssub.s32 %s17, %s36
    %s38 = ssub.s32 %s19, %s28
    %s39 = sor.u32 %s37, %s38
    %p40 = scmp.eq.s32.totalorder %s39, 0
    %s42 = sadd.s32 %s41, 1
    %s43 = scalar_select %p40, %s41, %s42
    %p46 = pneg %p40
    %p47 = scmp.eq.s32.totalorder %s10, 1
    %p48 = por %p46, %p47
    %p49 = scmp.ne.s32.totalorder %s41, %s44
    %p50 = scmp.eq.s32.totalorder %s10, 0
    %p51 = por %p49, %p50
    %p52 = scmp.ne.s32.totalorder %s41, %s44
    %p53 = scmp.eq.s32.totalorder %s15, 1
    %p54 = por %p52, %p53
    %p55 = scmp.ne.s32.totalorder %s44, %s45
    %p56 = scmp.eq.s32.totalorder %s15, 0
    %p57 = por %p55, %p56
    %p58 = scmp.ne.s32.totalorder %s44, %s45
    %p59 = scmp.eq.s32.totalorder %s16, 1
    %p60 = por %p58, %p59
    %p62 = scmp.ne.s32.totalorder %s45, %s61
    %p63 = scmp.eq.s32.totalorder %s16, 0
    %p64 = por %p62, %p63
    %s65 = ssub.s32 %s19, %s28
    %s66 = ssub.s32 %s18, %s32
    %s67 = sor.u32 %s65, %s66
    %p68 = scmp.eq.s32.totalorder %s67, 0
    %s70 = sadd.s32 %s69, 1
    %s71 = scalar_select %p68, %s69, %s70
    %p74 = pneg %p68
    %p75 = scmp.eq.s32.totalorder %s10, 1
    %p76 = por %p74, %p75
    %p77 = scmp.ne.s32.totalorder %s69, %s72
    %p78 = scmp.eq.s32.totalorder %s10, 0
    %p79 = por %p77, %p78
    %p80 = scmp.ne.s32.totalorder %s69, %s72
    %p81 = scmp.eq.s32.totalorder %s15, 1
    %p82 = por %p80, %p81
    %p83 = scmp.ne.s32.totalorder %s72, %s73
    %p84 = scmp.eq.s32.totalorder %s15, 0
    %p85 = por %p83, %p84
    %p86 = scmp.ne.s32.totalorder %s72, %s73
    %p87 = scmp.eq.s32.totalorder %s16, 1
    %p88 = por %p86, %p87
    %p90 = scmp.ne.s32.totalorder %s73, %s89
    %p91 = scmp.eq.s32.totalorder %s16, 0
    %p92 = por %p90, %p91
    %s93 = ssub.s32 %s18, %s32
    %p94 = scmp.eq.s32.totalorder %s93, 0
    %s96 = sadd.s32 %s95, 1
    %s97 = scalar_select %p94, %s95, %s96
    %p100 = pneg %p94
    %p101 = scmp.eq.s32.totalorder %s10, 1
    %p102 = por %p100, %p101
    %p103 = scmp.ne.s32.totalorder %s95, %s98
    %p104 = scmp.eq.s32.totalorder %s10, 0
    %p105 = por %p103, %p104
    %p106 = scmp.ne.s32.totalorder %s95, %s98
    %p107 = scmp.eq.s32.totalorder %s15, 1
    %p108 = por %p106, %p107
    %p109 = scmp.ne.s32.totalorder %s98, %s99
    %p110 = scmp.eq.s32.totalorder %s15, 0
    %p111 = por %p109, %p110
    %p112 = scmp.ne.s32.totalorder %s98, %s99
    %p113 = scmp.eq.s32.totalorder %s16, 1
    %p114 = por %p112, %p113
    %p116 = scmp.ne.s32.totalorder %s99, %s115
    %p117 = scmp.eq.s32.totalorder %s16, 0
    %p118 = por %p116, %p117
    %s119 = ssub.s32 %s17, %s36
    %s120 = ssub.s32 %s18, %s32
    %s121 = sor.u32 %s119, %s120
    %p122 = scmp.eq.s32.totalorder %s121, 0
    %s124 = sadd.s32 %s123, 1
    %s125 = scalar_select %p122, %s123, %s124
    %p128 = pneg %p122
    %p129 = scmp.eq.s32.totalorder %s10, 1
    %p130 = por %p128, %p129
    %p131 = scmp.ne.s32.totalorder %s123, %s126
    %p132 = scmp.eq.s32.totalorder %s10, 0
    %p133 = por %p131, %p132
    %p134 = scmp.ne.s32.totalorder %s123, %s126
    %p135 = scmp.eq.s32.totalorder %s15, 1
    %p136 = por %p134, %p135
    %p137 = scmp.ne.s32.totalorder %s126, %s127
    %p138 = scmp.eq.s32.totalorder %s15, 0
    %p139 = por %p137, %p138
    %p140 = scmp.ne.s32.totalorder %s126, %s127
    %p141 = scmp.eq.s32.totalorder %s16, 1
    %p142 = por %p140, %p141
    %p144 = scmp.ne.s32.totalorder %s127, %s143
    %p145 = scmp.eq.s32.totalorder %s16, 0
    %p146 = por %p144, %p145
    %s147 = ssub.s32 %s17, %s36
    %s148 = ssub.s32 %s18, %s32
    %s149 = sor.u32 %s147, %s148
    %p150 = scmp.eq.s32.totalorder %s149, 0
    %s152 = sadd.s32 %s151, 1
    %s153 = scalar_select %p150, %s151, %s152
    %p156 = pneg %p150
    %p157 = scmp.eq.s32.totalorder %s10, 1
    %p158 = por %p156, %p157
    %p159 = scmp.ne.s32.totalorder %s151, %s154
    %p160 = scmp.eq.s32.totalorder %s10, 0
    %p161 = por %p159, %p160
    %p162 = scmp.ne.s32.totalorder %s151, %s154
    %p163 = scmp.eq.s32.totalorder %s15, 1
    %p164 = por %p162, %p163
    %p165 = scmp.ne.s32.totalorder %s154, %s155
    %p166 = scmp.eq.s32.totalorder %s15, 0
    %p167 = por %p165, %p166
    %p168 = scmp.ne.s32.totalorder %s154, %s155
    %p169 = scmp.eq.s32.totalorder %s16, 1
    %p170 = por %p168, %p169
    %p172 = scmp.ne.s32.totalorder %s155, %s171
    %p173 = scmp.eq.s32.totalorder %s16, 0
    %p174 = por %p172, %p173
    %p175 = scmp.le.s32.totalorder 1, %s10
    %p176 = scmp.lt.s32.totalorder %s10, 3
    %p177 = pnand %p175, %p176
    %p178 = pneg %p177
    // Predicated region
    $region9: #{run.21} parent=5 // pred_check
      _
    $region10: #{run.21} parent=5 // pred_check_branch
      %180 = sbr.rel (%p177) target = $region12
    $region11: #{run.21} parent=5 // pred_region
      %s181 = ssub.s32 %s10, 1
      // Predicated region
      $region13: #{run.21} parent=11 // pred_check
        %p182 = pneg %p85
      $region14: #{run.21} parent=11 // pred_check_branch
        %184 = sbr.rel (%p182) target = $region16
      $region15: #{run.21} parent=11 // pred_region
        %s185 = smul.u32 16, %s22
        %p186 = scmp.lt.s32.totalorder %s185, 15
        %s187 = scalar_select %p186, %s185, 15
        %p188 = scmp.lt.s32.totalorder %s21, 0
        %s189 = scalar_select %p188, %s21, 0
        %s190 = sadd.s32 %s189, %s187
        %s191 = smul.addr %s190, 4
        %s192 = scalar_lea.vmem %s1, %s191
        %s193 = smul.u32 16, %s22
      $region16: #{run.21} parent=11 // pred_fallthru
        _
      // Predicated region
      $region17: #{run.21} parent=11 // pred_check
        %p194 = pneg %p111
      $region18: #{run.21} parent=11 // pred_check_branch
        %196 = sbr.rel (%p194) target = $region20
      $region19: #{run.21} parent=11 // pred_region
        %p197 = scmp.lt.s32.totalorder %s21, 0
        %s198 = scalar_select %p197, %s21, 0
        %s199 = scalar_lea.vmem %s2, %s198
      $region20: #{run.21} parent=11 // pred_fallthru
        _
    $region12: #{run.21} parent=5 // pred_fallthru
      _
    %p200 = scmp.lt.s32.totalorder %s10, 2
    // Predicated region
    $region21: #{run.21} parent=5 // pred_check
      %p201 = pneg %p200
    $region22: #{run.21} parent=5 // pred_check_branch
      %203 = sbr.rel (%p201) target = $region24
    $region23: #{run.21} parent=5 // pred_region
      // Predicated region
      $region25: #{run.21} parent=23 // pred_check
        %p204 = pneg %p51
      $region26: #{run.21} parent=23 // pred_check_branch
        %206 = sbr.rel (%p204) target = $region28
      $region27: #{run.21} parent=23 // pred_region
        %s207 = smul.u32 2, %s17
        %p208 = scmp.lt.s32.totalorder %s207, 3
        %s209 = scalar_select %p208, %s207, 3
        %p210 = scmp.lt.s32.totalorder %s19, 0
        %s211 = scalar_select %p210, %s19, 0
        %s212 = sadd.s32 %s211, %s209
        %s213 = smul.addr %s212, 4
        %s214 = scalar_lea.vmem %s0, %s213
        %s215 = smul.u32 2, %s17
      $region28: #{run.21} parent=23 // pred_fallthru
        _
      // Predicated region
      $region29: #{run.21} parent=23 // pred_check
        %p216 = pneg %p133
      $region30: #{run.21} parent=23 // pred_check_branch
        %218 = sbr.rel (%p216) target = $region32
      $region31: #{run.21} parent=23 // pred_region
        %s219 = smul.u32 2, %s17
        %p220 = scmp.lt.s32.totalorder %s219, 3
        %s221 = scalar_select %p220, %s219, 3
        %p222 = scmp.lt.s32.totalorder %s18, 0
        %s223 = scalar_select %p222, %s18, 0
        %s224 = sadd.s32 %s223, %s221
        %s225 = smul.addr %s224, 4
        %s226 = scalar_lea.vmem %s3, %s225
        %s227 = smul.u32 2, %s17
      $region32: #{run.21} parent=23 // pred_fallthru
        _
    $region24: #{run.21} parent=5 // pred_fallthru
      _
    %p228 = scmp.le.s32.totalorder 1, %s10
    %p229 = scmp.lt.s32.totalorder %s10, 3
    %p230 = pnand %p228, %p229
    %p231 = pneg %p230
    // Predicated region
    $region33: #{run.21} parent=5 // pred_check
      _
    $region34: #{run.21} parent=5 // pred_check_branch
      %233 = sbr.rel (%p230) target = $region36
    $region35: #{run.21} parent=5 // pred_region
      %s234 = ssub.s32 %s10, 1
      %s235 = smul.u32 2, %s20
      %p236 = scmp.lt.s32.totalorder %s235, 3
      %s237 = scalar_select %p236, %s235, 3
      %p238 = scmp.lt.s32.totalorder %s22, 0
      %s239 = scalar_select %p238, %s22, 0
      %s240 = sadd.s32 %s239, %s237
      %s241 = smul.addr %s240, 4
      %s242 = scalar_lea.vmem %s0, %s241
      %p243 = pneg %p57
      %p244 = pneg %p54
      %s245 = smul.u32 16, %s22
      %p246 = scmp.lt.s32.totalorder %s245, 15
      %s247 = scalar_select %p246, %s245, 15
      %p248 = scmp.lt.s32.totalorder %s21, 0
      %s249 = scalar_select %p248, %s21, 0
      %s250 = sadd.s32 %s249, %s247
      %s251 = smul.addr %s250, 4
      %s252 = scalar_lea.vmem %s1, %s251
      %p253 = pneg %p85
      %p254 = pneg %p82
      %p255 = scmp.lt.s32.totalorder %s21, 0
      %s256 = scalar_select %p255, %s21, 0
      %s257 = scalar_lea.vmem %s2, %s256
      %p258 = pneg %p111
      %p259 = pneg %p108
      %s260 = smul.u32 2, %s20
      %p261 = scmp.lt.s32.totalorder %s260, 3
      %s262 = scalar_select %p261, %s260, 3
      %p263 = scmp.lt.s32.totalorder %s21, 0
      %s264 = scalar_select %p263, %s21, 0
      %s265 = sadd.s32 %s264, %s262
      %s266 = smul.addr %s265, 4
      %s267 = scalar_lea.vmem %s3, %s266
      %p268 = pneg %p139
      %p269 = pneg %p136
      %p270 = pneg %p167
      %p271 = pneg %p164
      %s272 = smul.u32 2, %s20
      %p273 = scmp.lt.s32.totalorder %s272, 3
      %s274 = scalar_select %p273, %s272, 3
      %p275 = scmp.lt.s32.totalorder %s21, 0
      %s276 = scalar_select %p275, %s21, 0
      %s277 = sadd.s32 %s276, %s274
      %s278 = smul.addr %s277, 4
      %s279 = scalar_lea.vmem %s4, %s278
      %s280 = smul.u32 2, %s20
      %p281 = scmp.lt.s32.totalorder %s280, 3
      %s282 = scalar_select %p281, %s280, 3
      %p283 = scmp.lt.s32.totalorder %s22, 0
      %s284 = scalar_select %p283, %s22, 0
      %s285 = sadd.s32 %s284, %s282
      %s286 = smul.addr %s285, 4
      %s287 = scalar_lea.vmem %s0, %s286
      %s288 = smul.u32 2, %s20
      %s289 = smul.u32 16, %s22
      %p290 = scmp.lt.s32.totalorder %s289, 15
      %s291 = scalar_select %p290, %s289, 15
      %p292 = scmp.lt.s32.totalorder %s21, 0
      %s293 = scalar_select %p292, %s21, 0
      %s294 = sadd.s32 %s293, %s291
      %s295 = smul.addr %s294, 4
      %s296 = scalar_lea.vmem %s1, %s295
      %s297 = smul.u32 16, %s22
      %p298 = scmp.lt.s32.totalorder %s21, 0
      %s299 = scalar_select %p298, %s21, 0
      %s300 = scalar_lea.vmem %s2, %s299
      %s301 = smul.u32 2, %s20
      %p302 = scmp.lt.s32.totalorder %s301, 3
      %s303 = scalar_select %p302, %s301, 3
      %p304 = scmp.lt.s32.totalorder %s21, 0
      %s305 = scalar_select %p304, %s21, 0
      %s306 = sadd.s32 %s305, %s303
      %s307 = smul.addr %s306, 4
      %s308 = scalar_lea.vmem %s3, %s307
      %s309 = smul.u32 2, %s20
      %s310 = smul.u32 2, %s20
      %p311 = scmp.lt.s32.totalorder %s310, 3
      %s312 = scalar_select %p311, %s310, 3
      %p313 = scmp.lt.s32.totalorder %s21, 0
      %s314 = scalar_select %p313, %s21, 0
      %s315 = sadd.s32 %s314, %s312
      %s316 = smul.addr %s315, 4
      %s317 = scalar_lea.vmem %s4, %s316
      %s318 = smul.u32 2, %s20
      %p320 = scmp.eq.s32.totalorder %s22, 0
      // Predicated region
      $region37: #{run.21} parent=35 // pred_check
        %p321 = pneg %p320
      $region38: #{run.21} parent=35 // pred_check_branch
        %323 = sbr.rel (%p321) target = $region40
      $region39: #{run.21} parent=35 // pred_region
        %324 = vst [vmem:[#allocation2] sm:$0xff] 0.0
        %325 = vst [vmem:[#allocation2 + $0x8] sm:$0xff] 0.0
      $region40: #{run.21} parent=35 // pred_fallthru
        _
      %v326 = vld [vmem:[#allocation2] sm:$0xff]
      %v327 = vld [vmem:[#allocation2 + $0x8] sm:$0xff]
      %v328 = vld [vmem:[%s287] sm:$0xf]
      %v329 = vld [vmem:[%s287 + $0x4] sm:$0xf]
      %v330 = vld [vmem:[%s296] sm:$0xf]
      %v331 = vld [vmem:[%s296 + $0x4] sm:$0xf]
      %v332 = vld [vmem:[%s296 + $0x8] sm:$0xf]
      %v333 = vld [vmem:[%s296 + $0xc] sm:$0xf]
      %v334 = vld [vmem:[%s296 + $0x10] sm:$0xf]
      %v335 = vld [vmem:[%s296 + $0x14] sm:$0xf]
      %v336 = vld [vmem:[%s296 + $0x18] sm:$0xf]
      %v337 = vld [vmem:[%s296 + $0x1c] sm:$0xf]
      %v338 = vld [vmem:[%s296 + $0x20] sm:$0xf]
      %v339 = vld [vmem:[%s296 + $0x24] sm:$0xf]
      %v340 = vld [vmem:[%s296 + $0x28] sm:$0xf]
      %v341 = vld [vmem:[%s296 + $0x2c] sm:$0xf]
      %v342 = vld [vmem:[%s296 + $0x30] sm:$0xf]
      %v343 = vld [vmem:[%s296 + $0x34] sm:$0xf]
      %v344 = vld [vmem:[%s296 + $0x38] sm:$0xf]
      %v345 = vld [vmem:[%s296 + $0x3c] sm:$0xf]
      %v348 = vunpack.c.l.b16 %v328
      %v349 = vunpack.c.l.b16 %v329
      %v350 = vpack.c.b16 %v349, %v348
      %v368 = vunpack.c.l.b16 %v330
      %v369 = vunpack.c.l.b16 %v331
      %v370 = vunpack.c.l.b16 %v332
      %v371 = vunpack.c.l.b16 %v333
      %v372 = vunpack.c.l.b16 %v334
      %v373 = vunpack.c.l.b16 %v335
      %v374 = vunpack.c.l.b16 %v336
      %v375 = vunpack.c.l.b16 %v337
      %v376 = vunpack.c.l.b16 %v338
      %v377 = vunpack.c.l.b16 %v339
      %v378 = vunpack.c.l.b16 %v340
      %v379 = vunpack.c.l.b16 %v341
      %v380 = vunpack.c.l.b16 %v342
      %v381 = vunpack.c.l.b16 %v343
      %v382 = vunpack.c.l.b16 %v344
      %v383 = vunpack.c.l.b16 %v345
      %v384 = vpack.c.b16 %v369, %v368
      %v385 = vpack.c.b16 %v371, %v370
      %v386 = vpack.c.b16 %v373, %v372
      %v387 = vpack.c.b16 %v375, %v374
      %v388 = vpack.c.b16 %v377, %v376
      %v389 = vpack.c.b16 %v379, %v378
      %v390 = vpack.c.b16 %v381, %v380
      %v391 = vpack.c.b16 %v383, %v382
      %400 = vmatprep.subr.bf16.mxu0 0
      %401 = vmatpush1.bf16.msra.mxu0 %v384
      %402 = vmatprep.subr.bf16.mxu0 0
      %403 = vmatpush1.bf16.msra.mxu0 %v385
      %404 = vmatprep.subr.bf16.mxu0 0
      %405 = vmatpush1.bf16.msra.mxu0 %v386
      %406 = vmatprep.subr.bf16.mxu0 0
      %407 = vmatpush1.bf16.msra.mxu0 %v387
      %408 = vmatprep.subr.bf16.mxu0 0
      %409 = vmatpush1.bf16.msra.mxu0 %v388
      %410 = vmatprep.subr.bf16.mxu0 0
      %411 = vmatpush1.bf16.msra.mxu0 %v389
      %412 = vmatprep.subr.bf16.mxu0 0
      %413 = vmatpush1.bf16.msra.mxu0 %v390
      %414 = vmatprep.subr.bf16.mxu0 0
      %415 = vmatpush1.bf16.msra.mxu0 %v391
      %416 = vmatprep.subr.bf16.mxu0 0
      %417 = vmatpush1.bf16.msra.mxu0 0
      %418 = vmatprep.subr.bf16.mxu0 0
      %419 = vmatpush1.bf16.msra.mxu0 0
      %420 = vmatprep.subr.bf16.mxu0 0
      %421 = vmatpush1.bf16.msra.mxu0 0
      %422 = vmatprep.subr.bf16.mxu0 0
      %423 = vmatpush1.bf16.msra.mxu0 0
      %424 = vmatprep.subr.bf16.mxu0 0
      %425 = vmatpush1.bf16.msra.mxu0 0
      %426 = vmatprep.subr.bf16.mxu0 0
      %427 = vmatpush1.bf16.msra.mxu0 0
      %428 = vmatprep.subr.bf16.mxu0 0
      %429 = vmatpush1.bf16.msra.mxu0 0
      %430 = vmatprep.subr.bf16.mxu0 0
      %431 = vmatpush1.bf16.msra.mxu0 0
      %432 = vmatprep.mubr.bf16.mxu0 0
      %433 = vmatmul.mubr.bf16.gmra.mrb[0].mxu0 %v350
      %v434 = vpop.f32.mrb[0].mxu0
      %v435 = vadd.f32 0.0, %v434
      %v436 = vpop.f32.mrb[0].mxu0
      %v437 = vpop.f32.mrb[0].mxu0
      %v438 = vadd.f32 0.0, %v437
      %v439 = vpop.f32.mrb[0].mxu0
      %440 = vdwg.mxu0
      %v441 = vadd.f32 %v326, %v435
      %v442 = vadd.f32 %v327, %v438
      %443 = vst [vmem:[#allocation2] sm:$0xff] %v441
      %444 = vst [vmem:[#allocation2 + $0x8] sm:$0xff] %v442
      // Predicated region
      $region41: #{run.21} parent=35 // pred_check
        %p445 = pneg %p320
      $region42: #{run.21} parent=35 // pred_check_branch
        %447 = sbr.rel (%p445) target = $region44
      $region43: #{run.21} parent=35 // pred_region
        %v448 = vld [vmem:[#allocation2] sm:$0xff]
        %v449 = vld [vmem:[#allocation2 + $0x8] sm:$0xff]
        %v450 = vld [vmem:[%s300] sm:$0x1]
        %v452 = vlaneseq
        %v453 = vshrl.u32 %v452, 7
        %v454 = vsub.s32 0, %v453
        %v455 = vrot.slane %v450, %v454
        %v457 = vadd.f32 %v448, %v455
        %v458 = vadd.f32 %v449, %v455
        %v459 = vld [vmem:[%s308] sm:$0xf]
        %v460 = vld [vmem:[%s308 + $0x4] sm:$0xf]
        %v461 = vunpack.c.l.bf16 %v459
        %v462 = vunpack.c.l.bf16 %v460
        %v463 = vadd.f32 %v457, %v461
        %v464 = vadd.f32 %v458, %v462
        %v465 = vpack.c.bf16 %v464, %v463
        %v467 = vunpack.c.l.b16 %v465
        %v468 = vunpack.c.h.b16 %v465
        %v469 = vpack.c.b16 %v467, %v467
        %v470 = vpack.c.b16 %v468, %v468
        %473 = vst [vmem:[%s317] sm:$0xf] %v469
        %474 = vst [vmem:[%s317 + $0x4] sm:$0xf] %v470
      $region44: #{run.21} parent=35 // pred_fallthru
        _
      %s475 = smul.u32 2, %s20
      %p476 = scmp.lt.s32.totalorder %s475, 3
      %s477 = scalar_select %p476, %s475, 3
      %p478 = scmp.lt.s32.totalorder %s21, 0
      %s479 = scalar_select %p478, %s21, 0
      %s480 = sadd.s32 %s479, %s477
      %s481 = smul.addr %s480, 4
      %s482 = scalar_lea.vmem %s4, %s481
      // Predicated region
      $region45: #{run.21} parent=35 // pred_check
        %p483 = pneg %p164
      $region46: #{run.21} parent=35 // pred_check_branch
        %485 = sbr.rel (%p483) target = $region48
      $region47: #{run.21} parent=35 // pred_region
        %s486 = smul.u32 2, %s20
      $region48: #{run.21} parent=35 // pred_fallthru
        _
    $region36: #{run.21} parent=5 // pred_fallthru
      _
    %p487 = scmp.le.s32.totalorder 2, %s10
    // Predicated region
    $region49: #{run.21} parent=5 // pred_check
      %p488 = pneg %p487
    $region50: #{run.21} parent=5 // pred_check_branch
      %490 = sbr.rel (%p488) target = $region52
    $region51: #{run.21} parent=5 // pred_region
      %s491 = ssub.s32 %s10, 2
      // Predicated region
      $region53: #{run.21} parent=51 // pred_check
        %p492 = pneg %p170
      $region54: #{run.21} parent=51 // pred_check_branch
        %494 = sbr.rel (%p492) target = $region56
      $region55: #{run.21} parent=51 // pred_region
        %s495 = smul.u32 2, %s23
        %p496 = scmp.lt.s32.totalorder %s495, 3
        %s497 = scalar_select %p496, %s495, 3
        %p498 = scmp.lt.s32.totalorder %s24, 0
        %s499 = scalar_select %p498, %s24, 0
        %s500 = sadd.s32 %s499, %s497
        %s501 = smul.addr %s500, 4
        %s502 = scalar_lea.vmem %s4, %s501
      $region56: #{run.21} parent=51 // pred_fallthru
        _
    $region52: #{run.21} parent=5 // pred_fallthru
      _
  $region6: #{run.21} parent=0 // loop_footer
    %s14 = sadd.s32 1, %s10
  $region7: #{run.21} parent=0 // loop_footer_branch
    %9 = sbr.rel target = $region3
  $region8: #{run.21} parent=0 // loop_exit
    _

// kernel: run.31
$region0: #{run.31}
  #allocation0 [shape = 'u32[]', space=smem, size = 0x4, offset = 0x4, fixed_abs, tag = 'smem constant byte address 0x4 - core index']
  #allocation1 [shape = 'u32[144,128]{1,0:T(1,128)}', space=vmem, size = 0x12000, scoped, tag = 'internal scratch']
  #allocation2 [shape = 'f32[16,128]{1,0:T(8,128)}', space=vmem, size = 0x2000, scoped, tag = 'scratch operand']
  %s0 = inlined_call_operand.vmem [shape: bf16[32,128], index: 0, kind: input, shape index: {}]
  %s1 = inlined_call_operand.vmem [shape: bf16[128,128], index: 1, kind: input, shape index: {}]
  %s2 = inlined_call_operand.vmem [shape: f32[1,128], index: 2, kind: input, shape index: {}]
  %s3 = inlined_call_operand.vmem [shape: bf16[32,128], index: 3, kind: input, shape index: {}]
  %s4 = inlined_call_operand.hbm [shape: bf16[32,128], index: 4, kind: output, shape index: {}]
  %s5 = sld [smem:[#allocation0]]
  $region57: #{run.31} parent=0
    _
  %s7 = ssub.s32 1, %s5
  %s8 = scalar_select 0, %s7, %s5
  $region1: #{run.31} parent=0
    #allocation3 [shape = 'u8[8192]{0}', space=vmem, size = 0x2000, scoped, tag = 'output window, operand 0']
    #allocation4 [shape = 's32[2]{0}', space=sflag, size = 0x8, scoped, tag = 'scoped memory for run.31']
    %9 = vsyncpa [#allocation4], 0
    %s10 = scalar_lea.sflag [#allocation4], 1
    %11 = vsyncpa %s10, 0
    loop: start=0, step=1, limit=4
    $region2: #{run.31} parent=1 // loop_pre_header
      _
    $region3: #{run.31} parent=1 // loop_header
      %s13 = sphi 0, %s17
      %p14 = scmp.ge.s32.totalorder %s13, 4
      %s20 = sphi 0, %s39
      %s21 = sphi 0, %s35
      %s22 = sphi 0, %s31
      %s23 = sphi 0, %s20
      %s24 = sphi 0, %s21
      %s25 = sphi 0, %s22
      %s26 = sphi 0, %s23
      %s27 = sphi 0, %s24
      %s28 = sphi 0, %s25
      %s44 = sphi 0, %s46
      %s47 = sphi 0, %s44
      %s48 = sphi 0, %s47
      %s64 = sphi 0, %s48
      %s72 = sphi 0, %s74
      %s75 = sphi 0, %s72
      %s76 = sphi 0, %s75
      %s92 = sphi 0, %s76
      %s98 = sphi 0, %s100
      %s101 = sphi 0, %s98
      %s102 = sphi 0, %s101
      %s118 = sphi 0, %s102
      %s126 = sphi 0, %s128
      %s129 = sphi 0, %s126
      %s130 = sphi 0, %s129
      %s146 = sphi 0, %s130
      %s154 = sphi 0, %s156
      %s157 = sphi 0, %s154
      %s158 = sphi 0, %s157
      %s174 = sphi 0, %s158
    $region4: #{run.31} parent=1 // loop_header_branch
      %16 = sbr.rel (%p14) target = $region8
    $region5: #{run.31} parent=1 // loop_body
      %s18 = ssub.s32 %s13, 1
      %s19 = ssub.s32 %s13, 2
      %s29 = sadd.s32 1, %s22
      %p30 = scmp.ge.s32.totalorder %s29, 1
      %s31 = scalar_select %p30, 0, %s29
      %s32 = sadd.s32 1, %s21
      %s33 = scalar_select %p30, %s32, %s21
      %p34 = scmp.ge.s32.totalorder %s33, 1
      %s35 = scalar_select %p34, 0, %s33
      %s36 = sadd.s32 1, %s20
      %s37 = scalar_select %p34, %s36, %s20
      %p38 = scmp.ge.s32.totalorder %s37, 2
      %s39 = scalar_select %p38, 0, %s37
      %s40 = ssub.s32 %s20, %s39
      %s41 = ssub.s32 %s22, %s31
      %s42 = sor.u32 %s40, %s41
      %p43 = scmp.eq.s32.totalorder %s42, 0
      %s45 = sadd.s32 %s44, 1
      %s46 = scalar_select %p43, %s44, %s45
      %p49 = pneg %p43
      %p50 = scmp.eq.s32.totalorder %s13, 1
      %p51 = por %p49, %p50
      %p52 = scmp.ne.s32.totalorder %s44, %s47
      %p53 = scmp.eq.s32.totalorder %s13, 0
      %p54 = por %p52, %p53
      %p55 = scmp.ne.s32.totalorder %s44, %s47
      %p56 = scmp.eq.s32.totalorder %s18, 1
      %p57 = por %p55, %p56
      %p58 = scmp.ne.s32.totalorder %s47, %s48
      %p59 = scmp.eq.s32.totalorder %s18, 0
      %p60 = por %p58, %p59
      %p61 = scmp.ne.s32.totalorder %s47, %s48
      %p62 = scmp.eq.s32.totalorder %s19, 1
      %p63 = por %p61, %p62
      %p65 = scmp.ne.s32.totalorder %s48, %s64
      %p66 = scmp.eq.s32.totalorder %s19, 0
      %p67 = por %p65, %p66
      %s68 = ssub.s32 %s22, %s31
      %s69 = ssub.s32 %s21, %s35
      %s70 = sor.u32 %s68, %s69
      %p71 = scmp.eq.s32.totalorder %s70, 0
      %s73 = sadd.s32 %s72, 1
      %s74 = scalar_select %p71, %s72, %s73
      %p77 = pneg %p71
      %p78 = scmp.eq.s32.totalorder %s13, 1
      %p79 = por %p77, %p78
      %p80 = scmp.ne.s32.totalorder %s72, %s75
      %p81 = scmp.eq.s32.totalorder %s13, 0
      %p82 = por %p80, %p81
      %p83 = scmp.ne.s32.totalorder %s72, %s75
      %p84 = scmp.eq.s32.totalorder %s18, 1
      %p85 = por %p83, %p84
      %p86 = scmp.ne.s32.totalorder %s75, %s76
      %p87 = scmp.eq.s32.totalorder %s18, 0
      %p88 = por %p86, %p87
      %p89 = scmp.ne.s32.totalorder %s75, %s76
      %p90 = scmp.eq.s32.totalorder %s19, 1
      %p91 = por %p89, %p90
      %p93 = scmp.ne.s32.totalorder %s76, %s92
      %p94 = scmp.eq.s32.totalorder %s19, 0
      %p95 = por %p93, %p94
      %s96 = ssub.s32 %s21, %s35
      %p97 = scmp.eq.s32.totalorder %s96, 0
      %s99 = sadd.s32 %s98, 1
      %s100 = scalar_select %p97, %s98, %s99
      %p103 = pneg %p97
      %p104 = scmp.eq.s32.totalorder %s13, 1
      %p105 = por %p103, %p104
      %p106 = scmp.ne.s32.totalorder %s98, %s101
      %p107 = scmp.eq.s32.totalorder %s13, 0
      %p108 = por %p106, %p107
      %p109 = scmp.ne.s32.totalorder %s98, %s101
      %p110 = scmp.eq.s32.totalorder %s18, 1
      %p111 = por %p109, %p110
      %p112 = scmp.ne.s32.totalorder %s101, %s102
      %p113 = scmp.eq.s32.totalorder %s18, 0
      %p114 = por %p112, %p113
      %p115 = scmp.ne.s32.totalorder %s101, %s102
      %p116 = scmp.eq.s32.totalorder %s19, 1
      %p117 = por %p115, %p116
      %p119 = scmp.ne.s32.totalorder %s102, %s118
      %p120 = scmp.eq.s32.totalorder %s19, 0
      %p121 = por %p119, %p120
      %s122 = ssub.s32 %s20, %s39
      %s123 = ssub.s32 %s21, %s35
      %s124 = sor.u32 %s122, %s123
      %p125 = scmp.eq.s32.totalorder %s124, 0
      %s127 = sadd.s32 %s126, 1
      %s128 = scalar_select %p125, %s126, %s127
      %p131 = pneg %p125
      %p132 = scmp.eq.s32.totalorder %s13, 1
      %p133 = por %p131, %p132
      %p134 = scmp.ne.s32.totalorder %s126, %s129
      %p135 = scmp.eq.s32.totalorder %s13, 0
      %p136 = por %p134, %p135
      %p137 = scmp.ne.s32.totalorder %s126, %s129
      %p138 = scmp.eq.s32.totalorder %s18, 1
      %p139 = por %p137, %p138
      %p140 = scmp.ne.s32.totalorder %s129, %s130
      %p141 = scmp.eq.s32.totalorder %s18, 0
      %p142 = por %p140, %p141
      %p143 = scmp.ne.s32.totalorder %s129, %s130
      %p144 = scmp.eq.s32.totalorder %s19, 1
      %p145 = por %p143, %p144
      %p147 = scmp.ne.s32.totalorder %s130, %s146
      %p148 = scmp.eq.s32.totalorder %s19, 0
      %p149 = por %p147, %p148
      %s150 = ssub.s32 %s20, %s39
      %s151 = ssub.s32 %s21, %s35
      %s152 = sor.u32 %s150, %s151
      %p153 = scmp.eq.s32.totalorder %s152, 0
      %s155 = sadd.s32 %s154, 1
      %s156 = scalar_select %p153, %s154, %s155
      %p159 = pneg %p153
      %p160 = scmp.eq.s32.totalorder %s13, 1
      %p161 = por %p159, %p160
      %p162 = scmp.ne.s32.totalorder %s154, %s157
      %p163 = scmp.eq.s32.totalorder %s13, 0
      %p164 = por %p162, %p163
      %p165 = scmp.ne.s32.totalorder %s154, %s157
      %p166 = scmp.eq.s32.totalorder %s18, 1
      %p167 = por %p165, %p166
      %p168 = scmp.ne.s32.totalorder %s157, %s158
      %p169 = scmp.eq.s32.totalorder %s18, 0
      %p170 = por %p168, %p169
      %p171 = scmp.ne.s32.totalorder %s157, %s158
      %p172 = scmp.eq.s32.totalorder %s19, 1
      %p173 = por %p171, %p172
      %p175 = scmp.ne.s32.totalorder %s158, %s174
      %p176 = scmp.eq.s32.totalorder %s19, 0
      %p177 = por %p175, %p176
      %p178 = scmp.le.s32.totalorder 1, %s13
      %p179 = scmp.lt.s32.totalorder %s13, 3
      %p180 = pnand %p178, %p179
      %p181 = pneg %p180
      // Predicated region
      $region9: #{run.31} parent=5 // pred_check
        _
      $region10: #{run.31} parent=5 // pred_check_branch
        %183 = sbr.rel (%p180) target = $region12
      $region11: #{run.31} parent=5 // pred_region
        %s184 = ssub.s32 %s13, 1
        // Predicated region
        $region13: #{run.31} parent=11 // pred_check
          %p185 = pneg %p88
        $region14: #{run.31} parent=11 // pred_check_branch
          %187 = sbr.rel (%p185) target = $region16
        $region15: #{run.31} parent=11 // pred_region
          %s188 = smul.u32 16, %s25
          %p189 = scmp.lt.s32.totalorder %s188, 15
          %s190 = scalar_select %p189, %s188, 15
          %p191 = scmp.lt.s32.totalorder %s24, 0
          %s192 = scalar_select %p191, %s24, 0
          %s193 = sadd.s32 %s192, %s190
          %s194 = smul.addr %s193, 4
          %s195 = scalar_lea.vmem %s1, %s194
          %s196 = smul.u32 16, %s25
        $region16: #{run.31} parent=11 // pred_fallthru
          _
        // Predicated region
        $region17: #{run.31} parent=11 // pred_check
          %p197 = pneg %p114
        $region18: #{run.31} parent=11 // pred_check_branch
          %199 = sbr.rel (%p197) target = $region20
        $region19: #{run.31} parent=11 // pred_region
          %p200 = scmp.lt.s32.totalorder %s24, 0
          %s201 = scalar_select %p200, %s24, 0
          %s202 = scalar_lea.vmem %s2, %s201
        $region20: #{run.31} parent=11 // pred_fallthru
          _
      $region12: #{run.31} parent=5 // pred_fallthru
        _
      %p203 = scmp.lt.s32.totalorder %s13, 2
      // Predicated region
      $region21: #{run.31} parent=5 // pred_check
        %p204 = pneg %p203
      $region22: #{run.31} parent=5 // pred_check_branch
        %206 = sbr.rel (%p204) target = $region24
      $region23: #{run.31} parent=5 // pred_region
        // Predicated region
        $region25: #{run.31} parent=23 // pred_check
          %p207 = pneg %p54
        $region26: #{run.31} parent=23 // pred_check_branch
          %209 = sbr.rel (%p207) target = $region28
        $region27: #{run.31} parent=23 // pred_region
          %s210 = smul.u32 2, %s20
          %p211 = scmp.lt.s32.totalorder %s210, 3
          %s212 = scalar_select %p211, %s210, 3
          %p213 = scmp.lt.s32.totalorder %s22, 0
          %s214 = scalar_select %p213, %s22, 0
          %s215 = sadd.s32 %s214, %s212
          %s216 = smul.addr %s215, 4
          %s217 = scalar_lea.vmem %s0, %s216
          %s218 = smul.u32 2, %s20
        $region28: #{run.31} parent=23 // pred_fallthru
          _
        // Predicated region
        $region29: #{run.31} parent=23 // pred_check
          %p219 = pneg %p136
        $region30: #{run.31} parent=23 // pred_check_branch
          %221 = sbr.rel (%p219) target = $region32
        $region31: #{run.31} parent=23 // pred_region
          %s222 = smul.u32 2, %s20
          %p223 = scmp.lt.s32.totalorder %s222, 3
          %s224 = scalar_select %p223, %s222, 3
          %p225 = scmp.lt.s32.totalorder %s21, 0
          %s226 = scalar_select %p225, %s21, 0
          %s227 = sadd.s32 %s226, %s224
          %s228 = smul.addr %s227, 4
          %s229 = scalar_lea.vmem %s3, %s228
          %s230 = smul.u32 2, %s20
        $region32: #{run.31} parent=23 // pred_fallthru
          _
      $region24: #{run.31} parent=5 // pred_fallthru
        _
      %p231 = scmp.le.s32.totalorder 1, %s13
      %p232 = scmp.lt.s32.totalorder %s13, 3
      %p233 = pnand %p231, %p232
      %p234 = pneg %p233
      // Predicated region
      $region33: #{run.31} parent=5 // pred_check
        _
      $region34: #{run.31} parent=5 // pred_check_branch
        %236 = sbr.rel (%p233) target = $region36
      $region35: #{run.31} parent=5 // pred_region
        %s237 = ssub.s32 %s13, 1
        %s238 = smul.u32 2, %s23
        %p239 = scmp.lt.s32.totalorder %s238, 3
        %s240 = scalar_select %p239, %s238, 3
        %p241 = scmp.lt.s32.totalorder %s25, 0
        %s242 = scalar_select %p241, %s25, 0
        %s243 = sadd.s32 %s242, %s240
        %s244 = smul.addr %s243, 4
        %s245 = scalar_lea.vmem %s0, %s244
        %p246 = pneg %p60
        %p247 = pneg %p57
        %s248 = smul.u32 16, %s25
        %p249 = scmp.lt.s32.totalorder %s248, 15
        %s250 = scalar_select %p249, %s248, 15
        %p251 = scmp.lt.s32.totalorder %s24, 0
        %s252 = scalar_select %p251, %s24, 0
        %s253 = sadd.s32 %s252, %s250
        %s254 = smul.addr %s253, 4
        %s255 = scalar_lea.vmem %s1, %s254
        %p256 = pneg %p88
        %p257 = pneg %p85
        %p258 = scmp.lt.s32.totalorder %s24, 0
        %s259 = scalar_select %p258, %s24, 0
        %s260 = scalar_lea.vmem %s2, %s259
        %p261 = pneg %p114
        %p262 = pneg %p111
        %s263 = smul.u32 2, %s23
        %p264 = scmp.lt.s32.totalorder %s263, 3
        %s265 = scalar_select %p264, %s263, 3
        %p266 = scmp.lt.s32.totalorder %s24, 0
        %s267 = scalar_select %p266, %s24, 0
        %s268 = sadd.s32 %s267, %s265
        %s269 = smul.addr %s268, 4
        %s270 = scalar_lea.vmem %s3, %s269
        %p271 = pneg %p142
        %p272 = pneg %p139
        %p273 = pneg %p170
        %p274 = pneg %p167
        %s275 = sand.u32 %s157, 1
        %s276 = scalar_lea.sflag [#allocation4], %s275
        %s277 = sand.u32 %s157, 1
        %s278 = smul.addr %s277, 8
        %s279 = scalar_lea.vmem [#allocation3], %s278
        %s280 = smul.u32 2, %s23
        %p281 = scmp.lt.s32.totalorder %s280, 3
        %s282 = scalar_select %p281, %s280, 3
        %p283 = scmp.lt.s32.totalorder %s25, 0
        %s284 = scalar_select %p283, %s25, 0
        %s285 = sadd.s32 %s284, %s282
        %s286 = smul.addr %s285, 4
        %s287 = scalar_lea.vmem %s0, %s286
        %s288 = smul.u32 2, %s23
        %s289 = smul.u32 16, %s25
        %p290 = scmp.lt.s32.totalorder %s289, 15
        %s291 = scalar_select %p290, %s289, 15
        %p292 = scmp.lt.s32.totalorder %s24, 0
        %s293 = scalar_select %p292, %s24, 0
        %s294 = sadd.s32 %s293, %s291
        %s295 = smul.addr %s294, 4
        %s296 = scalar_lea.vmem %s1, %s295
        %s297 = smul.u32 16, %s25
        %p298 = scmp.lt.s32.totalorder %s24, 0
        %s299 = scalar_select %p298, %s24, 0
        %s300 = scalar_lea.vmem %s2, %s299
        %s301 = smul.u32 2, %s23
        %p302 = scmp.lt.s32.totalorder %s301, 3
        %s303 = scalar_select %p302, %s301, 3
        %p304 = scmp.lt.s32.totalorder %s24, 0
        %s305 = scalar_select %p304, %s24, 0
        %s306 = sadd.s32 %s305, %s303
        %s307 = smul.addr %s306, 4
        %s308 = scalar_lea.vmem %s3, %s307
        %s309 = smul.u32 2, %s23
        %s310 = smul.u32 2, %s23
        %p312 = scmp.eq.s32.totalorder %s25, 0
        // Predicated region
        $region37: #{run.31} parent=35 // pred_check
          %p313 = pneg %p312
        $region38: #{run.31} parent=35 // pred_check_branch
          %315 = sbr.rel (%p313) target = $region40
        $region39: #{run.31} parent=35 // pred_region
          %316 = vst [vmem:[#allocation2] sm:$0xff] 0.0
          %317 = vst [vmem:[#allocation2 + $0x8] sm:$0xff] 0.0
        $region40: #{run.31} parent=35 // pred_fallthru
          _
        %v318 = vld [vmem:[#allocation2] sm:$0xff]
        %v319 = vld [vmem:[#allocation2 + $0x8] sm:$0xff]
        %v320 = vld [vmem:[%s287] sm:$0xf]
        %v321 = vld [vmem:[%s287 + $0x4] sm:$0xf]
        %v322 = vld [vmem:[%s296] sm:$0xf]
        %v323 = vld [vmem:[%s296 + $0x4] sm:$0xf]
        %v324 = vld [vmem:[%s296 + $0x8] sm:$0xf]
        %v325 = vld [vmem:[%s296 + $0xc] sm:$0xf]
        %v326 = vld [vmem:[%s296 + $0x10] sm:$0xf]
        %v327 = vld [vmem:[%s296 + $0x14] sm:$0xf]
        %v328 = vld [vmem:[%s296 + $0x18] sm:$0xf]
        %v329 = vld [vmem:[%s296 + $0x1c] sm:$0xf]
        %v330 = vld [vmem:[%s296 + $0x20] sm:$0xf]
        %v331 = vld [vmem:[%s296 + $0x24] sm:$0xf]
        %v332 = vld [vmem:[%s296 + $0x28] sm:$0xf]
        %v333 = vld [vmem:[%s296 + $0x2c] sm:$0xf]
        %v334 = vld [vmem:[%s296 + $0x30] sm:$0xf]
        %v335 = vld [vmem:[%s296 + $0x34] sm:$0xf]
        %v336 = vld [vmem:[%s296 + $0x38] sm:$0xf]
        %v337 = vld [vmem:[%s296 + $0x3c] sm:$0xf]
        %v340 = vunpack.c.l.b16 %v320
        %v341 = vunpack.c.l.b16 %v321
        %v342 = vpack.c.b16 %v341, %v340
        %v360 = vunpack.c.l.b16 %v322
        %v361 = vunpack.c.l.b16 %v323
        %v362 = vunpack.c.l.b16 %v324
        %v363 = vunpack.c.l.b16 %v325
        %v364 = vunpack.c.l.b16 %v326
        %v365 = vunpack.c.l.b16 %v327
        %v366 = vunpack.c.l.b16 %v328
        %v367 = vunpack.c.l.b16 %v329
        %v368 = vunpack.c.l.b16 %v330
        %v369 = vunpack.c.l.b16 %v331
        %v370 = vunpack.c.l.b16 %v332
        %v371 = vunpack.c.l.b16 %v333
        %v372 = vunpack.c.l.b16 %v334
        %v373 = vunpack.c.l.b16 %v335
        %v374 = vunpack.c.l.b16 %v336
        %v375 = vunpack.c.l.b16 %v337
        %v376 = vpack.c.b16 %v361, %v360
        %v377 = vpack.c.b16 %v363, %v362
        %v378 = vpack.c.b16 %v365, %v364
        %v379 = vpack.c.b16 %v367, %v366
        %v380 = vpack.c.b16 %v369, %v368
        %v381 = vpack.c.b16 %v371, %v370
        %v382 = vpack.c.b16 %v373, %v372
        %v383 = vpack.c.b16 %v375, %v374
        %392 = vmatprep.subr.bf16.mxu0 0
        %393 = vmatpush1.bf16.msra.mxu0 %v376
        %394 = vmatprep.subr.bf16.mxu0 0
        %395 = vmatpush1.bf16.msra.mxu0 %v377
        %396 = vmatprep.subr.bf16.mxu0 0
        %397 = vmatpush1.bf16.msra.mxu0 %v378
        %398 = vmatprep.subr.bf16.mxu0 0
        %399 = vmatpush1.bf16.msra.mxu0 %v379
        %400 = vmatprep.subr.bf16.mxu0 0
        %401 = vmatpush1.bf16.msra.mxu0 %v380
        %402 = vmatprep.subr.bf16.mxu0 0
        %403 = vmatpush1.bf16.msra.mxu0 %v381
        %404 = vmatprep.subr.bf16.mxu0 0
        %405 = vmatpush1.bf16.msra.mxu0 %v382
        %406 = vmatprep.subr.bf16.mxu0 0
        %407 = vmatpush1.bf16.msra.mxu0 %v383
        %408 = vmatprep.subr.bf16.mxu0 0
        %409 = vmatpush1.bf16.msra.mxu0 0
        %410 = vmatprep.subr.bf16.mxu0 0
        %411 = vmatpush1.bf16.msra.mxu0 0
        %412 = vmatprep.subr.bf16.mxu0 0
        %413 = vmatpush1.bf16.msra.mxu0 0
        %414 = vmatprep.subr.bf16.mxu0 0
        %415 = vmatpush1.bf16.msra.mxu0 0
        %416 = vmatprep.subr.bf16.mxu0 0
        %417 = vmatpush1.bf16.msra.mxu0 0
        %418 = vmatprep.subr.bf16.mxu0 0
        %419 = vmatpush1.bf16.msra.mxu0 0
        %420 = vmatprep.subr.bf16.mxu0 0
        %421 = vmatpush1.bf16.msra.mxu0 0
        %422 = vmatprep.subr.bf16.mxu0 0
        %423 = vmatpush1.bf16.msra.mxu0 0
        %424 = vmatprep.mubr.bf16.mxu0 0
        %425 = vmatmul.mubr.bf16.gmra.mrb[0].mxu0 %v342
        %v426 = vpop.f32.mrb[0].mxu0
        %v427 = vadd.f32 0.0, %v426
        %v428 = vpop.f32.mrb[0].mxu0
        %v429 = vpop.f32.mrb[0].mxu0
        %v430 = vadd.f32 0.0, %v429
        %v431 = vpop.f32.mrb[0].mxu0
        %432 = vdwg.mxu0
        %v433 = vadd.f32 %v318, %v427
        %v434 = vadd.f32 %v319, %v430
        %435 = vst [vmem:[#allocation2] sm:$0xff] %v433
        %436 = vst [vmem:[#allocation2 + $0x8] sm:$0xff] %v434
        // Predicated region
        $region41: #{run.31} parent=35 // pred_check
          %p437 = pneg %p312
        $region42: #{run.31} parent=35 // pred_check_branch
          %439 = sbr.rel (%p437) target = $region44
        $region43: #{run.31} parent=35 // pred_region
          %v440 = vld [vmem:[#allocation2] sm:$0xff]
          %v441 = vld [vmem:[#allocation2 + $0x8] sm:$0xff]
          %v442 = vld [vmem:[%s300] sm:$0x1]
          %v444 = vlaneseq
          %v445 = vshrl.u32 %v444, 7
          %v446 = vsub.s32 0, %v445
          %v447 = vrot.slane %v442, %v446
          %v449 = vadd.f32 %v440, %v447
          %v450 = vadd.f32 %v441, %v447
          %v451 = vld [vmem:[%s308] sm:$0xf]
          %v452 = vld [vmem:[%s308 + $0x4] sm:$0xf]
          %v453 = vunpack.c.l.bf16 %v451
          %v454 = vunpack.c.l.bf16 %v452
          %v455 = vadd.f32 %v449, %v453
          %v456 = vadd.f32 %v450, %v454
          %v457 = vpack.c.bf16 %v456, %v455
          %v459 = vunpack.c.l.b16 %v457
          %v460 = vunpack.c.h.b16 %v457
          %v461 = vpack.c.b16 %v459, %v459
          %v462 = vpack.c.b16 %v460, %v460
          %465 = vst [vmem:[%s279] sm:$0xf] %v461
          %466 = vst [vmem:[%s279 + $0x4] sm:$0xf] %v462
        $region44: #{run.31} parent=35 // pred_fallthru
          _
        %s467 = sand.u32 %s157, 1
        %s468 = scalar_lea.sflag [#allocation4], %s467
        %s469 = sand.u32 %s157, 1
        %s470 = smul.addr %s469, 8
        %s471 = scalar_lea.vmem [#allocation3], %s470
        // Predicated region
        $region45: #{run.31} parent=35 // pred_check
          %p472 = pneg %p167
        $region46: #{run.31} parent=35 // pred_check_branch
          %474 = sbr.rel (%p472) target = $region48
        $region47: #{run.31} parent=35 // pred_region
          %s475 = smul.u32 2, %s23
          %s477 = ssub.s32 128, 128
          %478 = vsyncadd %s468, %s477
          %s479 = sadd.s32 %s24, %s475
          %s480 = smul.addr %s479, 64
          %s481 = scalar_lea.hbm %s4, %s480
          %s482 = sshll.u32 %s471, 4
          %s483 = int_to_ptr.vmem [resolvable:$true] %s482
          %488 = dma.vmem_to_hbm [thread:$0]  %s483, 128, %s481, %s468, 64, 64, 4
        $region48: #{run.31} parent=35 // pred_fallthru
          _
      $region36: #{run.31} parent=5 // pred_fallthru
        _
      %p489 = scmp.le.s32.totalorder 2, %s13
      // Predicated region
      $region49: #{run.31} parent=5 // pred_check
        %p490 = pneg %p489
      $region50: #{run.31} parent=5 // pred_check_branch
        %492 = sbr.rel (%p490) target = $region52
      $region51: #{run.31} parent=5 // pred_region
        %s493 = ssub.s32 %s13, 2
        // Predicated region
        $region53: #{run.31} parent=51 // pred_check
          %p494 = pneg %p173
        $region54: #{run.31} parent=51 // pred_check_branch
          %496 = sbr.rel (%p494) target = $region56
        $region55: #{run.31} parent=51 // pred_region
          %s497 = sand.u32 %s158, 1
          %s498 = scalar_lea.sflag [#allocation4], %s497
          %s499 = sand.u32 %s158, 1
          %s500 = smul.addr %s499, 8
          %s501 = scalar_lea.vmem [#allocation3], %s500
          %502 = dma.done %s498, 128
        $region56: #{run.31} parent=51 // pred_fallthru
          _
      $region52: #{run.31} parent=5 // pred_fallthru
        _
    $region6: #{run.31} parent=1 // loop_footer
      %s17 = sadd.s32 1, %s13
    $region7: #{run.31} parent=1 // loop_footer_branch
      %12 = sbr.rel target = $region3
    $region8: #{run.31} parent=1 // loop_exit
      _
    %503 = vsyncpa [#allocation4], 1
    %s504 = scalar_lea.sflag [#allocation4], 1
    %505 = vsyncpa %s504, 1

</llo_original>
